<compile_context>
chip_gen: v6e
topology: v6e:2x2x1
jax: 0.10.0
libtpu: 0.0.40
codegen_flags: <defaults>
</compile_context>

<pallas_src>
import functools
import math

import jax
import jax.numpy as jnp
from jax.experimental import pallas as pl
from jax.experimental.pallas import tpu as pltpu


def _vmem_limit_bytes():
    """Generation-aware scoped-VMEM budget (~3/4 of physical, clamped to [32,96] MiB)."""
    try:
        cap = getattr(pltpu.get_tpu_info(), "vmem_capacity_bytes", None)
        if cap:
            return int(max(32 * 1024 * 1024, min(cap * 3 // 4, 96 * 1024 * 1024)))
    except Exception:
        pass
    return 32 * 1024 * 1024


_VMEM_LIMIT = _vmem_limit_bytes()


def _pick_tile(n, prefs):
    for c in prefs:
        if n % c == 0:
            return c
    return n  # fall back to the full dimension (always legal)


# ----------------------------------------------------------------------------
# Kernel A: pos-add + fused QKV proj + flash attention + out-proj + LayerNorm1
# ----------------------------------------------------------------------------

def _flash_attn_ln_kernel(s2_ref, p2q_ref, s1_ref, p2k_ref, mq_ref, mk_ref, kpad_ref,
                          wq_ref, wk_ref, wv_ref, bq_ref, bk_ref, bv_ref,
                          wo_ref, bo_ref, g_ref, be_ref, o_ref,
                          q_sc, m_sc, l_sc, acc_sc,
                          *, nhead, hd, cd, approx, eps):
    f32 = jnp.float32
    ki = pl.program_id(2)
    nk = pl.num_programs(2)

    @pl.when(ki == 0)
    def _init():
        # Q projection once per (batch, q-tile): one full-width (tq,E)x(E,E) matmul.
        # 1/sqrt(hd) is already folded into wq/bq host-side.
        qp = (s2_ref[0].astype(f32) + p2q_ref[0].astype(f32)).astype(cd)
        q = jnp.dot(qp, wq_ref[...].astype(cd),
                    preferred_element_type=f32) + bq_ref[...]          # (tq, E)
        q_sc[...] = jnp.concatenate(
            [q[:, h * hd:(h + 1) * hd][None] for h in range(nhead)],
            axis=0).astype(cd)                                         # (H, tq, hd)
        m_sc[...] = jnp.full_like(m_sc, -1e30)
        l_sc[...] = jnp.zeros_like(l_sc)
        acc_sc[...] = jnp.zeros_like(acc_sc)

    # ---- this kv tile: fused K/V projections (full-width matmuls) ----
    s1 = s1_ref[0].astype(f32)                                         # (tk, E)
    k_in = (s1 + p2k_ref[0].astype(f32)).astype(cd)                    # key input (+pos)
    v_in = s1.astype(cd)                                               # value input (no pos)
    k = jnp.dot(k_in, wk_ref[...].astype(cd),
                preferred_element_type=f32) + bk_ref[...]              # (tk, E)
    v = jnp.dot(v_in, wv_ref[...].astype(cd),
                preferred_element_type=f32) + bv_ref[...]              # (tk, E)
    k_h = jnp.concatenate([k[:, h * hd:(h + 1) * hd][None] for h in range(nhead)],
                          axis=0).astype(cd)                           # (H, tk, hd)
    v_h = jnp.concatenate([v[:, h * hd:(h + 1) * hd][None] for h in range(nhead)],
                          axis=0).astype(cd)                           # (H, tk, hd)

    # additive attention bias for this (q-tile, k-tile), built in-kernel from mask rows:
    #   shared part:  any_b( mask2[b, q] & mask2[b, k] )
    #   key padding:  mask2[b_cur, k]
    mq = mq_ref[...]                                                   # (B, tq) f32
    mk = mk_ref[...]                                                   # (B, tk) f32
    shared = jnp.max(mq[:, :, None] * mk[:, None, :], axis=0)         # (tq, tk)
    masked = (shared > 0.0) | (kpad_ref[0] > 0.5)                     # (tq, tk) | (1, tk)
    bias = jnp.where(masked, jnp.float32(-1e30), jnp.float32(0.0))    # finite: no NaN rows

    # scores: batched (per-head) matmul, online softmax, post-PV normalization later
    s = jnp.einsum('hqd,hkd->hqk', q_sc[...], k_h,
                   preferred_element_type=f32) + bias[None]            # (H, tq, tk)
    m_prev = m_sc[...]
    m_new = jnp.maximum(m_prev, jnp.max(s, axis=-1, keepdims=True))    # (H, tq, 1)
    alpha = jnp.exp(m_prev - m_new)
    p = jnp.exp(s - m_new)
    l_sc[...] = alpha * l_sc[...] + jnp.sum(p, axis=-1, keepdims=True)
    acc_sc[...] = alpha * acc_sc[...] + jnp.einsum(
        'hqk,hkd->hqd', p.astype(cd), v_h, preferred_element_type=f32)  # (H, tq, hd)
    m_sc[...] = m_new

    @pl.when(ki == nk - 1)
    def _finalize():
        if approx:
            o_h = acc_sc[...] * pl.reciprocal(l_sc[...], approx=True)  # normalize after PV
        else:
            o_h = acc_sc[...] / l_sc[...]
        o = jnp.concatenate([o_h[h] for h in range(nhead)], axis=-1)   # (tq, E)
        # single full-width out-projection + residual + LayerNorm1 (f32 statistics)
        y = s2_ref[0].astype(jnp.float32) + bo_ref[...] + jnp.dot(
            o.astype(cd), wo_ref[...].astype(cd), preferred_element_type=jnp.float32)
        mu = jnp.mean(y, axis=-1, keepdims=True)
        yc = y - mu
        var = jnp.mean(yc * yc, axis=-1, keepdims=True)
        o_ref[0] = (yc * jax.lax.rsqrt(var + eps) * g_ref[...]
                    + be_ref[...]).astype(o_ref.dtype)


def attention_block(s2_b, s1_b, p2_b, mask2f, kpad,
                    wq_t, wk_t, wv_t, bq, bk, bv, wo_t, bo, gamma1, beta1,
                    *, nhead, cd, approx, out_dtype):
    B, L, E = s2_b.shape
    S = s1_b.shape[1]
    hd = E // nhead
    tq = _pick_tile(L, (256, 128))
    tk = _pick_tile(S, (512, 256, 128))
    nq, nk = L // tq, S // tk

    def res(shape):
        return pl.BlockSpec(shape, lambda *_: (0,) * len(shape))

    return pl.pallas_call(
        functools.partial(_flash_attn_ln_kernel, nhead=nhead, hd=hd, cd=cd,
                          approx=approx, eps=1e-5),
        out_shape=jax.ShapeDtypeStruct((B, L, E), out_dtype),
        grid=(B, nq, nk),
        in_specs=[
            pl.BlockSpec((1, tq, E), lambda b, qi, ki: (b, qi, 0)),   # src2 (query / residual)
            pl.BlockSpec((1, tq, E), lambda b, qi, ki: (b, qi, 0)),   # pos2 @ query rows
            pl.BlockSpec((1, tk, E), lambda b, qi, ki: (b, ki, 0)),   # src1 (key/value)
            pl.BlockSpec((1, tk, E), lambda b, qi, ki: (b, ki, 0)),   # pos2 @ key rows
            pl.BlockSpec((B, tq),    lambda b, qi, ki: (0, qi)),      # mask2 cols @ q-tile
            pl.BlockSpec((B, tk),    lambda b, qi, ki: (0, ki)),      # mask2 cols @ k-tile
            pl.BlockSpec((1, 1, tk), lambda b, qi, ki: (b, 0, ki)),   # this batch key padding
            res((E, E)), res((E, E)), res((E, E)),                    # Wq*scale, Wk, Wv (pre-T)
            res((1, E)), res((1, E)), res((1, E)),                    # bq*scale, bk, bv
            res((E, E)), res((1, E)),                                 # Wo (pre-T), bo
            res((1, E)), res((1, E)),                                 # norm1 gamma/beta
        ],
        out_specs=pl.BlockSpec((1, tq, E), lambda b, qi, ki: (b, qi, 0)),
        scratch_shapes=[
            pltpu.VMEM((nhead, tq, hd), cd),           # cached Q (head-major)
            pltpu.VMEM((nhead, tq, 1), jnp.float32),   # running max
            pltpu.VMEM((nhead, tq, 1), jnp.float32),   # running denom
            pltpu.VMEM((nhead, tq, hd), jnp.float32),  # running PV accumulator
        ],
        compiler_params=pltpu.CompilerParams(
            dimension_semantics=("parallel", "parallel", "arbitrary"),
            vmem_limit_bytes=_VMEM_LIMIT),
    )(s2_b, p2_b, s1_b, p2_b, mask2f, mask2f, kpad,
      wq_t, wk_t, wv_t, bq, bk, bv, wo_t, bo, gamma1, beta1)


# ----------------------------------------------------------------------------
# Kernel B: lin1 + ReLU + lin2 + residual + LayerNorm2 (dim_ff chunked)
# ----------------------------------------------------------------------------

def _ffn_ln_kernel(x_ref, w1_ref, b1_ref, w2_ref, b2_ref, g_ref, be_ref,
                   o_ref, acc_ref, *, eps, cd):
    k = pl.program_id(1)

    @pl.when(k == 0)
    def _():
        acc_ref[...] = jnp.zeros_like(acc_ref)

    x = x_ref[...].astype(cd)                                            # (tm, E)
    h = jnp.dot(x, w1_ref[...].astype(cd),
                preferred_element_type=jnp.float32) + b1_ref[...]        # (tm, tf)
    h = jnp.maximum(h, 0.0)
    acc_ref[...] += jnp.dot(h.astype(cd), w2_ref[...].astype(cd),
                            preferred_element_type=jnp.float32)          # (tm, E)

    @pl.when(k == pl.num_programs(1) - 1)
    def _():
        y = acc_ref[...] + b2_ref[...] + x_ref[...].astype(jnp.float32)  # +residual
        mu = jnp.mean(y, axis=-1, keepdims=True)
        yc = y - mu
        var = jnp.mean(yc * yc, axis=-1, keepdims=True)
        o_ref[...] = (yc * jax.lax.rsqrt(var + eps) * g_ref[...]
                      + be_ref[...]).astype(o_ref.dtype)


def ffn_block(x, w1_t, b1, w2_t, b2, g, be, *, cd):
    M, E = x.shape
    FF = w1_t.shape[1]
    tm = _pick_tile(M, (1024, 512, 256, 128, 64, 32, 16, 8))
    tf = _pick_tile(FF, (512, 256, 128))
    return pl.pallas_call(
        functools.partial(_ffn_ln_kernel, eps=1e-5, cd=cd),
        out_shape=jax.ShapeDtypeStruct((M, E), jnp.float32),
        grid=(M // tm, FF // tf),
        in_specs=[
            pl.BlockSpec((tm, E), lambda i, k: (i, 0)),
            pl.BlockSpec((E, tf), lambda i, k: (0, k)),
            pl.BlockSpec((1, tf), lambda i, k: (0, k)),
            pl.BlockSpec((tf, E), lambda i, k: (k, 0)),
            pl.BlockSpec((1, E), lambda i, k: (0, 0)),
            pl.BlockSpec((1, E), lambda i, k: (0, 0)),
            pl.BlockSpec((1, E), lambda i, k: (0, 0)),
        ],
        out_specs=pl.BlockSpec((tm, E), lambda i, k: (i, 0)),
        scratch_shapes=[pltpu.VMEM((tm, E), jnp.float32)],
        compiler_params=pltpu.CompilerParams(
            dimension_semantics=("parallel", "arbitrary"),
            vmem_limit_bytes=_VMEM_LIMIT),
    )(x, w1_t, b1, w2_t, b2, g, be)


# ----------------------------------------------------------------------------
# Module forward
# ----------------------------------------------------------------------------

def cross_resolution_encoder_layer(src1, src2, mask1, mask2, pos1, pos2,
                                   params, nhead, use_bf16=True):
    del mask1, pos1  # unused by the PyTorch forward
    L, B, E = src2.shape
    S = src1.shape[0]
    assert S == L, "pos2 is added to both src1 and src2 in the module"
    hd = E // nhead
    scale = 1.0 / math.sqrt(hd)
    cd = jnp.bfloat16 if use_bf16 else jnp.float32        # MXU operand dtype
    act_dt = jnp.bfloat16 if use_bf16 else jnp.float32    # inter-kernel activation dtype

    # batch-major internal layout (only layout glue in the whole layer)
    s2_b = jnp.transpose(src2, (1, 0, 2))                 # (B, L, E)
    s1_b = jnp.transpose(src1, (1, 0, 2))
    p2_b = jnp.transpose(pos2, (1, 0, 2))

    # masks stay (B,L); the (L,S) bias is rebuilt per tile inside the kernel
    m2f = mask2.astype(jnp.float32)                       # (B, L)
    kpad = m2f.reshape(B, 1, L)

    # pre-transposed fused weights; softmax scale folded into Wq/bq (const-folded under jit)
    W_in, b_in = params["in_proj_w"], params["in_proj_b"]
    wq_t = (W_in[:E] * scale).T.astype(cd)
    wk_t = W_in[E:2 * E].T.astype(cd)
    wv_t = W_in[2 * E:].T.astype(cd)
    bq = (b_in[:E] * scale).reshape(1, E).astype(jnp.float32)
    bk = b_in[E:2 * E].reshape(1, E).astype(jnp.float32)
    bv = b_in[2 * E:].reshape(1, E).astype(jnp.float32)
    wo_t = params["out_proj_w"].T.astype(cd)
    bo = params["out_proj_b"].reshape(1, E).astype(jnp.float32)

    out1 = attention_block(
        s2_b, s1_b, p2_b, m2f, kpad,
        wq_t, wk_t, wv_t, bq, bk, bv, wo_t, bo,
        params["norm1_g"].reshape(1, E), params["norm1_b"].reshape(1, E),
        nhead=nhead, cd=cd, approx=use_bf16, out_dtype=act_dt)       # (B, L, E)

    M = B * L
    out2 = ffn_block(
        out1.reshape(M, E),
        params["lin1_w"].T.astype(cd), params["lin1_b"].reshape(1, -1),
        params["lin2_w"].T.astype(cd), params["lin2_b"].reshape(1, E),
        params["norm2_g"].reshape(1, E), params["norm2_b"].reshape(1, E),
        cd=cd)                                                       # (M, E)

    return jnp.transpose(out2.reshape(B, L, E), (1, 0, 2))           # (L, B, E)


# ----------------------------------------------------------------------------
# Pure-JAX reference (for correctness check only)
# ----------------------------------------------------------------------------

def reference_forward(src1, src2, mask2, pos2, params, nhead):
    L, B, E = src2.shape
    S = src1.shape[0]
    hd = E // nhead
    kk = src1
    kp = kk + pos2
    qp = src2 + pos2

    m2f = mask2.astype(jnp.float32)
    attn_mask = jnp.dot(m2f.T, m2f) > 0.0
    combined = attn_mask[None] | mask2[:, None, :]
    bias = jnp.where(combined, -jnp.inf, 0.0)[:, None]          # (B,1,L,S)

    def lin(x, w, b):
        return x @ w.T + b

    q = lin(qp, params["in_proj_w"][:E], params["in_proj_b"][:E])
    k = lin(kp, params["in_proj_w"][E:2 * E], params["in_proj_b"][E:2 * E])
    v = lin(kk, params["in_proj_w"][2 * E:], params["in_proj_b"][2 * E:])

    def heads(x, T):
        return x.reshape(T, B, nhead, hd).transpose(1, 2, 0, 3)  # (B,H,T,hd)

    qh, kh, vh = heads(q, L), heads(k, S), heads(v, S)
    s = jnp.einsum("bhld,bhsd->bhls", qh / math.sqrt(hd), kh) + bias
    p = jax.nn.softmax(s, axis=-1)
    oh = jnp.einsum("bhls,bhsd->bhld", p, vh)
    attn_out = oh.transpose(2, 0, 1, 3).reshape(L, B, E)
    attn_out = lin(attn_out, params["out_proj_w"], params["out_proj_b"])

    def layernorm(x, g, b, eps=1e-5):
        mu = x.mean(-1, keepdims=True)
        var = ((x - mu) ** 2).mean(-1, keepdims=True)
        return (x - mu) / jnp.sqrt(var + eps) * g + b

    out = layernorm(src2 + attn_out, params["norm1_g"], params["norm1_b"])
    out2 = lin(jnp.maximum(lin(out, params["lin1_w"], params["lin1_b"]), 0.0),
               params["lin2_w"], params["lin2_b"])
    out = layernorm(out + out2, params["norm2_g"], params["norm2_b"])
    return out


# ----------------------------------------------------------------------------
# Deterministic parameter init (mirrors module __init__ shapes)
# ----------------------------------------------------------------------------

def xavier_uniform(key, shape):
    fan_out, fan_in = shape
    a = math.sqrt(6.0 / (fan_in + fan_out))
    return jax.random.uniform(key, shape, jnp.float32, -a, a)


def init_params(key, d_model, nhead, dim_ff):
    ks = jax.random.split(key, 8)
    return {
        "in_proj_w": xavier_uniform(ks[0], (3 * d_model, d_model)),
        "in_proj_b": jnp.zeros((3 * d_model,), jnp.float32),
        "out_proj_w": xavier_uniform(ks[1], (d_model, d_model)),
        "out_proj_b": jnp.zeros((d_model,), jnp.float32),
        "lin1_w": xavier_uniform(ks[2], (dim_ff, d_model)),
        "lin1_b": jax.random.uniform(ks[3], (dim_ff,), jnp.float32, -0.05, 0.05),
        "lin2_w": xavier_uniform(ks[4], (d_model, dim_ff)),
        "lin2_b": jax.random.uniform(ks[5], (d_model,), jnp.float32, -0.05, 0.05),
        "norm1_g": jnp.ones((d_model,), jnp.float32),
        "norm1_b": jnp.zeros((d_model,), jnp.float32),
        "norm2_g": jnp.ones((d_model,), jnp.float32),
        "norm2_b": jnp.zeros((d_model,), jnp.float32),
    }


if __name__ == "__main__":
    L, B, E, H, FF = 8, 2, 32, 4, 64   # seq, batch, d_model, nhead, dim_feedforward
    key = jax.random.PRNGKey(0)
    k0, k1, k2, k3, kp = jax.random.split(key, 5)

    src1 = jax.random.normal(k0, (L, B, E), jnp.float32)
    src2 = jax.random.normal(k1, (L, B, E), jnp.float32)
    pos2 = 0.1 * jax.random.normal(k2, (L, B, E), jnp.float32)
    pos1 = 0.1 * jax.random.normal(k3, (L, B, E), jnp.float32)
    mask2 = jnp.zeros((B, L), bool).at[0, L - 1].set(True)   # key_padding_mask
    mask1 = jnp.zeros((B, L), bool)                          # unused by forward

    params = init_params(kp, E, H, FF)

    def make_fwd(use_bf16):
        def fwd(s1, s2, m2, p2):
            return cross_resolution_encoder_layer(
                s1, s2, mask1, m2, pos1, p2, params, nhead=H, use_bf16=use_bf16)
        return jax.jit(fwd)

    ref = reference_forward(src1, src2, mask2, pos2, params, nhead=H)

    # f32 verification path (exact softmax division), tight check vs pure-JAX reference
    out = jax.block_until_ready(make_fwd(False)(src1, src2, mask2, pos2))
    assert out.shape == (L, B, E)
    assert jnp.allclose(out, ref, atol=2e-4, rtol=2e-4), "f32 mismatch vs reference"

    # bf16 production fast path (bf16 MXU operands + bf16 inter-kernel activation), loose check
    out_bf16 = jax.block_until_ready(make_fwd(True)(src1, src2, mask2, pos2))
    assert out_bf16.shape == (L, B, E)
    assert jnp.allclose(out_bf16, ref, atol=1e-1, rtol=1e-1), "bf16 mismatch vs reference"

    print("KERNEL_OK")
</pallas_src>

<mosaic_0001>
module attributes {stable_mosaic.version = 11 : i64} {
  func.func @_ffn_ln_kernel(%arg0: i32, %arg1: i32, %arg2: memref<16x32xf32, #tpu.memory_space<vmem>>, %arg3: memref<32x64xf32, #tpu.memory_space<vmem>>, %arg4: memref<1x64xf32, #tpu.memory_space<vmem>>, %arg5: memref<64x32xf32, #tpu.memory_space<vmem>>, %arg6: memref<1x32xf32, #tpu.memory_space<vmem>>, %arg7: memref<1x32xf32, #tpu.memory_space<vmem>>, %arg8: memref<1x32xf32, #tpu.memory_space<vmem>>, %arg9: memref<16x32xf32, #tpu.memory_space<vmem>>, %arg10: memref<16x32xf32, #tpu.memory_space<vmem>>) attributes {dimension_semantics = [#tpu.dimension_semantics<parallel>, #tpu.dimension_semantics<arbitrary>], iteration_bounds = array<i64: 1, 1>, scalar_prefetch = 0 : i64, scratch_operands = 1 : i64, tpu.core_type = #tpu.core_type<tc>, window_params = [{transform_indices = @transform_0, window_bounds = array<i64: 16, 32>}, {transform_indices = @transform_1, window_bounds = array<i64: 32, 64>}, {transform_indices = @transform_2, window_bounds = array<i64: 1, 64>}, {transform_indices = @transform_3, window_bounds = array<i64: 64, 32>}, {pipeline_mode = #tpu.pipeline_mode<synchronous>, transform_indices = @transform_4, window_bounds = array<i64: 1, 32>}, {pipeline_mode = #tpu.pipeline_mode<synchronous>, transform_indices = @transform_5, window_bounds = array<i64: 1, 32>}, {pipeline_mode = #tpu.pipeline_mode<synchronous>, transform_indices = @transform_6, window_bounds = array<i64: 1, 32>}, {transform_indices = @transform_7, window_bounds = array<i64: 16, 32>}]} {
    %c0_i32 = arith.constant 0 : i32
    %0 = arith.cmpi eq, %arg1, %c0_i32 : i32
    %1 = arith.extui %0 : i1 to i32
    %c0_i32_0 = arith.constant 0 : i32
    %2 = arith.cmpi ne, %1, %c0_i32_0 : i32
    scf.if %2 {
      %cst_16 = arith.constant 0.000000e+00 : f32
      %19 = vector.broadcast %cst_16 : f32 to vector<16x32xf32>
      %c0_17 = arith.constant 0 : index
      %c0_18 = arith.constant 0 : index
      %20 = vector.load %arg10[%c0_17, %c0_18] : memref<16x32xf32, #tpu.memory_space<vmem>>, vector<16x32xf32>
      tpu.vector_store %arg10[%c0_17, %c0_18], %19 {strides = array<i32>} : memref<16x32xf32, #tpu.memory_space<vmem>>, vector<16x32xf32>,
    } else {
    }
    %c0 = arith.constant 0 : index
    %c0_1 = arith.constant 0 : index
    %3 = vector.load %arg2[%c0, %c0_1] : memref<16x32xf32, #tpu.memory_space<vmem>>, vector<16x32xf32>
    %c0_2 = arith.constant 0 : index
    %c0_3 = arith.constant 0 : index
    %4 = vector.load %arg3[%c0_2, %c0_3] : memref<32x64xf32, #tpu.memory_space<vmem>>, vector<32x64xf32>
    %cst = arith.constant dense<0.000000e+00> : vector<16x64xf32>
    %5 = tpu.matmul %3, %4, %cst {dimension_numbers = #tpu.dot_dimension_numbers<[1], [0], [0], [1], [0, 0, 1, 1], [], []>} : vector<16x32xf32>, vector<32x64xf32>, vector<16x64xf32> -> vector<16x64xf32>
    %c0_4 = arith.constant 0 : index
    %c0_5 = arith.constant 0 : index
    %6 = vector.load %arg4[%c0_4, %c0_5] : memref<1x64xf32, #tpu.memory_space<vmem>>, vector<1x64xf32>
    %7 = vector.broadcast %6 : vector<1x64xf32> to vector<16x64xf32>
    %8 = arith.addf %5, %7 : vector<16x64xf32>
    %cst_6 = arith.constant 0.000000e+00 : f32
    %9 = vector.broadcast %cst_6 : f32 to vector<16x64xf32>
    %10 = arith.maximumf %8, %9 : vector<16x64xf32>
    %c0_7 = arith.constant 0 : index
    %c0_8 = arith.constant 0 : index
    %11 = vector.load %arg10[%c0_7, %c0_8] : memref<16x32xf32, #tpu.memory_space<vmem>>, vector<16x32xf32>
    %c0_9 = arith.constant 0 : index
    %c0_10 = arith.constant 0 : index
    %12 = vector.load %arg5[%c0_9, %c0_10] : memref<64x32xf32, #tpu.memory_space<vmem>>, vector<64x32xf32>
    %cst_11 = arith.constant dense<0.000000e+00> : vector<16x32xf32>
    %13 = tpu.matmul %10, %12, %cst_11 {dimension_numbers = #tpu.dot_dimension_numbers<[1], [0], [0], [1], [0, 0, 1, 1], [], []>} : vector<16x64xf32>, vector<64x32xf32>, vector<16x32xf32> -> vector<16x32xf32>
    %14 = arith.addf %11, %13 : vector<16x32xf32>
    %c0_12 = arith.constant 0 : index
    %c0_13 = arith.constant 0 : index
    %15 = vector.load %arg10[%c0_12, %c0_13] : memref<16x32xf32, #tpu.memory_space<vmem>>, vector<16x32xf32>
    tpu.vector_store %arg10[%c0_12, %c0_13], %14 {strides = array<i32>} : memref<16x32xf32, #tpu.memory_space<vmem>>, vector<16x32xf32>,
    %c0_i32_14 = arith.constant 0 : i32
    %16 = arith.cmpi eq, %arg1, %c0_i32_14 : i32
    %17 = arith.extui %16 : i1 to i32
    %c0_i32_15 = arith.constant 0 : i32
    %18 = arith.cmpi ne, %17, %c0_i32_15 : i32
    scf.if %18 {
      %c0_16 = arith.constant 0 : index
      %c0_17 = arith.constant 0 : index
      %19 = vector.load %arg10[%c0_16, %c0_17] : memref<16x32xf32, #tpu.memory_space<vmem>>, vector<16x32xf32>
      %c0_18 = arith.constant 0 : index
      %c0_19 = arith.constant 0 : index
      %20 = vector.load %arg6[%c0_18, %c0_19] : memref<1x32xf32, #tpu.memory_space<vmem>>, vector<1x32xf32>
      %21 = vector.broadcast %20 : vector<1x32xf32> to vector<16x32xf32>
      %22 = arith.addf %19, %21 : vector<16x32xf32>
      %c0_20 = arith.constant 0 : index
      %c0_21 = arith.constant 0 : index
      %23 = vector.load %arg2[%c0_20, %c0_21] : memref<16x32xf32, #tpu.memory_space<vmem>>, vector<16x32xf32>
      %24 = arith.addf %22, %23 : vector<16x32xf32>
      %cst_22 = arith.constant dense<0.000000e+00> : vector<16xf32>
      %25 = vector.multi_reduction <add>, %24, %cst_22 [1] : vector<16x32xf32> to vector<16xf32>
      %26 = vector.shape_cast %25 : vector<16xf32> to vector<16x1xf32>
      %cst_23 = arith.constant 3.200000e+01 : f32
      %27 = vector.broadcast %cst_23 : f32 to vector<16x1xf32>
      %28 = arith.divf %26, %27 : vector<16x1xf32>
      %29 = vector.broadcast %28 : vector<16x1xf32> to vector<16x32xf32>
      %30 = arith.subf %24, %29 : vector<16x32xf32>
      %31 = arith.mulf %30, %30 : vector<16x32xf32>
      %cst_24 = arith.constant dense<0.000000e+00> : vector<16xf32>
      %32 = vector.multi_reduction <add>, %31, %cst_24 [1] : vector<16x32xf32> to vector<16xf32>
      %33 = vector.shape_cast %32 : vector<16xf32> to vector<16x1xf32>
      %cst_25 = arith.constant 3.200000e+01 : f32
      %34 = vector.broadcast %cst_25 : f32 to vector<16x1xf32>
      %35 = arith.divf %33, %34 : vector<16x1xf32>
      %cst_26 = arith.constant 9.99999974E-6 : f32
      %36 = vector.broadcast %cst_26 : f32 to vector<16x1xf32>
      %37 = arith.addf %35, %36 : vector<16x1xf32>
      %38 = math.rsqrt %37 : vector<16x1xf32>
      %39 = vector.broadcast %38 : vector<16x1xf32> to vector<16x32xf32>
      %40 = arith.mulf %30, %39 : vector<16x32xf32>
      %c0_27 = arith.constant 0 : index
      %c0_28 = arith.constant 0 : index
      %41 = vector.load %arg7[%c0_27, %c0_28] : memref<1x32xf32, #tpu.memory_space<vmem>>, vector<1x32xf32>
      %42 = vector.broadcast %41 : vector<1x32xf32> to vector<16x32xf32>
      %43 = arith.mulf %40, %42 : vector<16x32xf32>
      %c0_29 = arith.constant 0 : index
      %c0_30 = arith.constant 0 : index
      %44 = vector.load %arg8[%c0_29, %c0_30] : memref<1x32xf32, #tpu.memory_space<vmem>>, vector<1x32xf32>
      %45 = vector.broadcast %44 : vector<1x32xf32> to vector<16x32xf32>
      %46 = arith.addf %43, %45 : vector<16x32xf32>
      %c0_31 = arith.constant 0 : index
      %c0_32 = arith.constant 0 : index
      %47 = vector.load %arg9[%c0_31, %c0_32] : memref<16x32xf32, #tpu.memory_space<vmem>>, vector<16x32xf32>
      tpu.vector_store %arg9[%c0_31, %c0_32], %46 {strides = array<i32>} : memref<16x32xf32, #tpu.memory_space<vmem>>, vector<16x32xf32>,
    } else {
    }
    return
  }
  func.func @transform_0(%arg0: i32, %arg1: i32) -> (i32, i32) {
    %c0_i32 = arith.constant 0 : i32
    %c0_i32_0 = arith.constant 0 : i32
    return %arg0, %c0_i32 : i32, i32
  }
  func.func @transform_1(%arg0: i32, %arg1: i32) -> (i32, i32) {
    %c0_i32 = arith.constant 0 : i32
    %c0_i32_0 = arith.constant 0 : i32
    return %c0_i32, %arg1 : i32, i32
  }
  func.func @transform_2(%arg0: i32, %arg1: i32) -> (i32, i32) {
    %c0_i32 = arith.constant 0 : i32
    %c0_i32_0 = arith.constant 0 : i32
    return %c0_i32, %arg1 : i32, i32
  }
  func.func @transform_3(%arg0: i32, %arg1: i32) -> (i32, i32) {
    %c0_i32 = arith.constant 0 : i32
    %c0_i32_0 = arith.constant 0 : i32
    return %arg1, %c0_i32 : i32, i32
  }
  func.func @transform_4(%arg0: i32, %arg1: i32) -> (i32, i32) {
    %c0_i32 = arith.constant 0 : i32
    %c0_i32_0 = arith.constant 0 : i32
    %c0_i32_1 = arith.constant 0 : i32
    return %c0_i32, %c0_i32_0 : i32, i32
  }
  func.func @transform_5(%arg0: i32, %arg1: i32) -> (i32, i32) {
    %c0_i32 = arith.constant 0 : i32
    %c0_i32_0 = arith.constant 0 : i32
    %c0_i32_1 = arith.constant 0 : i32
    return %c0_i32, %c0_i32_0 : i32, i32
  }
  func.func @transform_6(%arg0: i32, %arg1: i32) -> (i32, i32) {
    %c0_i32 = arith.constant 0 : i32
    %c0_i32_0 = arith.constant 0 : i32
    %c0_i32_1 = arith.constant 0 : i32
    return %c0_i32, %c0_i32_0 : i32, i32
  }
  func.func @transform_7(%arg0: i32, %arg1: i32) -> (i32, i32) {
    %c0_i32 = arith.constant 0 : i32
    %c0_i32_0 = arith.constant 0 : i32
    return %arg0, %c0_i32 : i32, i32
  }
}

module attributes {stable_mosaic.version = 11 : i64} {
  func.func @_flash_attn_ln_kernel(%arg0: i32, %arg1: i32, %arg2: i32, %arg3: memref<1x8x32xf32, #tpu.memory_space<vmem>>, %arg4: memref<1x8x32xf32, #tpu.memory_space<vmem>>, %arg5: memref<1x8x32xf32, #tpu.memory_space<vmem>>, %arg6: memref<1x8x32xf32, #tpu.memory_space<vmem>>, %arg7: memref<2x8xf32, #tpu.memory_space<vmem>>, %arg8: memref<2x8xf32, #tpu.memory_space<vmem>>, %arg9: memref<1x1x8xf32, #tpu.memory_space<vmem>>, %arg10: memref<32x32xf32, #tpu.memory_space<vmem>>, %arg11: memref<32x32xf32, #tpu.memory_space<vmem>>, %arg12: memref<32x32xf32, #tpu.memory_space<vmem>>, %arg13: memref<1x32xf32, #tpu.memory_space<vmem>>, %arg14: memref<1x32xf32, #tpu.memory_space<vmem>>, %arg15: memref<1x32xf32, #tpu.memory_space<vmem>>, %arg16: memref<32x32xf32, #tpu.memory_space<vmem>>, %arg17: memref<1x32xf32, #tpu.memory_space<vmem>>, %arg18: memref<1x32xf32, #tpu.memory_space<vmem>>, %arg19: memref<1x32xf32, #tpu.memory_space<vmem>>, %arg20: memref<1x8x32xf32, #tpu.memory_space<vmem>>, %arg21: memref<4x8x8xf32, #tpu.memory_space<vmem>>, %arg22: memref<4x8x1xf32, #tpu.memory_space<vmem>>, %arg23: memref<4x8x1xf32, #tpu.memory_space<vmem>>, %arg24: memref<4x8x8xf32, #tpu.memory_space<vmem>>) attributes {dimension_semantics = [#tpu.dimension_semantics<parallel>, #tpu.dimension_semantics<parallel>, #tpu.dimension_semantics<arbitrary>], iteration_bounds = array<i64: 2, 1, 1>, scalar_prefetch = 0 : i64, scratch_operands = 4 : i64, tpu.core_type = #tpu.core_type<tc>, window_params = [{transform_indices = @transform_0, window_bounds = array<i64: 1, 8, 32>}, {transform_indices = @transform_1, window_bounds = array<i64: 1, 8, 32>}, {transform_indices = @transform_2, window_bounds = array<i64: 1, 8, 32>}, {transform_indices = @transform_3, window_bounds = array<i64: 1, 8, 32>}, {transform_indices = @transform_4, window_bounds = array<i64: 2, 8>}, {transform_indices = @transform_5, window_bounds = array<i64: 2, 8>}, {transform_indices = @transform_6, window_bounds = array<i64: 1, 1, 8>}, {pipeline_mode = #tpu.pipeline_mode<synchronous>, transform_indices = @transform_7, window_bounds = array<i64: 32, 32>}, {pipeline_mode = #tpu.pipeline_mode<synchronous>, transform_indices = @transform_8, window_bounds = array<i64: 32, 32>}, {pipeline_mode = #tpu.pipeline_mode<synchronous>, transform_indices = @transform_9, window_bounds = array<i64: 32, 32>}, {pipeline_mode = #tpu.pipeline_mode<synchronous>, transform_indices = @transform_10, window_bounds = array<i64: 1, 32>}, {pipeline_mode = #tpu.pipeline_mode<synchronous>, transform_indices = @transform_11, window_bounds = array<i64: 1, 32>}, {pipeline_mode = #tpu.pipeline_mode<synchronous>, transform_indices = @transform_12, window_bounds = array<i64: 1, 32>}, {pipeline_mode = #tpu.pipeline_mode<synchronous>, transform_indices = @transform_13, window_bounds = array<i64: 32, 32>}, {pipeline_mode = #tpu.pipeline_mode<synchronous>, transform_indices = @transform_14, window_bounds = array<i64: 1, 32>}, {pipeline_mode = #tpu.pipeline_mode<synchronous>, transform_indices = @transform_15, window_bounds = array<i64: 1, 32>}, {pipeline_mode = #tpu.pipeline_mode<synchronous>, transform_indices = @transform_16, window_bounds = array<i64: 1, 32>}, {transform_indices = @transform_17, window_bounds = array<i64: 1, 8, 32>}]} {
    %c0_i32 = arith.constant 0 : i32
    %0 = arith.cmpi eq, %arg2, %c0_i32 : i32
    %1 = arith.extui %0 : i1 to i32
    %c0_i32_0 = arith.constant 0 : i32
    %2 = arith.cmpi ne, %1, %c0_i32_0 : i32
    scf.if %2 {
      %c0_54 = arith.constant 0 : index
      %c0_55 = arith.constant 0 : index
      %c0_56 = arith.constant 0 : index
      %85 = vector.load %arg3[%c0_54, %c0_55, %c0_56] : memref<1x8x32xf32, #tpu.memory_space<vmem>>, vector<1x8x32xf32>
      %86 = vector.shape_cast %85 : vector<1x8x32xf32> to vector<8x32xf32>
      %c0_57 = arith.constant 0 : index
      %c0_58 = arith.constant 0 : index
      %c0_59 = arith.constant 0 : index
      %87 = vector.load %arg4[%c0_57, %c0_58, %c0_59] : memref<1x8x32xf32, #tpu.memory_space<vmem>>, vector<1x8x32xf32>
      %88 = vector.shape_cast %87 : vector<1x8x32xf32> to vector<8x32xf32>
      %89 = arith.addf %86, %88 : vector<8x32xf32>
      %c0_60 = arith.constant 0 : index
      %c0_61 = arith.constant 0 : index
      %90 = vector.load %arg10[%c0_60, %c0_61] : memref<32x32xf32, #tpu.memory_space<vmem>>, vector<32x32xf32>
      %cst_62 = arith.constant dense<0.000000e+00> : vector<8x32xf32>
      %91 = tpu.matmul %89, %90, %cst_62 {dimension_numbers = #tpu.dot_dimension_numbers<[1], [0], [0], [1], [0, 0, 1, 1], [], []>} : vector<8x32xf32>, vector<32x32xf32>, vector<8x32xf32> -> vector<8x32xf32>
      %c0_63 = arith.constant 0 : index
      %c0_64 = arith.constant 0 : index
      %92 = vector.load %arg13[%c0_63, %c0_64] : memref<1x32xf32, #tpu.memory_space<vmem>>, vector<1x32xf32>
      %93 = vector.broadcast %92 : vector<1x32xf32> to vector<8x32xf32>
      %94 = arith.addf %91, %93 : vector<8x32xf32>
      %95 = vector.extract_strided_slice %94 {offsets = [0, 0], sizes = [8, 8], strides = [1, 1]} : vector<8x32xf32> to vector<8x8xf32>
      %96 = vector.shape_cast %95 : vector<8x8xf32> to vector<1x8x8xf32>
      %97 = vector.extract_strided_slice %94 {offsets = [0, 8], sizes = [8, 8], strides = [1, 1]} : vector<8x32xf32> to vector<8x8xf32>
      %98 = vector.shape_cast %97 : vector<8x8xf32> to vector<1x8x8xf32>
      %99 = vector.extract_strided_slice %94 {offsets = [0, 16], sizes = [8, 8], strides = [1, 1]} : vector<8x32xf32> to vector<8x8xf32>
      %100 = vector.shape_cast %99 : vector<8x8xf32> to vector<1x8x8xf32>
      %101 = vector.extract_strided_slice %94 {offsets = [0, 24], sizes = [8, 8], strides = [1, 1]} : vector<8x32xf32> to vector<8x8xf32>
      %102 = vector.shape_cast %101 : vector<8x8xf32> to vector<1x8x8xf32>
      %103 = tpu.concatenate %96, %98, %100, %102 in 0 : vector<1x8x8xf32>, vector<1x8x8xf32>, vector<1x8x8xf32>, vector<1x8x8xf32> -> vector<4x8x8xf32>
      %c0_65 = arith.constant 0 : index
      %c0_66 = arith.constant 0 : index
      %c0_67 = arith.constant 0 : index
      %104 = vector.load %arg21[%c0_65, %c0_66, %c0_67] : memref<4x8x8xf32, #tpu.memory_space<vmem>>, vector<4x8x8xf32>
      tpu.vector_store %arg21[%c0_65, %c0_66, %c0_67], %103 {strides = array<i32>} : memref<4x8x8xf32, #tpu.memory_space<vmem>>, vector<4x8x8xf32>,
      %cst_68 = arith.constant -1.000000e+30 : f32
      %105 = vector.broadcast %cst_68 : f32 to vector<4x8x1xf32>
      %c0_69 = arith.constant 0 : index
      %c0_70 = arith.constant 0 : index
      %c0_71 = arith.constant 0 : index
      %106 = vector.load %arg22[%c0_69, %c0_70, %c0_71] : memref<4x8x1xf32, #tpu.memory_space<vmem>>, vector<4x8x1xf32>
      tpu.vector_store %arg22[%c0_69, %c0_70, %c0_71], %105 {strides = array<i32>} : memref<4x8x1xf32, #tpu.memory_space<vmem>>, vector<4x8x1xf32>,
      %cst_72 = arith.constant 0.000000e+00 : f32
      %107 = vector.broadcast %cst_72 : f32 to vector<4x8x1xf32>
      %c0_73 = arith.constant 0 : index
      %c0_74 = arith.constant 0 : index
      %c0_75 = arith.constant 0 : index
      %108 = vector.load %arg23[%c0_73, %c0_74, %c0_75] : memref<4x8x1xf32, #tpu.memory_space<vmem>>, vector<4x8x1xf32>
      tpu.vector_store %arg23[%c0_73, %c0_74, %c0_75], %107 {strides = array<i32>} : memref<4x8x1xf32, #tpu.memory_space<vmem>>, vector<4x8x1xf32>,
      %cst_76 = arith.constant 0.000000e+00 : f32
      %109 = vector.broadcast %cst_76 : f32 to vector<4x8x8xf32>
      %c0_77 = arith.constant 0 : index
      %c0_78 = arith.constant 0 : index
      %c0_79 = arith.constant 0 : index
      %110 = vector.load %arg24[%c0_77, %c0_78, %c0_79] : memref<4x8x8xf32, #tpu.memory_space<vmem>>, vector<4x8x8xf32>
      tpu.vector_store %arg24[%c0_77, %c0_78, %c0_79], %109 {strides = array<i32>} : memref<4x8x8xf32, #tpu.memory_space<vmem>>, vector<4x8x8xf32>,
    } else {
    }
    %c0 = arith.constant 0 : index
    %c0_1 = arith.constant 0 : index
    %c0_2 = arith.constant 0 : index
    %3 = vector.load %arg5[%c0, %c0_1, %c0_2] : memref<1x8x32xf32, #tpu.memory_space<vmem>>, vector<1x8x32xf32>
    %4 = vector.shape_cast %3 : vector<1x8x32xf32> to vector<8x32xf32>
    %c0_3 = arith.constant 0 : index
    %c0_4 = arith.constant 0 : index
    %c0_5 = arith.constant 0 : index
    %5 = vector.load %arg6[%c0_3, %c0_4, %c0_5] : memref<1x8x32xf32, #tpu.memory_space<vmem>>, vector<1x8x32xf32>
    %6 = vector.shape_cast %5 : vector<1x8x32xf32> to vector<8x32xf32>
    %7 = arith.addf %4, %6 : vector<8x32xf32>
    %c0_6 = arith.constant 0 : index
    %c0_7 = arith.constant 0 : index
    %8 = vector.load %arg11[%c0_6, %c0_7] : memref<32x32xf32, #tpu.memory_space<vmem>>, vector<32x32xf32>
    %cst = arith.constant dense<0.000000e+00> : vector<8x32xf32>
    %9 = tpu.matmul %7, %8, %cst {dimension_numbers = #tpu.dot_dimension_numbers<[1], [0], [0], [1], [0, 0, 1, 1], [], []>} : vector<8x32xf32>, vector<32x32xf32>, vector<8x32xf32> -> vector<8x32xf32>
    %c0_8 = arith.constant 0 : index
    %c0_9 = arith.constant 0 : index
    %10 = vector.load %arg14[%c0_8, %c0_9] : memref<1x32xf32, #tpu.memory_space<vmem>>, vector<1x32xf32>
    %11 = vector.broadcast %10 : vector<1x32xf32> to vector<8x32xf32>
    %12 = arith.addf %9, %11 : vector<8x32xf32>
    %c0_10 = arith.constant 0 : index
    %c0_11 = arith.constant 0 : index
    %13 = vector.load %arg12[%c0_10, %c0_11] : memref<32x32xf32, #tpu.memory_space<vmem>>, vector<32x32xf32>
    %cst_12 = arith.constant dense<0.000000e+00> : vector<8x32xf32>
    %14 = tpu.matmul %4, %13, %cst_12 {dimension_numbers = #tpu.dot_dimension_numbers<[1], [0], [0], [1], [0, 0, 1, 1], [], []>} : vector<8x32xf32>, vector<32x32xf32>, vector<8x32xf32> -> vector<8x32xf32>
    %c0_13 = arith.constant 0 : index
    %c0_14 = arith.constant 0 : index
    %15 = vector.load %arg15[%c0_13, %c0_14] : memref<1x32xf32, #tpu.memory_space<vmem>>, vector<1x32xf32>
    %16 = vector.broadcast %15 : vector<1x32xf32> to vector<8x32xf32>
    %17 = arith.addf %14, %16 : vector<8x32xf32>
    %18 = vector.extract_strided_slice %12 {offsets = [0, 0], sizes = [8, 8], strides = [1, 1]} : vector<8x32xf32> to vector<8x8xf32>
    %19 = vector.shape_cast %18 : vector<8x8xf32> to vector<1x8x8xf32>
    %20 = vector.extract_strided_slice %12 {offsets = [0, 8], sizes = [8, 8], strides = [1, 1]} : vector<8x32xf32> to vector<8x8xf32>
    %21 = vector.shape_cast %20 : vector<8x8xf32> to vector<1x8x8xf32>
    %22 = vector.extract_strided_slice %12 {offsets = [0, 16], sizes = [8, 8], strides = [1, 1]} : vector<8x32xf32> to vector<8x8xf32>
    %23 = vector.shape_cast %22 : vector<8x8xf32> to vector<1x8x8xf32>
    %24 = vector.extract_strided_slice %12 {offsets = [0, 24], sizes = [8, 8], strides = [1, 1]} : vector<8x32xf32> to vector<8x8xf32>
    %25 = vector.shape_cast %24 : vector<8x8xf32> to vector<1x8x8xf32>
    %26 = tpu.concatenate %19, %21, %23, %25 in 0 : vector<1x8x8xf32>, vector<1x8x8xf32>, vector<1x8x8xf32>, vector<1x8x8xf32> -> vector<4x8x8xf32>
    %27 = vector.extract_strided_slice %17 {offsets = [0, 0], sizes = [8, 8], strides = [1, 1]} : vector<8x32xf32> to vector<8x8xf32>
    %28 = vector.shape_cast %27 : vector<8x8xf32> to vector<1x8x8xf32>
    %29 = vector.extract_strided_slice %17 {offsets = [0, 8], sizes = [8, 8], strides = [1, 1]} : vector<8x32xf32> to vector<8x8xf32>
    %30 = vector.shape_cast %29 : vector<8x8xf32> to vector<1x8x8xf32>
    %31 = vector.extract_strided_slice %17 {offsets = [0, 16], sizes = [8, 8], strides = [1, 1]} : vector<8x32xf32> to vector<8x8xf32>
    %32 = vector.shape_cast %31 : vector<8x8xf32> to vector<1x8x8xf32>
    %33 = vector.extract_strided_slice %17 {offsets = [0, 24], sizes = [8, 8], strides = [1, 1]} : vector<8x32xf32> to vector<8x8xf32>
    %34 = vector.shape_cast %33 : vector<8x8xf32> to vector<1x8x8xf32>
    %35 = tpu.concatenate %28, %30, %32, %34 in 0 : vector<1x8x8xf32>, vector<1x8x8xf32>, vector<1x8x8xf32>, vector<1x8x8xf32> -> vector<4x8x8xf32>
    %c0_15 = arith.constant 0 : index
    %c0_16 = arith.constant 0 : index
    %36 = vector.load %arg7[%c0_15, %c0_16] : memref<2x8xf32, #tpu.memory_space<vmem>>, vector<2x8xf32>
    %c0_17 = arith.constant 0 : index
    %c0_18 = arith.constant 0 : index
    %37 = vector.load %arg8[%c0_17, %c0_18] : memref<2x8xf32, #tpu.memory_space<vmem>>, vector<2x8xf32>
    %38 = vector.shape_cast %36 : vector<2x8xf32> to vector<2x8x1xf32>
    %39 = vector.shape_cast %37 : vector<2x8xf32> to vector<2x1x8xf32>
    %40 = vector.broadcast %38 : vector<2x8x1xf32> to vector<2x8x8xf32>
    %41 = vector.broadcast %39 : vector<2x1x8xf32> to vector<2x8x8xf32>
    %42 = arith.mulf %40, %41 : vector<2x8x8xf32>
    %cst_19 = arith.constant dense<0xFF800000> : vector<8x8xf32>
    %43 = vector.multi_reduction <maximumf>, %42, %cst_19 [0] : vector<2x8x8xf32> to vector<8x8xf32>
    %cst_20 = arith.constant 0.000000e+00 : f32
    %44 = vector.broadcast %cst_20 : f32 to vector<8x8xf32>
    %45 = arith.cmpf ogt, %43, %44 : vector<8x8xf32>
    %c0_21 = arith.constant 0 : index
    %c0_22 = arith.constant 0 : index
    %c0_23 = arith.constant 0 : index
    %46 = vector.load %arg9[%c0_21, %c0_22, %c0_23] : memref<1x1x8xf32, #tpu.memory_space<vmem>>, vector<1x1x8xf32>
    %47 = vector.shape_cast %46 : vector<1x1x8xf32> to vector<1x8xf32>
    %cst_24 = arith.constant 5.000000e-01 : f32
    %48 = vector.broadcast %cst_24 : f32 to vector<1x8xf32>
    %49 = arith.cmpf ogt, %47, %48 : vector<1x8xf32>
    %50 = vector.broadcast %49 : vector<1x8xi1> to vector<8x8xi1>
    %51 = arith.ori %45, %50 : vector<8x8xi1>
    %cst_25 = arith.constant -1.000000e+30 : f32
    %cst_26 = arith.constant 0.000000e+00 : f32
    %52 = vector.broadcast %cst_25 : f32 to vector<8x8xf32>
    %53 = vector.broadcast %cst_26 : f32 to vector<8x8xf32>
    %54 = arith.select %51, %52, %53 : vector<8x8xi1>, vector<8x8xf32>
    %c0_27 = arith.constant 0 : index
    %c0_28 = arith.constant 0 : index
    %c0_29 = arith.constant 0 : index
    %55 = vector.load %arg21[%c0_27, %c0_28, %c0_29] : memref<4x8x8xf32, #tpu.memory_space<vmem>>, vector<4x8x8xf32>
    "tpu.trace_start"() <{level = 10 : i32, message = "hqd,hkd->hqk"}> : () -> ()
    %cst_30 = arith.constant dense<0.000000e+00> : vector<4x8x8xf32>
    %56 = tpu.matmul %55, %26, %cst_30 {dimension_numbers = #tpu.dot_dimension_numbers<[2], [2], [1], [1], [0, 0, 0, 1, 1, 1], [0], [0]>} : vector<4x8x8xf32>, vector<4x8x8xf32>, vector<4x8x8xf32> -> vector<4x8x8xf32>
    "tpu.trace_stop"() : () -> ()
    %57 = vector.shape_cast %54 : vector<8x8xf32> to vector<1x8x8xf32>
    %58 = vector.broadcast %57 : vector<1x8x8xf32> to vector<4x8x8xf32>
    %59 = arith.addf %56, %58 : vector<4x8x8xf32>
    %c0_31 = arith.constant 0 : index
    %c0_32 = arith.constant 0 : index
    %c0_33 = arith.constant 0 : index
    %60 = vector.load %arg22[%c0_31, %c0_32, %c0_33] : memref<4x8x1xf32, #tpu.memory_space<vmem>>, vector<4x8x1xf32>
    %cst_34 = arith.constant dense<0xFF800000> : vector<4x8xf32>
    %61 = vector.multi_reduction <maximumf>, %59, %cst_34 [2] : vector<4x8x8xf32> to vector<4x8xf32>
    %62 = vector.shape_cast %61 : vector<4x8xf32> to vector<4x8x1xf32>
    %63 = arith.maximumf %60, %62 : vector<4x8x1xf32>
    %64 = arith.subf %60, %63 : vector<4x8x1xf32>
    %65 = math.exp %64 : vector<4x8x1xf32>
    %66 = vector.broadcast %63 : vector<4x8x1xf32> to vector<4x8x8xf32>
    %67 = arith.subf %59, %66 : vector<4x8x8xf32>
    %68 = math.exp %67 : vector<4x8x8xf32>
    %c0_35 = arith.constant 0 : index
    %c0_36 = arith.constant 0 : index
    %c0_37 = arith.constant 0 : index
    %69 = vector.load %arg23[%c0_35, %c0_36, %c0_37] : memref<4x8x1xf32, #tpu.memory_space<vmem>>, vector<4x8x1xf32>
    %70 = arith.mulf %65, %69 : vector<4x8x1xf32>
    %cst_38 = arith.constant dense<0.000000e+00> : vector<4x8xf32>
    %71 = vector.multi_reduction <add>, %68, %cst_38 [2] : vector<4x8x8xf32> to vector<4x8xf32>
    %72 = vector.shape_cast %71 : vector<4x8xf32> to vector<4x8x1xf32>
    %73 = arith.addf %70, %72 : vector<4x8x1xf32>
    %c0_39 = arith.constant 0 : index
    %c0_40 = arith.constant 0 : index
    %c0_41 = arith.constant 0 : index
    %74 = vector.load %arg23[%c0_39, %c0_40, %c0_41] : memref<4x8x1xf32, #tpu.memory_space<vmem>>, vector<4x8x1xf32>
    tpu.vector_store %arg23[%c0_39, %c0_40, %c0_41], %73 {strides = array<i32>} : memref<4x8x1xf32, #tpu.memory_space<vmem>>, vector<4x8x1xf32>,
    %c0_42 = arith.constant 0 : index
    %c0_43 = arith.constant 0 : index
    %c0_44 = arith.constant 0 : index
    %75 = vector.load %arg24[%c0_42, %c0_43, %c0_44] : memref<4x8x8xf32, #tpu.memory_space<vmem>>, vector<4x8x8xf32>
    %76 = vector.broadcast %65 : vector<4x8x1xf32> to vector<4x8x8xf32>
    %77 = arith.mulf %76, %75 : vector<4x8x8xf32>
    "tpu.trace_start"() <{level = 10 : i32, message = "hqk,hkd->hqd"}> : () -> ()
    %cst_45 = arith.constant dense<0.000000e+00> : vector<4x8x8xf32>
    %78 = tpu.matmul %68, %35, %cst_45 {dimension_numbers = #tpu.dot_dimension_numbers<[2], [1], [1], [2], [0, 0, 0, 1, 1, 2], [0], [0]>} : vector<4x8x8xf32>, vector<4x8x8xf32>, vector<4x8x8xf32> -> vector<4x8x8xf32>
    "tpu.trace_stop"() : () -> ()
    %79 = arith.addf %77, %78 : vector<4x8x8xf32>
    %c0_46 = arith.constant 0 : index
    %c0_47 = arith.constant 0 : index
    %c0_48 = arith.constant 0 : index
    %80 = vector.load %arg24[%c0_46, %c0_47, %c0_48] : memref<4x8x8xf32, #tpu.memory_space<vmem>>, vector<4x8x8xf32>
    tpu.vector_store %arg24[%c0_46, %c0_47, %c0_48], %79 {strides = array<i32>} : memref<4x8x8xf32, #tpu.memory_space<vmem>>, vector<4x8x8xf32>,
    %c0_49 = arith.constant 0 : index
    %c0_50 = arith.constant 0 : index
    %c0_51 = arith.constant 0 : index
    %81 = vector.load %arg22[%c0_49, %c0_50, %c0_51] : memref<4x8x1xf32, #tpu.memory_space<vmem>>, vector<4x8x1xf32>
    tpu.vector_store %arg22[%c0_49, %c0_50, %c0_51], %63 {strides = array<i32>} : memref<4x8x1xf32, #tpu.memory_space<vmem>>, vector<4x8x1xf32>,
    %c0_i32_52 = arith.constant 0 : i32
    %82 = arith.cmpi eq, %arg2, %c0_i32_52 : i32
    %83 = arith.extui %82 : i1 to i32
    %c0_i32_53 = arith.constant 0 : i32
    %84 = arith.cmpi ne, %83, %c0_i32_53 : i32
    scf.if %84 {
      %c0_54 = arith.constant 0 : index
      %c0_55 = arith.constant 0 : index
      %c0_56 = arith.constant 0 : index
      %85 = vector.load %arg24[%c0_54, %c0_55, %c0_56] : memref<4x8x8xf32, #tpu.memory_space<vmem>>, vector<4x8x8xf32>
      %c0_57 = arith.constant 0 : index
      %c0_58 = arith.constant 0 : index
      %c0_59 = arith.constant 0 : index
      %86 = vector.load %arg23[%c0_57, %c0_58, %c0_59] : memref<4x8x1xf32, #tpu.memory_space<vmem>>, vector<4x8x1xf32>
      %87 = vector.broadcast %86 : vector<4x8x1xf32> to vector<4x8x8xf32>
      %88 = arith.divf %85, %87 : vector<4x8x8xf32>
      %89 = vector.extract_strided_slice %88 {offsets = [0, 0, 0], sizes = [1, 8, 8], strides = [1, 1, 1]} : vector<4x8x8xf32> to vector<1x8x8xf32>
      %90 = vector.shape_cast %89 : vector<1x8x8xf32> to vector<8x8xf32>
      %91 = vector.extract_strided_slice %88 {offsets = [1, 0, 0], sizes = [1, 8, 8], strides = [1, 1, 1]} : vector<4x8x8xf32> to vector<1x8x8xf32>
      %92 = vector.shape_cast %91 : vector<1x8x8xf32> to vector<8x8xf32>
      %93 = vector.extract_strided_slice %88 {offsets = [2, 0, 0], sizes = [1, 8, 8], strides = [1, 1, 1]} : vector<4x8x8xf32> to vector<1x8x8xf32>
      %94 = vector.shape_cast %93 : vector<1x8x8xf32> to vector<8x8xf32>
      %95 = vector.extract_strided_slice %88 {offsets = [3, 0, 0], sizes = [1, 8, 8], strides = [1, 1, 1]} : vector<4x8x8xf32> to vector<1x8x8xf32>
      %96 = vector.shape_cast %95 : vector<1x8x8xf32> to vector<8x8xf32>
      %97 = tpu.concatenate %90, %92, %94, %96 in 1 : vector<8x8xf32>, vector<8x8xf32>, vector<8x8xf32>, vector<8x8xf32> -> vector<8x32xf32>
      %c0_60 = arith.constant 0 : index
      %c0_61 = arith.constant 0 : index
      %c0_62 = arith.constant 0 : index
      %98 = vector.load %arg3[%c0_60, %c0_61, %c0_62] : memref<1x8x32xf32, #tpu.memory_space<vmem>>, vector<1x8x32xf32>
      %99 = vector.shape_cast %98 : vector<1x8x32xf32> to vector<8x32xf32>
      %c0_63 = arith.constant 0 : index
      %c0_64 = arith.constant 0 : index
      %100 = vector.load %arg17[%c0_63, %c0_64] : memref<1x32xf32, #tpu.memory_space<vmem>>, vector<1x32xf32>
      %101 = vector.broadcast %100 : vector<1x32xf32> to vector<8x32xf32>
      %102 = arith.addf %99, %101 : vector<8x32xf32>
      %c0_65 = arith.constant 0 : index
      %c0_66 = arith.constant 0 : index
      %103 = vector.load %arg16[%c0_65, %c0_66] : memref<32x32xf32, #tpu.memory_space<vmem>>, vector<32x32xf32>
      %cst_67 = arith.constant dense<0.000000e+00> : vector<8x32xf32>
      %104 = tpu.matmul %97, %103, %cst_67 {dimension_numbers = #tpu.dot_dimension_numbers<[1], [0], [0], [1], [0, 0, 1, 1], [], []>} : vector<8x32xf32>, vector<32x32xf32>, vector<8x32xf32> -> vector<8x32xf32>
      %105 = arith.addf %102, %104 : vector<8x32xf32>
      %cst_68 = arith.constant dense<0.000000e+00> : vector<8xf32>
      %106 = vector.multi_reduction <add>, %105, %cst_68 [1] : vector<8x32xf32> to vector<8xf32>
      %107 = vector.shape_cast %106 : vector<8xf32> to vector<8x1xf32>
      %cst_69 = arith.constant 3.200000e+01 : f32
      %108 = vector.broadcast %cst_69 : f32 to vector<8x1xf32>
      %109 = arith.divf %107, %108 : vector<8x1xf32>
      %110 = vector.broadcast %109 : vector<8x1xf32> to vector<8x32xf32>
      %111 = arith.subf %105, %110 : vector<8x32xf32>
      %112 = arith.mulf %111, %111 : vector<8x32xf32>
      %cst_70 = arith.constant dense<0.000000e+00> : vector<8xf32>
      %113 = vector.multi_reduction <add>, %112, %cst_70 [1] : vector<8x32xf32> to vector<8xf32>
      %114 = vector.shape_cast %113 : vector<8xf32> to vector<8x1xf32>
      %cst_71 = arith.constant 3.200000e+01 : f32
      %115 = vector.broadcast %cst_71 : f32 to vector<8x1xf32>
      %116 = arith.divf %114, %115 : vector<8x1xf32>
      %cst_72 = arith.constant 9.99999974E-6 : f32
      %117 = vector.broadcast %cst_72 : f32 to vector<8x1xf32>
      %118 = arith.addf %116, %117 : vector<8x1xf32>
      %119 = math.rsqrt %118 : vector<8x1xf32>
      %120 = vector.broadcast %119 : vector<8x1xf32> to vector<8x32xf32>
      %121 = arith.mulf %111, %120 : vector<8x32xf32>
      %c0_73 = arith.constant 0 : index
      %c0_74 = arith.constant 0 : index
      %122 = vector.load %arg18[%c0_73, %c0_74] : memref<1x32xf32, #tpu.memory_space<vmem>>, vector<1x32xf32>
      %123 = vector.broadcast %122 : vector<1x32xf32> to vector<8x32xf32>
      %124 = arith.mulf %121, %123 : vector<8x32xf32>
      %c0_75 = arith.constant 0 : index
      %c0_76 = arith.constant 0 : index
      %125 = vector.load %arg19[%c0_75, %c0_76] : memref<1x32xf32, #tpu.memory_space<vmem>>, vector<1x32xf32>
      %126 = vector.broadcast %125 : vector<1x32xf32> to vector<8x32xf32>
      %127 = arith.addf %124, %126 : vector<8x32xf32>
      %c0_77 = arith.constant 0 : index
      %c0_78 = arith.constant 0 : index
      %c0_79 = arith.constant 0 : index
      %128 = vector.load %arg20[%c0_77, %c0_78, %c0_79] : memref<1x8x32xf32, #tpu.memory_space<vmem>>, vector<1x8x32xf32>
      %129 = vector.shape_cast %128 : vector<1x8x32xf32> to vector<8x32xf32>
      %130 = vector.shape_cast %127 : vector<8x32xf32> to vector<1x8x32xf32>
      tpu.vector_store %arg20[%c0_77, %c0_78, %c0_79], %130 {strides = array<i32>} : memref<1x8x32xf32, #tpu.memory_space<vmem>>, vector<1x8x32xf32>,
    } else {
    }
    return
  }
  func.func @transform_0(%arg0: i32, %arg1: i32, %arg2: i32) -> (i32, i32, i32) {
    %c0_i32 = arith.constant 0 : i32
    %c0_i32_0 = arith.constant 0 : i32
    return %arg0, %arg1, %c0_i32 : i32, i32, i32
  }
  func.func @transform_1(%arg0: i32, %arg1: i32, %arg2: i32) -> (i32, i32, i32) {
    %c0_i32 = arith.constant 0 : i32
    %c0_i32_0 = arith.constant 0 : i32
    return %arg0, %arg1, %c0_i32 : i32, i32, i32
  }
  func.func @transform_2(%arg0: i32, %arg1: i32, %arg2: i32) -> (i32, i32, i32) {
    %c0_i32 = arith.constant 0 : i32
    %c0_i32_0 = arith.constant 0 : i32
    return %arg0, %arg2, %c0_i32 : i32, i32, i32
  }
  func.func @transform_3(%arg0: i32, %arg1: i32, %arg2: i32) -> (i32, i32, i32) {
    %c0_i32 = arith.constant 0 : i32
    %c0_i32_0 = arith.constant 0 : i32
    return %arg0, %arg2, %c0_i32 : i32, i32, i32
  }
  func.func @transform_4(%arg0: i32, %arg1: i32, %arg2: i32) -> (i32, i32) {
    %c0_i32 = arith.constant 0 : i32
    %c0_i32_0 = arith.constant 0 : i32
    return %c0_i32, %arg1 : i32, i32
  }
  func.func @transform_5(%arg0: i32, %arg1: i32, %arg2: i32) -> (i32, i32) {
    %c0_i32 = arith.constant 0 : i32
    %c0_i32_0 = arith.constant 0 : i32
    return %c0_i32, %arg2 : i32, i32
  }
  func.func @transform_6(%arg0: i32, %arg1: i32, %arg2: i32) -> (i32, i32, i32) {
    %c0_i32 = arith.constant 0 : i32
    %c0_i32_0 = arith.constant 0 : i32
    return %arg0, %c0_i32, %arg2 : i32, i32, i32
  }
  func.func @transform_7(%arg0: i32, %arg1: i32, %arg2: i32) -> (i32, i32) {
    %c0_i32 = arith.constant 0 : i32
    %c0_i32_0 = arith.constant 0 : i32
    %c0_i32_1 = arith.constant 0 : i32
    return %c0_i32, %c0_i32_0 : i32, i32
  }
  func.func @transform_8(%arg0: i32, %arg1: i32, %arg2: i32) -> (i32, i32) {
    %c0_i32 = arith.constant 0 : i32
    %c0_i32_0 = arith.constant 0 : i32
    %c0_i32_1 = arith.constant 0 : i32
    return %c0_i32, %c0_i32_0 : i32, i32
  }
  func.func @transform_9(%arg0: i32, %arg1: i32, %arg2: i32) -> (i32, i32) {
    %c0_i32 = arith.constant 0 : i32
    %c0_i32_0 = arith.constant 0 : i32
    %c0_i32_1 = arith.constant 0 : i32
    return %c0_i32, %c0_i32_0 : i32, i32
  }
  func.func @transform_10(%arg0: i32, %arg1: i32, %arg2: i32) -> (i32, i32) {
    %c0_i32 = arith.constant 0 : i32
    %c0_i32_0 = arith.constant 0 : i32
    %c0_i32_1 = arith.constant 0 : i32
    return %c0_i32, %c0_i32_0 : i32, i32
  }
  func.func @transform_11(%arg0: i32, %arg1: i32, %arg2: i32) -> (i32, i32) {
    %c0_i32 = arith.constant 0 : i32
    %c0_i32_0 = arith.constant 0 : i32
    %c0_i32_1 = arith.constant 0 : i32
    return %c0_i32, %c0_i32_0 : i32, i32
  }
  func.func @transform_12(%arg0: i32, %arg1: i32, %arg2: i32) -> (i32, i32) {
    %c0_i32 = arith.constant 0 : i32
    %c0_i32_0 = arith.constant 0 : i32
    %c0_i32_1 = arith.constant 0 : i32
    return %c0_i32, %c0_i32_0 : i32, i32
  }
  func.func @transform_13(%arg0: i32, %arg1: i32, %arg2: i32) -> (i32, i32) {
    %c0_i32 = arith.constant 0 : i32
    %c0_i32_0 = arith.constant 0 : i32
    %c0_i32_1 = arith.constant 0 : i32
    return %c0_i32, %c0_i32_0 : i32, i32
  }
  func.func @transform_14(%arg0: i32, %arg1: i32, %arg2: i32) -> (i32, i32) {
    %c0_i32 = arith.constant 0 : i32
    %c0_i32_0 = arith.constant 0 : i32
    %c0_i32_1 = arith.constant 0 : i32
    return %c0_i32, %c0_i32_0 : i32, i32
  }
  func.func @transform_15(%arg0: i32, %arg1: i32, %arg2: i32) -> (i32, i32) {
    %c0_i32 = arith.constant 0 : i32
    %c0_i32_0 = arith.constant 0 : i32
    %c0_i32_1 = arith.constant 0 : i32
    return %c0_i32, %c0_i32_0 : i32, i32
  }
  func.func @transform_16(%arg0: i32, %arg1: i32, %arg2: i32) -> (i32, i32) {
    %c0_i32 = arith.constant 0 : i32
    %c0_i32_0 = arith.constant 0 : i32
    %c0_i32_1 = arith.constant 0 : i32
    return %c0_i32, %c0_i32_0 : i32, i32
  }
  func.func @transform_17(%arg0: i32, %arg1: i32, %arg2: i32) -> (i32, i32, i32) {
    %c0_i32 = arith.constant 0 : i32
    %c0_i32_0 = arith.constant 0 : i32
    return %arg0, %arg1, %c0_i32 : i32, i32, i32
  }
}

</mosaic_0001>

<llo_original>
// kernel: fwd.3
$region0: #{fwd.3}
  #allocation0 [shape = 'u32[]', space=smem, size = 0x4, offset = 0x4, fixed_abs, tag = 'smem constant byte address 0x4 - core index']
  #allocation1 [shape = 'u32[144,128]{1,0:T(1,128)}', space=vmem, size = 0x12000, scoped, tag = 'internal scratch']
  #allocation2 [shape = 'f32[16,32]{1,0:T(8,128)}', space=vmem, size = 0x2000, scoped, tag = 'scratch operand']
  %s0 = inlined_call_operand.vmem [shape: f32[16,32], index: 0, kind: input, shape index: {}]
  %s1 = inlined_call_operand.vmem [shape: f32[32,64], index: 1, kind: input, shape index: {}]
  %s2 = inlined_call_operand.vmem [shape: f32[1,64], index: 2, kind: input, shape index: {}]
  %s3 = inlined_call_operand.vmem [shape: f32[64,32], index: 3, kind: input, shape index: {}]
  %s4 = inlined_call_operand.vmem [shape: f32[1,32], index: 4, kind: input, shape index: {}]
  %s5 = inlined_call_operand.vmem [shape: f32[1,32], index: 5, kind: input, shape index: {}]
  %s6 = inlined_call_operand.vmem [shape: f32[1,32], index: 6, kind: input, shape index: {}]
  %s7 = inlined_call_operand.vmem [shape: f32[16,32], index: 7, kind: output, shape index: {}]
  %s8 = sld [smem:[#allocation0]]
  $region46: #{fwd.3} parent=0
    _
  %s10 = ssub.s32 1, %s8
  %s11 = scalar_select 0, %s10, %s8
  // Predicated region
  $region2: #{fwd.3} parent=0 // pred_check
    _
  $region3: #{fwd.3} parent=0 // pred_check_branch
    %13 = sbr.rel (0) target = $region5
  $region4: #{fwd.3} parent=0 // pred_region
    _
  $region5: #{fwd.3} parent=0 // pred_fallthru
    _
  // Predicated region
  $region6: #{fwd.3} parent=0 // pred_check
    _
  $region7: #{fwd.3} parent=0 // pred_check_branch
    %15 = sbr.rel (0) target = $region9
  $region8: #{fwd.3} parent=0 // pred_region
    _
  $region9: #{fwd.3} parent=0 // pred_fallthru
    _
  // Predicated region
  $region10: #{fwd.3} parent=0 // pred_check
    _
  $region11: #{fwd.3} parent=0 // pred_check_branch
    %17 = sbr.rel (0) target = $region13
  $region12: #{fwd.3} parent=0 // pred_region
    _
  $region13: #{fwd.3} parent=0 // pred_fallthru
    _
  // Predicated region
  $region14: #{fwd.3} parent=0 // pred_check
    _
  $region15: #{fwd.3} parent=0 // pred_check_branch
    %19 = sbr.rel (0) target = $region17
  $region16: #{fwd.3} parent=0 // pred_region
    _
  $region17: #{fwd.3} parent=0 // pred_fallthru
    _
  // Predicated region
  $region18: #{fwd.3} parent=0 // pred_check
    _
  $region19: #{fwd.3} parent=0 // pred_check_branch
    %21 = sbr.rel (0) target = $region21
  $region20: #{fwd.3} parent=0 // pred_region
    _
  $region21: #{fwd.3} parent=0 // pred_fallthru
    _
  // Predicated region
  $region22: #{fwd.3} parent=0 // pred_check
    _
  $region23: #{fwd.3} parent=0 // pred_check_branch
    %23 = sbr.rel (0) target = $region25
  $region24: #{fwd.3} parent=0 // pred_region
    _
  $region25: #{fwd.3} parent=0 // pred_fallthru
    _
  // Predicated region
  $region26: #{fwd.3} parent=0 // pred_check
    _
  $region27: #{fwd.3} parent=0 // pred_check_branch
    %25 = sbr.rel (0) target = $region29
  $region28: #{fwd.3} parent=0 // pred_region
    _
  $region29: #{fwd.3} parent=0 // pred_fallthru
    _
  %p26 = scmp.eq.s32.totalorder 0, 0
  // Predicated region
  $region30: #{fwd.3} parent=0 // pred_check
    %p27 = pneg %p26
  $region31: #{fwd.3} parent=0 // pred_check_branch
    %29 = sbr.rel (%p27) target = $region33
  $region32: #{fwd.3} parent=0 // pred_region
    %vm30 = vcmask 261120
    %31 = vst.msk [vmem:[#allocation2] sm:$0xff] %vm30, 0.0
    %32 = vst.msk [vmem:[#allocation2 + $0x8] sm:$0xff] %vm30, 0.0
  $region33: #{fwd.3} parent=0 // pred_fallthru
    _
  %v33 = vld [vmem:[%s0] sm:$0xff]
  %v34 = vld [vmem:[%s0 + $0x8] sm:$0xff]
  %v35 = vld [vmem:[%s1] sm:$0xff]
  %v36 = vld [vmem:[%s1 + $0x8] sm:$0xff]
  %v37 = vld [vmem:[%s1 + $0x10] sm:$0xff]
  %v38 = vld [vmem:[%s1 + $0x18] sm:$0xff]
  %v39 = vld [vmem:[%s2] sm:$0x1]
  %v41 = vlaneseq
  %v42 = vshrl.u32 %v41, 7
  %v43 = vsub.s32 0, %v42
  %v44 = vrot.slane %v39, %v43
  %vm46 = vcmask 261120
  %v48 = vsel %vm46, %v33, 0
  %v51 = vsel %vm46, %v34, 0
  %53 = vmatprep.subr.mxu0 0.0
  %54 = vmatpush1.msra.mxu0 0.0
  %55 = vmatprep.subr.mxu0 0.0
  %56 = vmatpush1.msra.mxu0 0.0
  %57 = vmatprep.subr.mxu0 0.0
  %58 = vmatpush1.msra.mxu0 0.0
  %59 = vmatprep.subr.mxu0 0.0
  %60 = vmatpush1.msra.mxu0 0.0
  %61 = vmatprep.subr.mxu0 0.0
  %62 = vmatpush1.msra.mxu0 0.0
  %63 = vmatprep.subr.mxu0 0.0
  %64 = vmatpush1.msra.mxu0 0.0
  %65 = vmatprep.subr.mxu0 0.0
  %66 = vmatpush1.msra.mxu0 0.0
  %67 = vmatprep.subr.mxu0 0.0
  %68 = vmatpush1.msra.mxu0 0.0
  %69 = vmatprep.subr.mxu0 0.0
  %70 = vmatpush1.msra.mxu0 0.0
  %71 = vmatprep.subr.mxu0 0.0
  %72 = vmatpush1.msra.mxu0 0.0
  %73 = vmatprep.subr.mxu0 0.0
  %74 = vmatpush1.msra.mxu0 0.0
  %75 = vmatprep.subr.mxu0 0.0
  %76 = vmatpush1.msra.mxu0 0.0
  %77 = vmatprep.subr.mxu0 0.0
  %78 = vmatpush1.msra.mxu0 %v38
  %79 = vmatprep.subr.mxu0 0.0
  %80 = vmatpush1.msra.mxu0 %v37
  %81 = vmatprep.subr.mxu0 0.0
  %82 = vmatpush1.msra.mxu0 %v36
  %83 = vmatprep.subr.mxu0 0.0
  %84 = vmatpush1.msra.mxu0 %v35
  %85 = vmatprep.subr.mxu0 0.0
  %86 = vmatpush2.msra.mxu0 0.0
  %87 = vmatprep.subr.mxu0 0.0
  %88 = vmatpush2.msra.mxu0 0.0
  %89 = vmatprep.subr.mxu0 0.0
  %90 = vmatpush2.msra.mxu0 0.0
  %91 = vmatprep.subr.mxu0 0.0
  %92 = vmatpush2.msra.mxu0 0.0
  %93 = vmatprep.subr.mxu0 0.0
  %94 = vmatpush2.msra.mxu0 0.0
  %95 = vmatprep.subr.mxu0 0.0
  %96 = vmatpush2.msra.mxu0 0.0
  %97 = vmatprep.subr.mxu0 0.0
  %98 = vmatpush2.msra.mxu0 0.0
  %99 = vmatprep.subr.mxu0 0.0
  %100 = vmatpush2.msra.mxu0 0.0
  %101 = vmatprep.subr.mxu0 0.0
  %102 = vmatpush2.msra.mxu0 0.0
  %103 = vmatprep.subr.mxu0 0.0
  %104 = vmatpush2.msra.mxu0 0.0
  %105 = vmatprep.subr.mxu0 0.0
  %106 = vmatpush2.msra.mxu0 0.0
  %107 = vmatprep.subr.mxu0 0.0
  %108 = vmatpush2.msra.mxu0 0.0
  %109 = vmatprep.subr.mxu0 0.0
  %110 = vmatpush2.msra.mxu0 0.0
  %111 = vmatprep.subr.mxu0 0.0
  %112 = vmatpush2.msra.mxu0 0.0
  %113 = vmatprep.subr.mxu0 0.0
  %114 = vmatpush2.msra.mxu0 0.0
  %115 = vmatprep.subr.mxu0 0.0
  %116 = vmatpush2.msra.mxu0 0.0
  %117 = vmatprep.mubr.f32.mxu0 0.0
  %118 = vmatmul.mubr.f32.gmra.mxu0 %v48
  %v119 = vpop.f32.mrf.mxu0
  %v120 = vadd.f32 %v44, %v119
  %v121 = vpop.f32.mrf.mxu0
  %122 = vmatprep.mubr.f32.mxu0 0.0
  %123 = vmatmul.mubr.f32.gmra.mxu0 %v51
  %v124 = vpop.f32.mrf.mxu0
  %v125 = vadd.f32 %v44, %v124
  %v126 = vpop.f32.mrf.mxu0
  %127 = vdwg.mxu0
  %v128 = vmax.f32 %v120, 0.0
  %v129 = vmax.f32 %v125, 0.0
  %v130 = vld [vmem:[#allocation2] sm:$0xff]
  %v131 = vld [vmem:[#allocation2 + $0x8] sm:$0xff]
  %v132 = vld [vmem:[%s3] sm:$0xff]
  %v133 = vld [vmem:[%s3 + $0x8] sm:$0xff]
  %v134 = vld [vmem:[%s3 + $0x10] sm:$0xff]
  %v135 = vld [vmem:[%s3 + $0x18] sm:$0xff]
  %v136 = vld [vmem:[%s3 + $0x20] sm:$0xff]
  %v137 = vld [vmem:[%s3 + $0x28] sm:$0xff]
  %v138 = vld [vmem:[%s3 + $0x30] sm:$0xff]
  %v139 = vld [vmem:[%s3 + $0x38] sm:$0xff]
  %vm140 = vcmask 523264
  %v142 = vsel %vm140, %v128, 0
  %v145 = vsel %vm140, %v129, 0
  %147 = vmatprep.subr.mxu0 0.0
  %148 = vmatpush1.msra.mxu0 0.0
  %149 = vmatprep.subr.mxu0 0.0
  %150 = vmatpush1.msra.mxu0 0.0
  %151 = vmatprep.subr.mxu0 0.0
  %152 = vmatpush1.msra.mxu0 0.0
  %153 = vmatprep.subr.mxu0 0.0
  %154 = vmatpush1.msra.mxu0 0.0
  %155 = vmatprep.subr.mxu0 0.0
  %156 = vmatpush1.msra.mxu0 0.0
  %157 = vmatprep.subr.mxu0 0.0
  %158 = vmatpush1.msra.mxu0 0.0
  %159 = vmatprep.subr.mxu0 0.0
  %160 = vmatpush1.msra.mxu0 0.0
  %161 = vmatprep.subr.mxu0 0.0
  %162 = vmatpush1.msra.mxu0 0.0
  %163 = vmatprep.subr.mxu0 0.0
  %164 = vmatpush1.msra.mxu0 %v139
  %165 = vmatprep.subr.mxu0 0.0
  %166 = vmatpush1.msra.mxu0 %v138
  %167 = vmatprep.subr.mxu0 0.0
  %168 = vmatpush1.msra.mxu0 %v137
  %169 = vmatprep.subr.mxu0 0.0
  %170 = vmatpush1.msra.mxu0 %v136
  %171 = vmatprep.subr.mxu0 0.0
  %172 = vmatpush1.msra.mxu0 %v135
  %173 = vmatprep.subr.mxu0 0.0
  %174 = vmatpush1.msra.mxu0 %v134
  %175 = vmatprep.subr.mxu0 0.0
  %176 = vmatpush1.msra.mxu0 %v133
  %177 = vmatprep.subr.mxu0 0.0
  %178 = vmatpush1.msra.mxu0 %v132
  %179 = vmatprep.subr.mxu0 0.0
  %180 = vmatpush2.msra.mxu0 0.0
  %181 = vmatprep.subr.mxu0 0.0
  %182 = vmatpush2.msra.mxu0 0.0
  %183 = vmatprep.subr.mxu0 0.0
  %184 = vmatpush2.msra.mxu0 0.0
  %185 = vmatprep.subr.mxu0 0.0
  %186 = vmatpush2.msra.mxu0 0.0
  %187 = vmatprep.subr.mxu0 0.0
  %188 = vmatpush2.msra.mxu0 0.0
  %189 = vmatprep.subr.mxu0 0.0
  %190 = vmatpush2.msra.mxu0 0.0
  %191 = vmatprep.subr.mxu0 0.0
  %192 = vmatpush2.msra.mxu0 0.0
  %193 = vmatprep.subr.mxu0 0.0
  %194 = vmatpush2.msra.mxu0 0.0
  %195 = vmatprep.subr.mxu0 0.0
  %196 = vmatpush2.msra.mxu0 0.0
  %197 = vmatprep.subr.mxu0 0.0
  %198 = vmatpush2.msra.mxu0 0.0
  %199 = vmatprep.subr.mxu0 0.0
  %200 = vmatpush2.msra.mxu0 0.0
  %201 = vmatprep.subr.mxu0 0.0
  %202 = vmatpush2.msra.mxu0 0.0
  %203 = vmatprep.subr.mxu0 0.0
  %204 = vmatpush2.msra.mxu0 0.0
  %205 = vmatprep.subr.mxu0 0.0
  %206 = vmatpush2.msra.mxu0 0.0
  %207 = vmatprep.subr.mxu0 0.0
  %208 = vmatpush2.msra.mxu0 0.0
  %209 = vmatprep.subr.mxu0 0.0
  %210 = vmatpush2.msra.mxu0 0.0
  %211 = vmatprep.mubr.f32.mxu0 0.0
  %212 = vmatmul.mubr.f32.gmra.mxu0 %v142
  %v213 = vpop.f32.mrf.mxu0
  %v214 = vadd.f32 0.0, %v213
  %v215 = vpop.f32.mrf.mxu0
  %216 = vmatprep.mubr.f32.mxu0 0.0
  %217 = vmatmul.mubr.f32.gmra.mxu0 %v145
  %v218 = vpop.f32.mrf.mxu0
  %v219 = vadd.f32 0.0, %v218
  %v220 = vpop.f32.mrf.mxu0
  %221 = vdwg.mxu0
  %v222 = vadd.f32 %v130, %v214
  %v223 = vadd.f32 %v131, %v219
  %224 = vst.msk [vmem:[#allocation2] sm:$0xff] %vm46, %v222
  %225 = vst.msk [vmem:[#allocation2 + $0x8] sm:$0xff] %vm46, %v223
  // Predicated region
  $region34: #{fwd.3} parent=0 // pred_check
    %p226 = pneg %p26
  $region35: #{fwd.3} parent=0 // pred_check_branch
    %228 = sbr.rel (%p226) target = $region37
  $region36: #{fwd.3} parent=0 // pred_region
    %v229 = vld [vmem:[#allocation2] sm:$0xff]
    %v230 = vld [vmem:[#allocation2 + $0x8] sm:$0xff]
    %v231 = vld [vmem:[%s4] sm:$0x1]
    %v233 = vlaneseq
    %v234 = vshrl.u32 %v233, 7
    %v235 = vsub.s32 0, %v234
    %v236 = vrot.slane %v231, %v235
    %v238 = vadd.f32 %v229, %v236
    %v239 = vadd.f32 %v230, %v236
    %v240 = vld [vmem:[%s0] sm:$0xff]
    %v241 = vld [vmem:[%s0 + $0x8] sm:$0xff]
    %v242 = vadd.f32 %v238, %v240
    %v243 = vadd.f32 %v239, %v241
    %v244 = vsel %vm46, %v242, 0.0
    %245 = vadd.xlane.f32.xlu0 %v244
    %v246 = vpop.xlane.xlu0 %245
    %v247 = vsel %vm46, %v243, 0.0
    %248 = vadd.xlane.f32.xlu0 %v247
    %v249 = vpop.xlane.xlu0 %248
    %v250 = vrcp.pop 32.0
    %v251 = vmul.f32 %v246, %v250
    %v252 = vmul.f32 %v249, %v250
    %v253 = vsub.f32 %v242, %v251
    %v254 = vsub.f32 %v243, %v252
    %v255 = vmul.f32 %v253, %v253
    %v256 = vmul.f32 %v254, %v254
    %v257 = vsel %vm46, %v255, 0.0
    %258 = vadd.xlane.f32.xlu0 %v257
    %v259 = vpop.xlane.xlu0 %258
    %v260 = vsel %vm46, %v256, 0.0
    %261 = vadd.xlane.f32.xlu0 %v260
    %v262 = vpop.xlane.xlu0 %261
    %v263 = vmul.f32 %v259, %v250
    %v264 = vmul.f32 %v262, %v250
    %v265 = vadd.f32 %v263, 1e-05
    %v266 = vadd.f32 %v264, 1e-05
    %v267 = vrsqrt.pop %v265
    %v268 = vrsqrt.pop %v266
    %v269 = vmul.f32 %v253, %v267
    %v270 = vmul.f32 %v254, %v268
    %v271 = vld [vmem:[%s5] sm:$0x1]
    %v273 = vlaneseq
    %v274 = vshrl.u32 %v273, 7
    %v275 = vsub.s32 0, %v274
    %v276 = vrot.slane %v271, %v275
    %v278 = vmul.f32 %v269, %v276
    %v279 = vmul.f32 %v270, %v276
    %v280 = vld [vmem:[%s6] sm:$0x1]
    %v282 = vlaneseq
    %v283 = vshrl.u32 %v282, 7
    %v284 = vsub.s32 0, %v283
    %v285 = vrot.slane %v280, %v284
    %v287 = vadd.f32 %v278, %v285
    %v288 = vadd.f32 %v279, %v285
    %289 = vst.msk [vmem:[%s7] sm:$0xff] %vm46, %v287
    %290 = vst.msk [vmem:[%s7 + $0x8] sm:$0xff] %vm46, %v288
  $region37: #{fwd.3} parent=0 // pred_fallthru
    _
  // Predicated region
  $region38: #{fwd.3} parent=0 // pred_check
    _
  $region39: #{fwd.3} parent=0 // pred_check_branch
    %292 = sbr.rel (0) target = $region41
  $region40: #{fwd.3} parent=0 // pred_region
    _
  $region41: #{fwd.3} parent=0 // pred_fallthru
    _
  // Predicated region
  $region42: #{fwd.3} parent=0 // pred_check
    _
  $region43: #{fwd.3} parent=0 // pred_check_branch
    %294 = sbr.rel (0) target = $region45
  $region44: #{fwd.3} parent=0 // pred_region
    _
  $region45: #{fwd.3} parent=0 // pred_fallthru
    _

// kernel: fwd.2
$region0: #{fwd.2}
  #allocation0 [shape = 'u32[]', space=smem, size = 0x4, offset = 0x4, fixed_abs, tag = 'smem constant byte address 0x4 - core index']
  #allocation1 [shape = 'u32[144,128]{1,0:T(1,128)}', space=vmem, size = 0x12000, scoped, tag = 'internal scratch']
  #allocation2 [shape = 'f32[4,8,8]{2,1,0:T(8,128)}', space=vmem, size = 0x4000, scoped, tag = 'scratch operand']
  #allocation3 [shape = 'f32[4,8,1]{2,1,0:T(8,128)}', space=vmem, size = 0x4000, scoped, tag = 'scratch operand']
  #allocation4 [shape = 'f32[4,8,1]{2,1,0:T(8,128)}', space=vmem, size = 0x4000, scoped, tag = 'scratch operand']
  #allocation5 [shape = 'f32[4,8,8]{2,1,0:T(8,128)}', space=vmem, size = 0x4000, scoped, tag = 'scratch operand']
  %s0 = inlined_call_operand.vmem [shape: f32[2,8,32], index: 0, kind: input, shape index: {}]
  %s1 = inlined_call_operand.vmem [shape: f32[2,8,32], index: 1, kind: input, shape index: {}, may-alias: {1,3}]
  %s2 = inlined_call_operand.vmem [shape: f32[2,8,32], index: 2, kind: input, shape index: {}]
  %s3 = inlined_call_operand.vmem [shape: f32[2,8,32], index: 3, kind: input, shape index: {}, may-alias: {1,3}]
  %s4 = inlined_call_operand.vmem [shape: f32[2,8], index: 4, kind: input, shape index: {}, may-alias: {4,5,6}]
  %s5 = inlined_call_operand.vmem [shape: f32[2,8], index: 5, kind: input, shape index: {}, may-alias: {4,5,6}]
  %s6 = inlined_call_operand.vmem [shape: f32[2,1,8], index: 6, kind: input, shape index: {}, may-alias: {4,5,6}]
  %s7 = inlined_call_operand.vmem [shape: f32[32,32], index: 7, kind: input, shape index: {}]
  %s8 = inlined_call_operand.vmem [shape: f32[32,32], index: 8, kind: input, shape index: {}]
  %s9 = inlined_call_operand.vmem [shape: f32[32,32], index: 9, kind: input, shape index: {}]
  %s10 = inlined_call_operand.vmem [shape: f32[1,32], index: 10, kind: input, shape index: {}, may-alias: {10,11,12,14,16}]
  %s11 = inlined_call_operand.vmem [shape: f32[1,32], index: 11, kind: input, shape index: {}, may-alias: {10,11,12,14,16}]
  %s12 = inlined_call_operand.vmem [shape: f32[1,32], index: 12, kind: input, shape index: {}, may-alias: {10,11,12,14,16}]
  %s13 = inlined_call_operand.hbm [shape: f32[32,32], index: 13, kind: input, shape index: {}]
  %s14 = inlined_call_operand.vmem [shape: f32[1,32], index: 14, kind: input, shape index: {}, may-alias: {10,11,12,14,16}]
  %s15 = inlined_call_operand.vmem [shape: f32[1,32], index: 15, kind: input, shape index: {}]
  %s16 = inlined_call_operand.vmem [shape: f32[1,32], index: 16, kind: input, shape index: {}, may-alias: {10,11,12,14,16}]
  %s17 = inlined_call_operand.vmem [shape: f32[2,8,32], index: 17, kind: output, shape index: {}]
  %s18 = sld [smem:[#allocation0]]
  $region113: #{fwd.2} parent=0
    _
  %s20 = ssub.s32 1, %s18
  %s21 = scalar_select 0, %s20, %s18
  $region1: #{fwd.2} parent=0
    #allocation6 [shape = 'u8[16384]{0}', space=vmem, size = 0x4000, scoped, tag = 'input window, operand 13, single buffered']
    #allocation7 [shape = 's32[2]{0}', space=sflag, size = 0x8, scoped, tag = 'scoped memory for fwd.2']
    %22 = vsyncpa [#allocation7], 0
    loop: start=0, step=1, limit=4
    $region2: #{fwd.2} parent=1 // loop_pre_header
      _
    $region3: #{fwd.2} parent=1 // loop_header
      %s24 = sphi 0, %s28
      %p25 = scmp.ge.s32.totalorder %s24, 4
      %s31 = sphi 0, %s50
      %s32 = sphi 0, %s46
      %s33 = sphi 0, %s42
      %s34 = sphi 0, %s31
      %s35 = sphi 0, %s32
      %s36 = sphi 0, %s33
      %s37 = sphi 0, %s34
      %s38 = sphi 0, %s35
      %s39 = sphi 0, %s36
      %s55 = sphi 0, %s57
      %s58 = sphi 0, %s55
      %s59 = sphi 0, %s58
      %s75 = sphi 0, %s59
      %s83 = sphi 0, %s85
      %s86 = sphi 0, %s83
      %s87 = sphi 0, %s86
      %s103 = sphi 0, %s87
      %s111 = sphi 0, %s113
      %s114 = sphi 0, %s111
      %s115 = sphi 0, %s114
      %s131 = sphi 0, %s115
      %s139 = sphi 0, %s141
      %s142 = sphi 0, %s139
      %s143 = sphi 0, %s142
      %s159 = sphi 0, %s143
      %s165 = sphi 0, %s167
      %s168 = sphi 0, %s165
      %s169 = sphi 0, %s168
      %s185 = sphi 0, %s169
      %s191 = sphi 0, %s193
      %s194 = sphi 0, %s191
      %s195 = sphi 0, %s194
      %s211 = sphi 0, %s195
      %s219 = sphi 0, %s221
      %s222 = sphi 0, %s219
      %s223 = sphi 0, %s222
      %s239 = sphi 0, %s223
      %s243 = sphi 0, %s243
      %s245 = sphi 0, %s243
      %s246 = sphi 0, %s245
      %s260 = sphi 0, %s246
      %s264 = sphi 0, %s264
      %s266 = sphi 0, %s264
      %s267 = sphi 0, %s266
      %s281 = sphi 0, %s267
      %s285 = sphi 0, %s285
      %s287 = sphi 0, %s285
      %s288 = sphi 0, %s287
      %s302 = sphi 0, %s288
      %s306 = sphi 0, %s306
      %s308 = sphi 0, %s306
      %s309 = sphi 0, %s308
      %s323 = sphi 0, %s309
      %s327 = sphi 0, %s327
      %s329 = sphi 0, %s327
      %s330 = sphi 0, %s329
      %s344 = sphi 0, %s330
      %s348 = sphi 0, %s348
      %s350 = sphi 0, %s348
      %s351 = sphi 0, %s350
      %s365 = sphi 0, %s351
      %s369 = sphi 0, %s369
      %s371 = sphi 0, %s369
      %s372 = sphi 0, %s371
      %s386 = sphi 0, %s372
      %s390 = sphi 0, %s390
      %s392 = sphi 0, %s390
      %s393 = sphi 0, %s392
      %s407 = sphi 0, %s393
      %s411 = sphi 0, %s411
      %s413 = sphi 0, %s411
      %s414 = sphi 0, %s413
      %s428 = sphi 0, %s414
      %s432 = sphi 0, %s432
      %s434 = sphi 0, %s432
      %s435 = sphi 0, %s434
      %s449 = sphi 0, %s435
      %s457 = sphi 0, %s459
      %s460 = sphi 0, %s457
      %s461 = sphi 0, %s460
      %s477 = sphi 0, %s461
    $region4: #{fwd.2} parent=1 // loop_header_branch
      %27 = sbr.rel (%p25) target = $region8
    $region5: #{fwd.2} parent=1 // loop_body
      %s29 = ssub.s32 %s24, 1
      %s30 = ssub.s32 %s24, 2
      %s40 = sadd.s32 1, %s33
      %p41 = scmp.ge.s32.totalorder %s40, 1
      %s42 = scalar_select %p41, 0, %s40
      %s43 = sadd.s32 1, %s32
      %s44 = scalar_select %p41, %s43, %s32
      %p45 = scmp.ge.s32.totalorder %s44, 1
      %s46 = scalar_select %p45, 0, %s44
      %s47 = sadd.s32 1, %s31
      %s48 = scalar_select %p45, %s47, %s31
      %p49 = scmp.ge.s32.totalorder %s48, 2
      %s50 = scalar_select %p49, 0, %s48
      %s51 = ssub.s32 %s31, %s50
      %s52 = ssub.s32 %s32, %s46
      %s53 = sor.u32 %s51, %s52
      %p54 = scmp.eq.s32.totalorder %s53, 0
      %s56 = sadd.s32 %s55, 1
      %s57 = scalar_select %p54, %s55, %s56
      %p60 = pneg %p54
      %p61 = scmp.eq.s32.totalorder %s24, 1
      %p62 = por %p60, %p61
      %p63 = scmp.ne.s32.totalorder %s55, %s58
      %p64 = scmp.eq.s32.totalorder %s24, 0
      %p65 = por %p63, %p64
      %p66 = scmp.ne.s32.totalorder %s55, %s58
      %p67 = scmp.eq.s32.totalorder %s29, 1
      %p68 = por %p66, %p67
      %p69 = scmp.ne.s32.totalorder %s58, %s59
      %p70 = scmp.eq.s32.totalorder %s29, 0
      %p71 = por %p69, %p70
      %p72 = scmp.ne.s32.totalorder %s58, %s59
      %p73 = scmp.eq.s32.totalorder %s30, 1
      %p74 = por %p72, %p73
      %p76 = scmp.ne.s32.totalorder %s59, %s75
      %p77 = scmp.eq.s32.totalorder %s30, 0
      %p78 = por %p76, %p77
      %s79 = ssub.s32 %s31, %s50
      %s80 = ssub.s32 %s32, %s46
      %s81 = sor.u32 %s79, %s80
      %p82 = scmp.eq.s32.totalorder %s81, 0
      %s84 = sadd.s32 %s83, 1
      %s85 = scalar_select %p82, %s83, %s84
      %p88 = pneg %p82
      %p89 = scmp.eq.s32.totalorder %s24, 1
      %p90 = por %p88, %p89
      %p91 = scmp.ne.s32.totalorder %s83, %s86
      %p92 = scmp.eq.s32.totalorder %s24, 0
      %p93 = por %p91, %p92
      %p94 = scmp.ne.s32.totalorder %s83, %s86
      %p95 = scmp.eq.s32.totalorder %s29, 1
      %p96 = por %p94, %p95
      %p97 = scmp.ne.s32.totalorder %s86, %s87
      %p98 = scmp.eq.s32.totalorder %s29, 0
      %p99 = por %p97, %p98
      %p100 = scmp.ne.s32.totalorder %s86, %s87
      %p101 = scmp.eq.s32.totalorder %s30, 1
      %p102 = por %p100, %p101
      %p104 = scmp.ne.s32.totalorder %s87, %s103
      %p105 = scmp.eq.s32.totalorder %s30, 0
      %p106 = por %p104, %p105
      %s107 = ssub.s32 %s31, %s50
      %s108 = ssub.s32 %s33, %s42
      %s109 = sor.u32 %s107, %s108
      %p110 = scmp.eq.s32.totalorder %s109, 0
      %s112 = sadd.s32 %s111, 1
      %s113 = scalar_select %p110, %s111, %s112
      %p116 = pneg %p110
      %p117 = scmp.eq.s32.totalorder %s24, 1
      %p118 = por %p116, %p117
      %p119 = scmp.ne.s32.totalorder %s111, %s114
      %p120 = scmp.eq.s32.totalorder %s24, 0
      %p121 = por %p119, %p120
      %p122 = scmp.ne.s32.totalorder %s111, %s114
      %p123 = scmp.eq.s32.totalorder %s29, 1
      %p124 = por %p122, %p123
      %p125 = scmp.ne.s32.totalorder %s114, %s115
      %p126 = scmp.eq.s32.totalorder %s29, 0
      %p127 = por %p125, %p126
      %p128 = scmp.ne.s32.totalorder %s114, %s115
      %p129 = scmp.eq.s32.totalorder %s30, 1
      %p130 = por %p128, %p129
      %p132 = scmp.ne.s32.totalorder %s115, %s131
      %p133 = scmp.eq.s32.totalorder %s30, 0
      %p134 = por %p132, %p133
      %s135 = ssub.s32 %s31, %s50
      %s136 = ssub.s32 %s33, %s42
      %s137 = sor.u32 %s135, %s136
      %p138 = scmp.eq.s32.totalorder %s137, 0
      %s140 = sadd.s32 %s139, 1
      %s141 = scalar_select %p138, %s139, %s140
      %p144 = pneg %p138
      %p145 = scmp.eq.s32.totalorder %s24, 1
      %p146 = por %p144, %p145
      %p147 = scmp.ne.s32.totalorder %s139, %s142
      %p148 = scmp.eq.s32.totalorder %s24, 0
      %p149 = por %p147, %p148
      %p150 = scmp.ne.s32.totalorder %s139, %s142
      %p151 = scmp.eq.s32.totalorder %s29, 1
      %p152 = por %p150, %p151
      %p153 = scmp.ne.s32.totalorder %s142, %s143
      %p154 = scmp.eq.s32.totalorder %s29, 0
      %p155 = por %p153, %p154
      %p156 = scmp.ne.s32.totalorder %s142, %s143
      %p157 = scmp.eq.s32.totalorder %s30, 1
      %p158 = por %p156, %p157
      %p160 = scmp.ne.s32.totalorder %s143, %s159
      %p161 = scmp.eq.s32.totalorder %s30, 0
      %p162 = por %p160, %p161
      %s163 = ssub.s32 %s32, %s46
      %p164 = scmp.eq.s32.totalorder %s163, 0
      %s166 = sadd.s32 %s165, 1
      %s167 = scalar_select %p164, %s165, %s166
      %p170 = pneg %p164
      %p171 = scmp.eq.s32.totalorder %s24, 1
      %p172 = por %p170, %p171
      %p173 = scmp.ne.s32.totalorder %s165, %s168
      %p174 = scmp.eq.s32.totalorder %s24, 0
      %p175 = por %p173, %p174
      %p176 = scmp.ne.s32.totalorder %s165, %s168
      %p177 = scmp.eq.s32.totalorder %s29, 1
      %p178 = por %p176, %p177
      %p179 = scmp.ne.s32.totalorder %s168, %s169
      %p180 = scmp.eq.s32.totalorder %s29, 0
      %p181 = por %p179, %p180
      %p182 = scmp.ne.s32.totalorder %s168, %s169
      %p183 = scmp.eq.s32.totalorder %s30, 1
      %p184 = por %p182, %p183
      %p186 = scmp.ne.s32.totalorder %s169, %s185
      %p187 = scmp.eq.s32.totalorder %s30, 0
      %p188 = por %p186, %p187
      %s189 = ssub.s32 %s33, %s42
      %p190 = scmp.eq.s32.totalorder %s189, 0
      %s192 = sadd.s32 %s191, 1
      %s193 = scalar_select %p190, %s191, %s192
      %p196 = pneg %p190
      %p197 = scmp.eq.s32.totalorder %s24, 1
      %p198 = por %p196, %p197
      %p199 = scmp.ne.s32.totalorder %s191, %s194
      %p200 = scmp.eq.s32.totalorder %s24, 0
      %p201 = por %p199, %p200
      %p202 = scmp.ne.s32.totalorder %s191, %s194
      %p203 = scmp.eq.s32.totalorder %s29, 1
      %p204 = por %p202, %p203
      %p205 = scmp.ne.s32.totalorder %s194, %s195
      %p206 = scmp.eq.s32.totalorder %s29, 0
      %p207 = por %p205, %p206
      %p208 = scmp.ne.s32.totalorder %s194, %s195
      %p209 = scmp.eq.s32.totalorder %s30, 1
      %p210 = por %p208, %p209
      %p212 = scmp.ne.s32.totalorder %s195, %s211
      %p213 = scmp.eq.s32.totalorder %s30, 0
      %p214 = por %p212, %p213
      %s215 = ssub.s32 %s31, %s50
      %s216 = ssub.s32 %s33, %s42
      %s217 = sor.u32 %s215, %s216
      %p218 = scmp.eq.s32.totalorder %s217, 0
      %s220 = sadd.s32 %s219, 1
      %s221 = scalar_select %p218, %s219, %s220
      %p224 = pneg %p218
      %p225 = scmp.eq.s32.totalorder %s24, 1
      %p226 = por %p224, %p225
      %p227 = scmp.ne.s32.totalorder %s219, %s222
      %p228 = scmp.eq.s32.totalorder %s24, 0
      %p229 = por %p227, %p228
      %p230 = scmp.ne.s32.totalorder %s219, %s222
      %p231 = scmp.eq.s32.totalorder %s29, 1
      %p232 = por %p230, %p231
      %p233 = scmp.ne.s32.totalorder %s222, %s223
      %p234 = scmp.eq.s32.totalorder %s29, 0
      %p235 = por %p233, %p234
      %p236 = scmp.ne.s32.totalorder %s222, %s223
      %p237 = scmp.eq.s32.totalorder %s30, 1
      %p238 = por %p236, %p237
      %p240 = scmp.ne.s32.totalorder %s223, %s239
      %p241 = scmp.eq.s32.totalorder %s30, 0
      %p242 = por %p240, %p241
      %s244 = sadd.s32 %s243, 1
      %p247 = scmp.eq.s32.totalorder %s24, 1
      %p248 = scmp.ne.s32.totalorder %s243, %s245
      %p249 = scmp.eq.s32.totalorder %s24, 0
      %p250 = por %p248, %p249
      %p251 = scmp.ne.s32.totalorder %s243, %s245
      %p252 = scmp.eq.s32.totalorder %s29, 1
      %p253 = por %p251, %p252
      %p254 = scmp.ne.s32.totalorder %s245, %s246
      %p255 = scmp.eq.s32.totalorder %s29, 0
      %p256 = por %p254, %p255
      %p257 = scmp.ne.s32.totalorder %s245, %s246
      %p258 = scmp.eq.s32.totalorder %s30, 1
      %p259 = por %p257, %p258
      %p261 = scmp.ne.s32.totalorder %s246, %s260
      %p262 = scmp.eq.s32.totalorder %s30, 0
      %p263 = por %p261, %p262
      %s265 = sadd.s32 %s264, 1
      %p268 = scmp.eq.s32.totalorder %s24, 1
      %p269 = scmp.ne.s32.totalorder %s264, %s266
      %p270 = scmp.eq.s32.totalorder %s24, 0
      %p271 = por %p269, %p270
      %p272 = scmp.ne.s32.totalorder %s264, %s266
      %p273 = scmp.eq.s32.totalorder %s29, 1
      %p274 = por %p272, %p273
      %p275 = scmp.ne.s32.totalorder %s266, %s267
      %p276 = scmp.eq.s32.totalorder %s29, 0
      %p277 = por %p275, %p276
      %p278 = scmp.ne.s32.totalorder %s266, %s267
      %p279 = scmp.eq.s32.totalorder %s30, 1
      %p280 = por %p278, %p279
      %p282 = scmp.ne.s32.totalorder %s267, %s281
      %p283 = scmp.eq.s32.totalorder %s30, 0
      %p284 = por %p282, %p283
      %s286 = sadd.s32 %s285, 1
      %p289 = scmp.eq.s32.totalorder %s24, 1
      %p290 = scmp.ne.s32.totalorder %s285, %s287
      %p291 = scmp.eq.s32.totalorder %s24, 0
      %p292 = por %p290, %p291
      %p293 = scmp.ne.s32.totalorder %s285, %s287
      %p294 = scmp.eq.s32.totalorder %s29, 1
      %p295 = por %p293, %p294
      %p296 = scmp.ne.s32.totalorder %s287, %s288
      %p297 = scmp.eq.s32.totalorder %s29, 0
      %p298 = por %p296, %p297
      %p299 = scmp.ne.s32.totalorder %s287, %s288
      %p300 = scmp.eq.s32.totalorder %s30, 1
      %p301 = por %p299, %p300
      %p303 = scmp.ne.s32.totalorder %s288, %s302
      %p304 = scmp.eq.s32.totalorder %s30, 0
      %p305 = por %p303, %p304
      %s307 = sadd.s32 %s306, 1
      %p310 = scmp.eq.s32.totalorder %s24, 1
      %p311 = scmp.ne.s32.totalorder %s306, %s308
      %p312 = scmp.eq.s32.totalorder %s24, 0
      %p313 = por %p311, %p312
      %p314 = scmp.ne.s32.totalorder %s306, %s308
      %p315 = scmp.eq.s32.totalorder %s29, 1
      %p316 = por %p314, %p315
      %p317 = scmp.ne.s32.totalorder %s308, %s309
      %p318 = scmp.eq.s32.totalorder %s29, 0
      %p319 = por %p317, %p318
      %p320 = scmp.ne.s32.totalorder %s308, %s309
      %p321 = scmp.eq.s32.totalorder %s30, 1
      %p322 = por %p320, %p321
      %p324 = scmp.ne.s32.totalorder %s309, %s323
      %p325 = scmp.eq.s32.totalorder %s30, 0
      %p326 = por %p324, %p325
      %s328 = sadd.s32 %s327, 1
      %p331 = scmp.eq.s32.totalorder %s24, 1
      %p332 = scmp.ne.s32.totalorder %s327, %s329
      %p333 = scmp.eq.s32.totalorder %s24, 0
      %p334 = por %p332, %p333
      %p335 = scmp.ne.s32.totalorder %s327, %s329
      %p336 = scmp.eq.s32.totalorder %s29, 1
      %p337 = por %p335, %p336
      %p338 = scmp.ne.s32.totalorder %s329, %s330
      %p339 = scmp.eq.s32.totalorder %s29, 0
      %p340 = por %p338, %p339
      %p341 = scmp.ne.s32.totalorder %s329, %s330
      %p342 = scmp.eq.s32.totalorder %s30, 1
      %p343 = por %p341, %p342
      %p345 = scmp.ne.s32.totalorder %s330, %s344
      %p346 = scmp.eq.s32.totalorder %s30, 0
      %p347 = por %p345, %p346
      %s349 = sadd.s32 %s348, 1
      %p352 = scmp.eq.s32.totalorder %s24, 1
      %p353 = scmp.ne.s32.totalorder %s348, %s350
      %p354 = scmp.eq.s32.totalorder %s24, 0
      %p355 = por %p353, %p354
      %p356 = scmp.ne.s32.totalorder %s348, %s350
      %p357 = scmp.eq.s32.totalorder %s29, 1
      %p358 = por %p356, %p357
      %p359 = scmp.ne.s32.totalorder %s350, %s351
      %p360 = scmp.eq.s32.totalorder %s29, 0
      %p361 = por %p359, %p360
      %p362 = scmp.ne.s32.totalorder %s350, %s351
      %p363 = scmp.eq.s32.totalorder %s30, 1
      %p364 = por %p362, %p363
      %p366 = scmp.ne.s32.totalorder %s351, %s365
      %p367 = scmp.eq.s32.totalorder %s30, 0
      %p368 = por %p366, %p367
      %s370 = sadd.s32 %s369, 1
      %p373 = scmp.eq.s32.totalorder %s24, 1
      %p374 = scmp.ne.s32.totalorder %s369, %s371
      %p375 = scmp.eq.s32.totalorder %s24, 0
      %p376 = por %p374, %p375
      %p377 = scmp.ne.s32.totalorder %s369, %s371
      %p378 = scmp.eq.s32.totalorder %s29, 1
      %p379 = por %p377, %p378
      %p380 = scmp.ne.s32.totalorder %s371, %s372
      %p381 = scmp.eq.s32.totalorder %s29, 0
      %p382 = por %p380, %p381
      %p383 = scmp.ne.s32.totalorder %s371, %s372
      %p384 = scmp.eq.s32.totalorder %s30, 1
      %p385 = por %p383, %p384
      %p387 = scmp.ne.s32.totalorder %s372, %s386
      %p388 = scmp.eq.s32.totalorder %s30, 0
      %p389 = por %p387, %p388
      %s391 = sadd.s32 %s390, 1
      %p394 = scmp.eq.s32.totalorder %s24, 1
      %p395 = scmp.ne.s32.totalorder %s390, %s392
      %p396 = scmp.eq.s32.totalorder %s24, 0
      %p397 = por %p395, %p396
      %p398 = scmp.ne.s32.totalorder %s390, %s392
      %p399 = scmp.eq.s32.totalorder %s29, 1
      %p400 = por %p398, %p399
      %p401 = scmp.ne.s32.totalorder %s392, %s393
      %p402 = scmp.eq.s32.totalorder %s29, 0
      %p403 = por %p401, %p402
      %p404 = scmp.ne.s32.totalorder %s392, %s393
      %p405 = scmp.eq.s32.totalorder %s30, 1
      %p406 = por %p404, %p405
      %p408 = scmp.ne.s32.totalorder %s393, %s407
      %p409 = scmp.eq.s32.totalorder %s30, 0
      %p410 = por %p408, %p409
      %s412 = sadd.s32 %s411, 1
      %p415 = scmp.eq.s32.totalorder %s24, 1
      %p416 = scmp.ne.s32.totalorder %s411, %s413
      %p417 = scmp.eq.s32.totalorder %s24, 0
      %p418 = por %p416, %p417
      %p419 = scmp.ne.s32.totalorder %s411, %s413
      %p420 = scmp.eq.s32.totalorder %s29, 1
      %p421 = por %p419, %p420
      %p422 = scmp.ne.s32.totalorder %s413, %s414
      %p423 = scmp.eq.s32.totalorder %s29, 0
      %p424 = por %p422, %p423
      %p425 = scmp.ne.s32.totalorder %s413, %s414
      %p426 = scmp.eq.s32.totalorder %s30, 1
      %p427 = por %p425, %p426
      %p429 = scmp.ne.s32.totalorder %s414, %s428
      %p430 = scmp.eq.s32.totalorder %s30, 0
      %p431 = por %p429, %p430
      %s433 = sadd.s32 %s432, 1
      %p436 = scmp.eq.s32.totalorder %s24, 1
      %p437 = scmp.ne.s32.totalorder %s432, %s434
      %p438 = scmp.eq.s32.totalorder %s24, 0
      %p439 = por %p437, %p438
      %p440 = scmp.ne.s32.totalorder %s432, %s434
      %p441 = scmp.eq.s32.totalorder %s29, 1
      %p442 = por %p440, %p441
      %p443 = scmp.ne.s32.totalorder %s434, %s435
      %p444 = scmp.eq.s32.totalorder %s29, 0
      %p445 = por %p443, %p444
      %p446 = scmp.ne.s32.totalorder %s434, %s435
      %p447 = scmp.eq.s32.totalorder %s30, 1
      %p448 = por %p446, %p447
      %p450 = scmp.ne.s32.totalorder %s435, %s449
      %p451 = scmp.eq.s32.totalorder %s30, 0
      %p452 = por %p450, %p451
      %s453 = ssub.s32 %s31, %s50
      %s454 = ssub.s32 %s32, %s46
      %s455 = sor.u32 %s453, %s454
      %p456 = scmp.eq.s32.totalorder %s455, 0
      %s458 = sadd.s32 %s457, 1
      %s459 = scalar_select %p456, %s457, %s458
      %p462 = pneg %p456
      %p463 = scmp.eq.s32.totalorder %s24, 1
      %p464 = por %p462, %p463
      %p465 = scmp.ne.s32.totalorder %s457, %s460
      %p466 = scmp.eq.s32.totalorder %s24, 0
      %p467 = por %p465, %p466
      %p468 = scmp.ne.s32.totalorder %s457, %s460
      %p469 = scmp.eq.s32.totalorder %s29, 1
      %p470 = por %p468, %p469
      %p471 = scmp.ne.s32.totalorder %s460, %s461
      %p472 = scmp.eq.s32.totalorder %s29, 0
      %p473 = por %p471, %p472
      %p474 = scmp.ne.s32.totalorder %s460, %s461
      %p475 = scmp.eq.s32.totalorder %s30, 1
      %p476 = por %p474, %p475
      %p478 = scmp.ne.s32.totalorder %s461, %s477
      %p479 = scmp.eq.s32.totalorder %s30, 0
      %p480 = por %p478, %p479
      %p481 = scmp.le.s32.totalorder 1, %s24
      %p482 = scmp.lt.s32.totalorder %s24, 3
      %p483 = pnand %p481, %p482
      %p484 = pneg %p483
      // Predicated region
      $region9: #{fwd.2} parent=5 // pred_check
        _
      $region10: #{fwd.2} parent=5 // pred_check_branch
        %486 = sbr.rel (%p483) target = $region12
      $region11: #{fwd.2} parent=5 // pred_region
        %s487 = ssub.s32 %s24, 1
        // Predicated region
        $region13: #{fwd.2} parent=11 // pred_check
          %p488 = pneg %p181
        $region14: #{fwd.2} parent=11 // pred_check_branch
          %490 = sbr.rel (%p488) target = $region16
        $region15: #{fwd.2} parent=11 // pred_region
          %p491 = scmp.lt.s32.totalorder %s35, 0
          %s492 = scalar_select %p491, %s35, 0
          %s493 = smul.addr %s492, 2
          %s494 = scalar_lea.vmem %s4, %s493
        $region16: #{fwd.2} parent=11 // pred_fallthru
          _
        // Predicated region
        $region17: #{fwd.2} parent=11 // pred_check
          %p495 = pneg %p207
        $region18: #{fwd.2} parent=11 // pred_check_branch
          %497 = sbr.rel (%p495) target = $region20
        $region19: #{fwd.2} parent=11 // pred_region
          %p498 = scmp.lt.s32.totalorder %s36, 0
          %s499 = scalar_select %p498, %s36, 0
          %s500 = smul.addr %s499, 2
          %s501 = scalar_lea.vmem %s5, %s500
        $region20: #{fwd.2} parent=11 // pred_fallthru
          _
        // Predicated region
        $region21: #{fwd.2} parent=11 // pred_check
          %p502 = pneg %p256
        $region22: #{fwd.2} parent=11 // pred_check_branch
          %504 = sbr.rel (%p502) target = $region24
        $region23: #{fwd.2} parent=11 // pred_region
          _
        $region24: #{fwd.2} parent=11 // pred_fallthru
          _
        // Predicated region
        $region25: #{fwd.2} parent=11 // pred_check
          %p505 = pneg %p277
        $region26: #{fwd.2} parent=11 // pred_check_branch
          %507 = sbr.rel (%p505) target = $region28
        $region27: #{fwd.2} parent=11 // pred_region
          _
        $region28: #{fwd.2} parent=11 // pred_fallthru
          _
        // Predicated region
        $region29: #{fwd.2} parent=11 // pred_check
          %p508 = pneg %p298
        $region30: #{fwd.2} parent=11 // pred_check_branch
          %510 = sbr.rel (%p508) target = $region32
        $region31: #{fwd.2} parent=11 // pred_region
          _
        $region32: #{fwd.2} parent=11 // pred_fallthru
          _
        // Predicated region
        $region33: #{fwd.2} parent=11 // pred_check
          %p511 = pneg %p319
        $region34: #{fwd.2} parent=11 // pred_check_branch
          %513 = sbr.rel (%p511) target = $region36
        $region35: #{fwd.2} parent=11 // pred_region
          _
        $region36: #{fwd.2} parent=11 // pred_fallthru
          _
        // Predicated region
        $region37: #{fwd.2} parent=11 // pred_check
          %p514 = pneg %p340
        $region38: #{fwd.2} parent=11 // pred_check_branch
          %516 = sbr.rel (%p514) target = $region40
        $region39: #{fwd.2} parent=11 // pred_region
          _
        $region40: #{fwd.2} parent=11 // pred_fallthru
          _
        // Predicated region
        $region41: #{fwd.2} parent=11 // pred_check
          %p517 = pneg %p361
        $region42: #{fwd.2} parent=11 // pred_check_branch
          %519 = sbr.rel (%p517) target = $region44
        $region43: #{fwd.2} parent=11 // pred_region
          _
        $region44: #{fwd.2} parent=11 // pred_fallthru
          _
        // Predicated region
        $region45: #{fwd.2} parent=11 // pred_check
          %p520 = pneg %p382
        $region46: #{fwd.2} parent=11 // pred_check_branch
          %522 = sbr.rel (%p520) target = $region48
        $region47: #{fwd.2} parent=11 // pred_region
          %s524 = ssub.s32 512, 512
          %525 = vsyncadd [#allocation7], %s524
          %s526 = sshll.u32 [#allocation6], 4
          %s527 = int_to_ptr.vmem [resolvable:$true] %s526
          %532 = dma.hbm_to_vmem [thread:$0]  %s13, 512, %s527, [#allocation7], 128, 128, 8
        $region48: #{fwd.2} parent=11 // pred_fallthru
          _
        // Predicated region
        $region49: #{fwd.2} parent=11 // pred_check
          %p533 = pneg %p403
        $region50: #{fwd.2} parent=11 // pred_check_branch
          %535 = sbr.rel (%p533) target = $region52
        $region51: #{fwd.2} parent=11 // pred_region
          _
        $region52: #{fwd.2} parent=11 // pred_fallthru
          _
        // Predicated region
        $region53: #{fwd.2} parent=11 // pred_check
          %p536 = pneg %p424
        $region54: #{fwd.2} parent=11 // pred_check_branch
          %538 = sbr.rel (%p536) target = $region56
        $region55: #{fwd.2} parent=11 // pred_region
          _
        $region56: #{fwd.2} parent=11 // pred_fallthru
          _
        // Predicated region
        $region57: #{fwd.2} parent=11 // pred_check
          %p539 = pneg %p445
        $region58: #{fwd.2} parent=11 // pred_check_branch
          %541 = sbr.rel (%p539) target = $region60
        $region59: #{fwd.2} parent=11 // pred_region
          _
        $region60: #{fwd.2} parent=11 // pred_fallthru
          _
      $region12: #{fwd.2} parent=5 // pred_fallthru
        _
      %p542 = scmp.lt.s32.totalorder %s24, 2
      // Predicated region
      $region61: #{fwd.2} parent=5 // pred_check
        %p543 = pneg %p542
      $region62: #{fwd.2} parent=5 // pred_check_branch
        %545 = sbr.rel (%p543) target = $region64
      $region63: #{fwd.2} parent=5 // pred_region
        // Predicated region
        $region65: #{fwd.2} parent=63 // pred_check
          %p546 = pneg %p65
        $region66: #{fwd.2} parent=63 // pred_check_branch
          %548 = sbr.rel (%p546) target = $region68
        $region67: #{fwd.2} parent=63 // pred_region
          %p549 = scmp.lt.s32.totalorder %s31, 1
          %s550 = scalar_select %p549, %s31, 1
          %p551 = scmp.lt.s32.totalorder %s32, 0
          %s552 = scalar_select %p551, %s32, 0
          %s553 = sadd.s32 %s552, %s550
          %s554 = smul.addr %s553, 8
          %s555 = scalar_lea.vmem %s0, %s554
        $region68: #{fwd.2} parent=63 // pred_fallthru
          _
        // Predicated region
        $region69: #{fwd.2} parent=63 // pred_check
          %p556 = pneg %p93
        $region70: #{fwd.2} parent=63 // pred_check_branch
          %558 = sbr.rel (%p556) target = $region72
        $region71: #{fwd.2} parent=63 // pred_region
          %p559 = scmp.lt.s32.totalorder %s31, 1
          %s560 = scalar_select %p559, %s31, 1
          %p561 = scmp.lt.s32.totalorder %s32, 0
          %s562 = scalar_select %p561, %s32, 0
          %s563 = sadd.s32 %s562, %s560
          %s564 = smul.addr %s563, 8
          %s565 = scalar_lea.vmem %s1, %s564
        $region72: #{fwd.2} parent=63 // pred_fallthru
          _
        // Predicated region
        $region73: #{fwd.2} parent=63 // pred_check
          %p566 = pneg %p121
        $region74: #{fwd.2} parent=63 // pred_check_branch
          %568 = sbr.rel (%p566) target = $region76
        $region75: #{fwd.2} parent=63 // pred_region
          %p569 = scmp.lt.s32.totalorder %s31, 1
          %s570 = scalar_select %p569, %s31, 1
          %p571 = scmp.lt.s32.totalorder %s33, 0
          %s572 = scalar_select %p571, %s33, 0
          %s573 = sadd.s32 %s572, %s570
          %s574 = smul.addr %s573, 8
          %s575 = scalar_lea.vmem %s2, %s574
        $region76: #{fwd.2} parent=63 // pred_fallthru
          _
        // Predicated region
        $region77: #{fwd.2} parent=63 // pred_check
          %p576 = pneg %p149
        $region78: #{fwd.2} parent=63 // pred_check_branch
          %578 = sbr.rel (%p576) target = $region80
        $region79: #{fwd.2} parent=63 // pred_region
          %p579 = scmp.lt.s32.totalorder %s31, 1
          %s580 = scalar_select %p579, %s31, 1
          %p581 = scmp.lt.s32.totalorder %s33, 0
          %s582 = scalar_select %p581, %s33, 0
          %s583 = sadd.s32 %s582, %s580
          %s584 = smul.addr %s583, 8
          %s585 = scalar_lea.vmem %s3, %s584
        $region80: #{fwd.2} parent=63 // pred_fallthru
          _
        // Predicated region
        $region81: #{fwd.2} parent=63 // pred_check
          %p586 = pneg %p229
        $region82: #{fwd.2} parent=63 // pred_check_branch
          %588 = sbr.rel (%p586) target = $region84
        $region83: #{fwd.2} parent=63 // pred_region
          %p589 = scmp.lt.s32.totalorder %s31, 1
          %s590 = scalar_select %p589, %s31, 1
          %p591 = scmp.lt.s32.totalorder %s33, 0
          %s592 = scalar_select %p591, %s33, 0
          %s593 = sadd.s32 %s592, %s590
          %s594 = scalar_lea.vmem %s6, %s593
        $region84: #{fwd.2} parent=63 // pred_fallthru
          _
      $region64: #{fwd.2} parent=5 // pred_fallthru
        _
      %p595 = scmp.le.s32.totalorder 1, %s24
      %p596 = scmp.lt.s32.totalorder %s24, 3
      %p597 = pnand %p595, %p596
      %p598 = pneg %p597
      // Predicated region
      $region85: #{fwd.2} parent=5 // pred_check
        _
      $region86: #{fwd.2} parent=5 // pred_check_branch
        %600 = sbr.rel (%p597) target = $region88
      $region87: #{fwd.2} parent=5 // pred_region
        %s601 = ssub.s32 %s24, 1
        // Predicated region
        $region89: #{fwd.2} parent=87 // pred_check
          %p602 = pneg %p382
        $region90: #{fwd.2} parent=87 // pred_check_branch
          %604 = sbr.rel (%p602) target = $region92
        $region91: #{fwd.2} parent=87 // pred_region
          %605 = dma.done [#allocation7], 512
        $region92: #{fwd.2} parent=87 // pred_fallthru
          _
        %p606 = scmp.lt.s32.totalorder %s34, 1
        %s607 = scalar_select %p606, %s34, 1
        %p608 = scmp.lt.s32.totalorder %s35, 0
        %s609 = scalar_select %p608, %s35, 0
        %s610 = sadd.s32 %s609, %s607
        %s611 = smul.addr %s610, 8
        %s612 = scalar_lea.vmem %s0, %s611
        %p613 = pneg %p71
        %p614 = pneg %p68
        %p615 = scmp.lt.s32.totalorder %s34, 1
        %s616 = scalar_select %p615, %s34, 1
        %p617 = scmp.lt.s32.totalorder %s35, 0
        %s618 = scalar_select %p617, %s35, 0
        %s619 = sadd.s32 %s618, %s616
        %s620 = smul.addr %s619, 8
        %s621 = scalar_lea.vmem %s1, %s620
        %p622 = pneg %p99
        %p623 = pneg %p96
        %p624 = scmp.lt.s32.totalorder %s34, 1
        %s625 = scalar_select %p624, %s34, 1
        %p626 = scmp.lt.s32.totalorder %s36, 0
        %s627 = scalar_select %p626, %s36, 0
        %s628 = sadd.s32 %s627, %s625
        %s629 = smul.addr %s628, 8
        %s630 = scalar_lea.vmem %s2, %s629
        %p631 = pneg %p127
        %p632 = pneg %p124
        %p633 = scmp.lt.s32.totalorder %s34, 1
        %s634 = scalar_select %p633, %s34, 1
        %p635 = scmp.lt.s32.totalorder %s36, 0
        %s636 = scalar_select %p635, %s36, 0
        %s637 = sadd.s32 %s636, %s634
        %s638 = smul.addr %s637, 8
        %s639 = scalar_lea.vmem %s3, %s638
        %p640 = pneg %p155
        %p641 = pneg %p152
        %p642 = scmp.lt.s32.totalorder %s35, 0
        %s643 = scalar_select %p642, %s35, 0
        %s644 = smul.addr %s643, 2
        %s645 = scalar_lea.vmem %s4, %s644
        %p646 = pneg %p181
        %p647 = pneg %p178
        %p648 = scmp.lt.s32.totalorder %s36, 0
        %s649 = scalar_select %p648, %s36, 0
        %s650 = smul.addr %s649, 2
        %s651 = scalar_lea.vmem %s5, %s650
        %p652 = pneg %p207
        %p653 = pneg %p204
        %p654 = scmp.lt.s32.totalorder %s34, 1
        %s655 = scalar_select %p654, %s34, 1
        %p656 = scmp.lt.s32.totalorder %s36, 0
        %s657 = scalar_select %p656, %s36, 0
        %s658 = sadd.s32 %s657, %s655
        %s659 = scalar_lea.vmem %s6, %s658
        %p660 = pneg %p235
        %p661 = pneg %p232
        %p662 = pneg %p256
        %p663 = pneg %p253
        %p664 = pneg %p277
        %p665 = pneg %p274
        %p666 = pneg %p298
        %p667 = pneg %p295
        %p668 = pneg %p319
        %p669 = pneg %p316
        %p670 = pneg %p340
        %p671 = pneg %p337
        %p672 = pneg %p361
        %p673 = pneg %p358
        %p674 = pneg %p382
        %p675 = pneg %p379
        %p676 = pneg %p403
        %p677 = pneg %p400
        %p678 = pneg %p424
        %p679 = pneg %p421
        %p680 = pneg %p445
        %p681 = pneg %p442
        %p682 = pneg %p473
        %p683 = pneg %p470
        %p684 = scmp.lt.s32.totalorder %s34, 1
        %s685 = scalar_select %p684, %s34, 1
        %p686 = scmp.lt.s32.totalorder %s35, 0
        %s687 = scalar_select %p686, %s35, 0
        %s688 = sadd.s32 %s687, %s685
        %s689 = smul.addr %s688, 8
        %s690 = scalar_lea.vmem %s17, %s689
        %p691 = scmp.lt.s32.totalorder %s34, 1
        %s692 = scalar_select %p691, %s34, 1
        %p693 = scmp.lt.s32.totalorder %s35, 0
        %s694 = scalar_select %p693, %s35, 0
        %s695 = sadd.s32 %s694, %s692
        %s696 = smul.addr %s695, 8
        %s697 = scalar_lea.vmem %s0, %s696
        %p698 = scmp.lt.s32.totalorder %s34, 1
        %s699 = scalar_select %p698, %s34, 1
        %p700 = scmp.lt.s32.totalorder %s35, 0
        %s701 = scalar_select %p700, %s35, 0
        %s702 = sadd.s32 %s701, %s699
        %s703 = smul.addr %s702, 8
        %s704 = scalar_lea.vmem %s1, %s703
        %p705 = scmp.lt.s32.totalorder %s34, 1
        %s706 = scalar_select %p705, %s34, 1
        %p707 = scmp.lt.s32.totalorder %s36, 0
        %s708 = scalar_select %p707, %s36, 0
        %s709 = sadd.s32 %s708, %s706
        %s710 = smul.addr %s709, 8
        %s711 = scalar_lea.vmem %s2, %s710
        %p712 = scmp.lt.s32.totalorder %s34, 1
        %s713 = scalar_select %p712, %s34, 1
        %p714 = scmp.lt.s32.totalorder %s36, 0
        %s715 = scalar_select %p714, %s36, 0
        %s716 = sadd.s32 %s715, %s713
        %s717 = smul.addr %s716, 8
        %s718 = scalar_lea.vmem %s3, %s717
        %p719 = scmp.lt.s32.totalorder %s35, 0
        %s720 = scalar_select %p719, %s35, 0
        %s721 = smul.addr %s720, 2
        %s722 = scalar_lea.vmem %s4, %s721
        %p723 = scmp.lt.s32.totalorder %s36, 0
        %s724 = scalar_select %p723, %s36, 0
        %s725 = smul.addr %s724, 2
        %s726 = scalar_lea.vmem %s5, %s725
        %p727 = scmp.lt.s32.totalorder %s34, 1
        %s728 = scalar_select %p727, %s34, 1
        %p729 = scmp.lt.s32.totalorder %s36, 0
        %s730 = scalar_select %p729, %s36, 0
        %s731 = sadd.s32 %s730, %s728
        %s732 = scalar_lea.vmem %s6, %s731
        %p733 = scmp.lt.s32.totalorder %s34, 1
        %s734 = scalar_select %p733, %s34, 1
        %p735 = scmp.lt.s32.totalorder %s35, 0
        %s736 = scalar_select %p735, %s35, 0
        %s737 = sadd.s32 %s736, %s734
        %s738 = smul.addr %s737, 8
        %s739 = scalar_lea.vmem %s17, %s738
        %p740 = scmp.eq.s32.totalorder %s36, 0
        // Predicated region
        $region93: #{fwd.2} parent=87 // pred_check
          %p741 = pneg %p740
        $region94: #{fwd.2} parent=87 // pred_check_branch
          %743 = sbr.rel (%p741) target = $region96
        $region95: #{fwd.2} parent=87 // pred_region
          %v744 = vld [vmem:[%s697] sm:$0xff]
          %v745 = vld [vmem:[%s704] sm:$0xff]
          %v746 = vadd.f32 %v744, %v745
          %v747 = vld [vmem:[%s7] sm:$0xff]
          %v748 = vld [vmem:[%s7 + $0x8] sm:$0xff]
          %v749 = vld [vmem:[%s7 + $0x10] sm:$0xff]
          %v750 = vld [vmem:[%s7 + $0x18] sm:$0xff]
          %v751 = vld [vmem:[%s10] sm:$0x1]
          %v753 = vlaneseq
          %v754 = vshrl.u32 %v753, 7
          %v755 = vsub.s32 0, %v754
          %v756 = vrot.slane %v751, %v755
          %vm758 = vcmask 261120
          %v760 = vsel %vm758, %v746, 0
          %762 = vmatprep.subr.mxu0 0.0
          %763 = vmatpush1.msra.mxu0 0.0
          %764 = vmatprep.subr.mxu0 0.0
          %765 = vmatpush1.msra.mxu0 0.0
          %766 = vmatprep.subr.mxu0 0.0
          %767 = vmatpush1.msra.mxu0 0.0
          %768 = vmatprep.subr.mxu0 0.0
          %769 = vmatpush1.msra.mxu0 0.0
          %770 = vmatprep.subr.mxu0 0.0
          %771 = vmatpush1.msra.mxu0 0.0
          %772 = vmatprep.subr.mxu0 0.0
          %773 = vmatpush1.msra.mxu0 0.0
          %774 = vmatprep.subr.mxu0 0.0
          %775 = vmatpush1.msra.mxu0 0.0
          %776 = vmatprep.subr.mxu0 0.0
          %777 = vmatpush1.msra.mxu0 0.0
          %778 = vmatprep.subr.mxu0 0.0
          %779 = vmatpush1.msra.mxu0 0.0
          %780 = vmatprep.subr.mxu0 0.0
          %781 = vmatpush1.msra.mxu0 0.0
          %782 = vmatprep.subr.mxu0 0.0
          %783 = vmatpush1.msra.mxu0 0.0
          %784 = vmatprep.subr.mxu0 0.0
          %785 = vmatpush1.msra.mxu0 0.0
          %786 = vmatprep.subr.mxu0 0.0
          %787 = vmatpush1.msra.mxu0 %v750
          %788 = vmatprep.subr.mxu0 0.0
          %789 = vmatpush1.msra.mxu0 %v749
          %790 = vmatprep.subr.mxu0 0.0
          %791 = vmatpush1.msra.mxu0 %v748
          %792 = vmatprep.subr.mxu0 0.0
          %793 = vmatpush1.msra.mxu0 %v747
          %794 = vmatprep.subr.mxu0 0.0
          %795 = vmatpush2.msra.mxu0 0.0
          %796 = vmatprep.subr.mxu0 0.0
          %797 = vmatpush2.msra.mxu0 0.0
          %798 = vmatprep.subr.mxu0 0.0
          %799 = vmatpush2.msra.mxu0 0.0
          %800 = vmatprep.subr.mxu0 0.0
          %801 = vmatpush2.msra.mxu0 0.0
          %802 = vmatprep.subr.mxu0 0.0
          %803 = vmatpush2.msra.mxu0 0.0
          %804 = vmatprep.subr.mxu0 0.0
          %805 = vmatpush2.msra.mxu0 0.0
          %806 = vmatprep.subr.mxu0 0.0
          %807 = vmatpush2.msra.mxu0 0.0
          %808 = vmatprep.subr.mxu0 0.0
          %809 = vmatpush2.msra.mxu0 0.0
          %810 = vmatprep.subr.mxu0 0.0
          %811 = vmatpush2.msra.mxu0 0.0
          %812 = vmatprep.subr.mxu0 0.0
          %813 = vmatpush2.msra.mxu0 0.0
          %814 = vmatprep.subr.mxu0 0.0
          %815 = vmatpush2.msra.mxu0 0.0
          %816 = vmatprep.subr.mxu0 0.0
          %817 = vmatpush2.msra.mxu0 0.0
          %818 = vmatprep.subr.mxu0 0.0
          %819 = vmatpush2.msra.mxu0 0.0
          %820 = vmatprep.subr.mxu0 0.0
          %821 = vmatpush2.msra.mxu0 0.0
          %822 = vmatprep.subr.mxu0 0.0
          %823 = vmatpush2.msra.mxu0 0.0
          %824 = vmatprep.subr.mxu0 0.0
          %825 = vmatpush2.msra.mxu0 0.0
          %826 = vmatprep.mubr.f32.mxu0 0.0
          %827 = vmatmul.mubr.f32.gmra.mxu0 %v760
          %v828 = vpop.f32.mrf.mxu0
          %v829 = vadd.f32 %v756, %v828
          %v830 = vpop.f32.mrf.mxu0
          %831 = vdwg.mxu0
          %833 = vrot.lane.b32.xlu0 %v829, 120
          %v834 = vpop.permute.xlu0 %833
          %836 = vrot.lane.b32.xlu0 %v829, 112
          %v837 = vpop.permute.xlu0 %836
          %839 = vrot.lane.b32.xlu0 %v829, 104
          %v840 = vpop.permute.xlu0 %839
          %vm842 = vcmask 64512
          %843 = vst.msk [vmem:[#allocation2] sm:$0xff] %vm842, %v829
          %844 = vst.msk [vmem:[#allocation2 + $0x8] sm:$0xff] %vm842, %v834
          %845 = vst.msk [vmem:[#allocation2 + $0x10] sm:$0xff] %vm842, %v837
          %846 = vst.msk [vmem:[#allocation2 + $0x18] sm:$0xff] %vm842, %v840
          %vm847 = vcmask 7168
          %848 = vst.msk [vmem:[#allocation3] sm:$0xff] %vm847, -1e+30
          %849 = vst.msk [vmem:[#allocation3 + $0x8] sm:$0xff] %vm847, -1e+30
          %850 = vst.msk [vmem:[#allocation3 + $0x10] sm:$0xff] %vm847, -1e+30
          %851 = vst.msk [vmem:[#allocation3 + $0x18] sm:$0xff] %vm847, -1e+30
          %852 = vst.msk [vmem:[#allocation4] sm:$0xff] %vm847, 0.0
          %853 = vst.msk [vmem:[#allocation4 + $0x8] sm:$0xff] %vm847, 0.0
          %854 = vst.msk [vmem:[#allocation4 + $0x10] sm:$0xff] %vm847, 0.0
          %855 = vst.msk [vmem:[#allocation4 + $0x18] sm:$0xff] %vm847, 0.0
          %856 = vst.msk [vmem:[#allocation5] sm:$0xff] %vm842, 0.0
          %857 = vst.msk [vmem:[#allocation5 + $0x8] sm:$0xff] %vm842, 0.0
          %858 = vst.msk [vmem:[#allocation5 + $0x10] sm:$0xff] %vm842, 0.0
          %859 = vst.msk [vmem:[#allocation5 + $0x18] sm:$0xff] %vm842, 0.0
        $region96: #{fwd.2} parent=87 // pred_fallthru
          _
        %v860 = vld [vmem:[%s711] sm:$0xff]
        %v861 = vld [vmem:[%s718] sm:$0xff]
        %v862 = vadd.f32 %v860, %v861
        %v863 = vld [vmem:[%s8] sm:$0xff]
        %v864 = vld [vmem:[%s8 + $0x8] sm:$0xff]
        %v865 = vld [vmem:[%s8 + $0x10] sm:$0xff]
        %v866 = vld [vmem:[%s8 + $0x18] sm:$0xff]
        %v867 = vld [vmem:[%s11] sm:$0x1]
        %v869 = vlaneseq
        %v870 = vshrl.u32 %v869, 7
        %v871 = vsub.s32 0, %v870
        %v872 = vrot.slane %v867, %v871
        %vm874 = vcmask 261120
        %v876 = vsel %vm874, %v862, 0
        %878 = vmatprep.subr.mxu0 0.0
        %879 = vmatpush1.msra.mxu0 0.0
        %880 = vmatprep.subr.mxu0 0.0
        %881 = vmatpush1.msra.mxu0 0.0
        %882 = vmatprep.subr.mxu0 0.0
        %883 = vmatpush1.msra.mxu0 0.0
        %884 = vmatprep.subr.mxu0 0.0
        %885 = vmatpush1.msra.mxu0 0.0
        %886 = vmatprep.subr.mxu0 0.0
        %887 = vmatpush1.msra.mxu0 0.0
        %888 = vmatprep.subr.mxu0 0.0
        %889 = vmatpush1.msra.mxu0 0.0
        %890 = vmatprep.subr.mxu0 0.0
        %891 = vmatpush1.msra.mxu0 0.0
        %892 = vmatprep.subr.mxu0 0.0
        %893 = vmatpush1.msra.mxu0 0.0
        %894 = vmatprep.subr.mxu0 0.0
        %895 = vmatpush1.msra.mxu0 0.0
        %896 = vmatprep.subr.mxu0 0.0
        %897 = vmatpush1.msra.mxu0 0.0
        %898 = vmatprep.subr.mxu0 0.0
        %899 = vmatpush1.msra.mxu0 0.0
        %900 = vmatprep.subr.mxu0 0.0
        %901 = vmatpush1.msra.mxu0 0.0
        %902 = vmatprep.subr.mxu0 0.0
        %903 = vmatpush1.msra.mxu0 %v866
        %904 = vmatprep.subr.mxu0 0.0
        %905 = vmatpush1.msra.mxu0 %v865
        %906 = vmatprep.subr.mxu0 0.0
        %907 = vmatpush1.msra.mxu0 %v864
        %908 = vmatprep.subr.mxu0 0.0
        %909 = vmatpush1.msra.mxu0 %v863
        %910 = vmatprep.subr.mxu0 0.0
        %911 = vmatpush2.msra.mxu0 0.0
        %912 = vmatprep.subr.mxu0 0.0
        %913 = vmatpush2.msra.mxu0 0.0
        %914 = vmatprep.subr.mxu0 0.0
        %915 = vmatpush2.msra.mxu0 0.0
        %916 = vmatprep.subr.mxu0 0.0
        %917 = vmatpush2.msra.mxu0 0.0
        %918 = vmatprep.subr.mxu0 0.0
        %919 = vmatpush2.msra.mxu0 0.0
        %920 = vmatprep.subr.mxu0 0.0
        %921 = vmatpush2.msra.mxu0 0.0
        %922 = vmatprep.subr.mxu0 0.0
        %923 = vmatpush2.msra.mxu0 0.0
        %924 = vmatprep.subr.mxu0 0.0
        %925 = vmatpush2.msra.mxu0 0.0
        %926 = vmatprep.subr.mxu0 0.0
        %927 = vmatpush2.msra.mxu0 0.0
        %928 = vmatprep.subr.mxu0 0.0
        %929 = vmatpush2.msra.mxu0 0.0
        %930 = vmatprep.subr.mxu0 0.0
        %931 = vmatpush2.msra.mxu0 0.0
        %932 = vmatprep.subr.mxu0 0.0
        %933 = vmatpush2.msra.mxu0 0.0
        %934 = vmatprep.subr.mxu0 0.0
        %935 = vmatpush2.msra.mxu0 0.0
        %936 = vmatprep.subr.mxu0 0.0
        %937 = vmatpush2.msra.mxu0 0.0
        %938 = vmatprep.subr.mxu0 0.0
        %939 = vmatpush2.msra.mxu0 0.0
        %940 = vmatprep.subr.mxu0 0.0
        %941 = vmatpush2.msra.mxu0 0.0
        %942 = vmatprep.mubr.f32.mxu0 0.0
        %943 = vmatmul.mubr.f32.gmra.mxu0 %v876
        %v944 = vpop.f32.mrf.mxu0
        %v945 = vadd.f32 %v872, %v944
        %v946 = vpop.f32.mrf.mxu0
        %947 = vdwg.mxu0
        %v948 = vld [vmem:[%s9] sm:$0xff]
        %v949 = vld [vmem:[%s9 + $0x8] sm:$0xff]
        %v950 = vld [vmem:[%s9 + $0x10] sm:$0xff]
        %v951 = vld [vmem:[%s9 + $0x18] sm:$0xff]
        %v952 = vld [vmem:[%s12] sm:$0x1]
        %v954 = vlaneseq
        %v955 = vshrl.u32 %v954, 7
        %v956 = vsub.s32 0, %v955
        %v957 = vrot.slane %v952, %v956
        %v960 = vsel %vm874, %v860, 0
        %962 = vmatprep.subr.mxu0 0.0
        %963 = vmatpush1.msra.mxu0 0.0
        %964 = vmatprep.subr.mxu0 0.0
        %965 = vmatpush1.msra.mxu0 0.0
        %966 = vmatprep.subr.mxu0 0.0
        %967 = vmatpush1.msra.mxu0 0.0
        %968 = vmatprep.subr.mxu0 0.0
        %969 = vmatpush1.msra.mxu0 0.0
        %970 = vmatprep.subr.mxu0 0.0
        %971 = vmatpush1.msra.mxu0 0.0
        %972 = vmatprep.subr.mxu0 0.0
        %973 = vmatpush1.msra.mxu0 0.0
        %974 = vmatprep.subr.mxu0 0.0
        %975 = vmatpush1.msra.mxu0 0.0
        %976 = vmatprep.subr.mxu0 0.0
        %977 = vmatpush1.msra.mxu0 0.0
        %978 = vmatprep.subr.mxu0 0.0
        %979 = vmatpush1.msra.mxu0 0.0
        %980 = vmatprep.subr.mxu0 0.0
        %981 = vmatpush1.msra.mxu0 0.0
        %982 = vmatprep.subr.mxu0 0.0
        %983 = vmatpush1.msra.mxu0 0.0
        %984 = vmatprep.subr.mxu0 0.0
        %985 = vmatpush1.msra.mxu0 0.0
        %986 = vmatprep.subr.mxu0 0.0
        %987 = vmatpush1.msra.mxu0 %v951
        %988 = vmatprep.subr.mxu0 0.0
        %989 = vmatpush1.msra.mxu0 %v950
        %990 = vmatprep.subr.mxu0 0.0
        %991 = vmatpush1.msra.mxu0 %v949
        %992 = vmatprep.subr.mxu0 0.0
        %993 = vmatpush1.msra.mxu0 %v948
        %994 = vmatprep.subr.mxu0 0.0
        %995 = vmatpush2.msra.mxu0 0.0
        %996 = vmatprep.subr.mxu0 0.0
        %997 = vmatpush2.msra.mxu0 0.0
        %998 = vmatprep.subr.mxu0 0.0
        %999 = vmatpush2.msra.mxu0 0.0
        %1000 = vmatprep.subr.mxu0 0.0
        %1001 = vmatpush2.msra.mxu0 0.0
        %1002 = vmatprep.subr.mxu0 0.0
        %1003 = vmatpush2.msra.mxu0 0.0
        %1004 = vmatprep.subr.mxu0 0.0
        %1005 = vmatpush2.msra.mxu0 0.0
        %1006 = vmatprep.subr.mxu0 0.0
        %1007 = vmatpush2.msra.mxu0 0.0
        %1008 = vmatprep.subr.mxu0 0.0
        %1009 = vmatpush2.msra.mxu0 0.0
        %1010 = vmatprep.subr.mxu0 0.0
        %1011 = vmatpush2.msra.mxu0 0.0
        %1012 = vmatprep.subr.mxu0 0.0
        %1013 = vmatpush2.msra.mxu0 0.0
        %1014 = vmatprep.subr.mxu0 0.0
        %1015 = vmatpush2.msra.mxu0 0.0
        %1016 = vmatprep.subr.mxu0 0.0
        %1017 = vmatpush2.msra.mxu0 0.0
        %1018 = vmatprep.subr.mxu0 0.0
        %1019 = vmatpush2.msra.mxu0 0.0
        %1020 = vmatprep.subr.mxu0 0.0
        %1021 = vmatpush2.msra.mxu0 0.0
        %1022 = vmatprep.subr.mxu0 0.0
        %1023 = vmatpush2.msra.mxu0 0.0
        %1024 = vmatprep.subr.mxu0 0.0
        %1025 = vmatpush2.msra.mxu0 0.0
        %1026 = vmatprep.mubr.f32.mxu0 0.0
        %1027 = vmatmul.mubr.f32.gmra.mxu0 %v960
        %v1028 = vpop.f32.mrf.mxu0
        %v1029 = vadd.f32 %v957, %v1028
        %v1030 = vpop.f32.mrf.mxu0
        %1031 = vdwg.mxu0
        %1033 = vrot.lane.b32.xlu0 %v945, 120
        %v1034 = vpop.permute.xlu0 %1033
        %1035 = vrot.lane.b32.xlu0 %v945, 112
        %v1036 = vpop.permute.xlu0 %1035
        %1037 = vrot.lane.b32.xlu0 %v945, 104
        %v1038 = vpop.permute.xlu0 %1037
        %1040 = vrot.lane.b32.xlu0 %v1029, 120
        %v1041 = vpop.permute.xlu0 %1040
        %1043 = vrot.lane.b32.xlu0 %v1029, 112
        %v1044 = vpop.permute.xlu0 %1043
        %1046 = vrot.lane.b32.xlu0 %v1029, 104
        %v1047 = vpop.permute.xlu0 %1046
        %v1049 = vld [vmem:[%s722] sm:$0x3]
        %v1050 = vld [vmem:[%s726] sm:$0x3]
        %v1051 = vlaneseq
        %v1052 = vshrl.u32 %v1051, 7
        %v1053 = vsub.s32 0, %v1052
        %v1054 = vrot.slane %v1049, %v1053
        %1056 = vbcast.lane.b32.xlu0 %v1054, 256
        %v1057 = vpop.permute.xlu0 %1056
        %v1058 = vlaneseq
        %v1059 = vshrl.u32 %v1058, 7
        %v1060 = vsub.s32 1, %v1059
        %v1061 = vrot.slane %v1049, %v1060
        %1063 = vbcast.lane.b32.xlu0 %v1061, 256
        %v1064 = vpop.permute.xlu0 %1063
        %v1067 = vunpack.c.l.s4 1966171168
        %v1068 = vunpack.c.0.s8 %v1067
        %v1069 = vlaneseq
        %v1070 = vshrl.u32 %v1069, 7
        %v1071 = vsub.s32 %v1068, %v1070
        %v1072 = vrot.slane %v1050, %v1071
        %v1073 = vcombine.high %v1072, %v1072
        %v1075 = vunpack.c.l.s4 1966171168
        %v1076 = vunpack.c.0.s8 %v1075
        %v1077 = vlaneseq
        %v1078 = vshrl.u32 %v1077, 7
        %v1079 = vsub.s32 %v1076, %v1078
        %v1080 = vrot.slane %v1072, %v1079
        %v1082 = vunpack.c.l.s4 1966171168
        %v1083 = vunpack.c.0.s8 %v1082
        %v1084 = vlaneseq
        %v1085 = vshrl.u32 %v1084, 7
        %v1086 = vsub.s32 %v1083, %v1085
        %v1087 = vrot.slane %v1073, %v1086
        %v1088 = vlaneseq
        %v1089 = vshrl.u32 %v1088, 7
        %v1090 = vsub.s32 0, %v1089
        %v1091 = vrot.slane %v1080, %v1090
        %v1092 = vlaneseq
        %v1093 = vshrl.u32 %v1092, 7
        %v1094 = vsub.s32 0, %v1093
        %v1095 = vrot.slane %v1087, %v1094
        %v1098 = vmul.f32 %v1057, %v1091
        %v1099 = vmul.f32 %v1064, %v1095
        %vm1100 = vcmask 64512
        %v1101 = vsel %vm1100, %v1098, -inf
        %v1102 = vsel %vm1100, %v1099, -inf
        %v1103 = vmax.f32 %v1101, %v1102
        %vm1104 = vcmp.gt.f32.partialorder %v1103, 0.0
        %v1105 = vld [vmem:[%s732] sm:$0x1]
        %vm1106 = vcmp.gt.f32.partialorder %v1105, 0.5
        %v1107 = vsel %vm1106, 1, 0
        %v1108 = vlaneseq
        %v1109 = vshrl.u32 %v1108, 7
        %v1110 = vsub.s32 0, %v1109
        %v1111 = vrot.slane %v1107, %v1110
        %vm1112 = vcmp.eq.s32.totalorder %v1111, 1
        %vm1113 = vmor %vm1104, %vm1112
        %v1114 = vsel %vm1113, -1e+30, 0.0
        %v1115 = vld [vmem:[#allocation2] sm:$0xff]
        %v1116 = vld [vmem:[#allocation2 + $0x8] sm:$0xff]
        %v1117 = vld [vmem:[#allocation2 + $0x10] sm:$0xff]
        %v1118 = vld [vmem:[#allocation2 + $0x18] sm:$0xff]
        %v1120 = vsel %vm1100, %v1115, 0
        %v1122 = vsel %vm1100, %v945, 0
        %1124 = vmatprep.subr.mxu0 0.0
        %1125 = vmatpush1.xpose.msra.mxu0 0.0
        %1126 = vmatprep.subr.mxu0 0.0
        %1127 = vmatpush1.xpose.msra.mxu0 0.0
        %1128 = vmatprep.subr.mxu0 0.0
        %1129 = vmatpush1.xpose.msra.mxu0 0.0
        %1130 = vmatprep.subr.mxu0 0.0
        %1131 = vmatpush1.xpose.msra.mxu0 0.0
        %1132 = vmatprep.subr.mxu0 0.0
        %1133 = vmatpush1.xpose.msra.mxu0 0.0
        %1134 = vmatprep.subr.mxu0 0.0
        %1135 = vmatpush1.xpose.msra.mxu0 0.0
        %1136 = vmatprep.subr.mxu0 0.0
        %1137 = vmatpush1.xpose.msra.mxu0 0.0
        %1138 = vmatprep.subr.mxu0 0.0
        %1139 = vmatpush1.xpose.msra.mxu0 0.0
        %1140 = vmatprep.subr.mxu0 0.0
        %1141 = vmatpush1.xpose.msra.mxu0 0.0
        %1142 = vmatprep.subr.mxu0 0.0
        %1143 = vmatpush1.xpose.msra.mxu0 0.0
        %1144 = vmatprep.subr.mxu0 0.0
        %1145 = vmatpush1.xpose.msra.mxu0 0.0
        %1146 = vmatprep.subr.mxu0 0.0
        %1147 = vmatpush1.xpose.msra.mxu0 0.0
        %1148 = vmatprep.subr.mxu0 0.0
        %1149 = vmatpush1.xpose.msra.mxu0 0.0
        %1150 = vmatprep.subr.mxu0 0.0
        %1151 = vmatpush1.xpose.msra.mxu0 0.0
        %1152 = vmatprep.subr.mxu0 0.0
        %1153 = vmatpush1.xpose.msra.mxu0 0.0
        %1154 = vmatprep.subr.mxu0 0.0
        %1155 = vmatpush1.xpose.msra.mxu0 %v1122
        %1156 = vmatprep.subr.mxu0 0.0
        %1157 = vmatpush2.xpose.msra.mxu0 0.0
        %1158 = vmatprep.subr.mxu0 0.0
        %1159 = vmatpush2.xpose.msra.mxu0 0.0
        %1160 = vmatprep.subr.mxu0 0.0
        %1161 = vmatpush2.xpose.msra.mxu0 0.0
        %1162 = vmatprep.subr.mxu0 0.0
        %1163 = vmatpush2.xpose.msra.mxu0 0.0
        %1164 = vmatprep.subr.mxu0 0.0
        %1165 = vmatpush2.xpose.msra.mxu0 0.0
        %1166 = vmatprep.subr.mxu0 0.0
        %1167 = vmatpush2.xpose.msra.mxu0 0.0
        %1168 = vmatprep.subr.mxu0 0.0
        %1169 = vmatpush2.xpose.msra.mxu0 0.0
        %1170 = vmatprep.subr.mxu0 0.0
        %1171 = vmatpush2.xpose.msra.mxu0 0.0
        %1172 = vmatprep.subr.mxu0 0.0
        %1173 = vmatpush2.xpose.msra.mxu0 0.0
        %1174 = vmatprep.subr.mxu0 0.0
        %1175 = vmatpush2.xpose.msra.mxu0 0.0
        %1176 = vmatprep.subr.mxu0 0.0
        %1177 = vmatpush2.xpose.msra.mxu0 0.0
        %1178 = vmatprep.subr.mxu0 0.0
        %1179 = vmatpush2.xpose.msra.mxu0 0.0
        %1180 = vmatprep.subr.mxu0 0.0
        %1181 = vmatpush2.xpose.msra.mxu0 0.0
        %1182 = vmatprep.subr.mxu0 0.0
        %1183 = vmatpush2.xpose.msra.mxu0 0.0
        %1184 = vmatprep.subr.mxu0 0.0
        %1185 = vmatpush2.xpose.msra.mxu0 0.0
        %1186 = vmatprep.subr.mxu0 0.0
        %1187 = vmatpush2.xpose.msra.mxu0 0.0
        %1188 = vmatprep.mubr.f32.mxu0 0.0
        %1189 = vmatmul.mubr.f32.gmra.mxu0 %v1120
        %v1190 = vpop.f32.mrf.mxu0
        %v1191 = vadd.f32 %v1114, %v1190
        %v1192 = vpop.f32.mrf.mxu0
        %1193 = vdwg.mxu0
        %v1195 = vsel %vm1100, %v1116, 0
        %v1197 = vsel %vm1100, %v1034, 0
        %1199 = vmatprep.subr.mxu0 0.0
        %1200 = vmatpush1.xpose.msra.mxu0 0.0
        %1201 = vmatprep.subr.mxu0 0.0
        %1202 = vmatpush1.xpose.msra.mxu0 0.0
        %1203 = vmatprep.subr.mxu0 0.0
        %1204 = vmatpush1.xpose.msra.mxu0 0.0
        %1205 = vmatprep.subr.mxu0 0.0
        %1206 = vmatpush1.xpose.msra.mxu0 0.0
        %1207 = vmatprep.subr.mxu0 0.0
        %1208 = vmatpush1.xpose.msra.mxu0 0.0
        %1209 = vmatprep.subr.mxu0 0.0
        %1210 = vmatpush1.xpose.msra.mxu0 0.0
        %1211 = vmatprep.subr.mxu0 0.0
        %1212 = vmatpush1.xpose.msra.mxu0 0.0
        %1213 = vmatprep.subr.mxu0 0.0
        %1214 = vmatpush1.xpose.msra.mxu0 0.0
        %1215 = vmatprep.subr.mxu0 0.0
        %1216 = vmatpush1.xpose.msra.mxu0 0.0
        %1217 = vmatprep.subr.mxu0 0.0
        %1218 = vmatpush1.xpose.msra.mxu0 0.0
        %1219 = vmatprep.subr.mxu0 0.0
        %1220 = vmatpush1.xpose.msra.mxu0 0.0
        %1221 = vmatprep.subr.mxu0 0.0
        %1222 = vmatpush1.xpose.msra.mxu0 0.0
        %1223 = vmatprep.subr.mxu0 0.0
        %1224 = vmatpush1.xpose.msra.mxu0 0.0
        %1225 = vmatprep.subr.mxu0 0.0
        %1226 = vmatpush1.xpose.msra.mxu0 0.0
        %1227 = vmatprep.subr.mxu0 0.0
        %1228 = vmatpush1.xpose.msra.mxu0 0.0
        %1229 = vmatprep.subr.mxu0 0.0
        %1230 = vmatpush1.xpose.msra.mxu0 %v1197
        %1231 = vmatprep.subr.mxu0 0.0
        %1232 = vmatpush2.xpose.msra.mxu0 0.0
        %1233 = vmatprep.subr.mxu0 0.0
        %1234 = vmatpush2.xpose.msra.mxu0 0.0
        %1235 = vmatprep.subr.mxu0 0.0
        %1236 = vmatpush2.xpose.msra.mxu0 0.0
        %1237 = vmatprep.subr.mxu0 0.0
        %1238 = vmatpush2.xpose.msra.mxu0 0.0
        %1239 = vmatprep.subr.mxu0 0.0
        %1240 = vmatpush2.xpose.msra.mxu0 0.0
        %1241 = vmatprep.subr.mxu0 0.0
        %1242 = vmatpush2.xpose.msra.mxu0 0.0
        %1243 = vmatprep.subr.mxu0 0.0
        %1244 = vmatpush2.xpose.msra.mxu0 0.0
        %1245 = vmatprep.subr.mxu0 0.0
        %1246 = vmatpush2.xpose.msra.mxu0 0.0
        %1247 = vmatprep.subr.mxu0 0.0
        %1248 = vmatpush2.xpose.msra.mxu0 0.0
        %1249 = vmatprep.subr.mxu0 0.0
        %1250 = vmatpush2.xpose.msra.mxu0 0.0
        %1251 = vmatprep.subr.mxu0 0.0
        %1252 = vmatpush2.xpose.msra.mxu0 0.0
        %1253 = vmatprep.subr.mxu0 0.0
        %1254 = vmatpush2.xpose.msra.mxu0 0.0
        %1255 = vmatprep.subr.mxu0 0.0
        %1256 = vmatpush2.xpose.msra.mxu0 0.0
        %1257 = vmatprep.subr.mxu0 0.0
        %1258 = vmatpush2.xpose.msra.mxu0 0.0
        %1259 = vmatprep.subr.mxu0 0.0
        %1260 = vmatpush2.xpose.msra.mxu0 0.0
        %1261 = vmatprep.subr.mxu0 0.0
        %1262 = vmatpush2.xpose.msra.mxu0 0.0
        %1263 = vmatprep.mubr.f32.mxu0 0.0
        %1264 = vmatmul.mubr.f32.gmra.mxu0 %v1195
        %v1265 = vpop.f32.mrf.mxu0
        %v1266 = vadd.f32 %v1114, %v1265
        %v1267 = vpop.f32.mrf.mxu0
        %1268 = vdwg.mxu0
        %v1270 = vsel %vm1100, %v1117, 0
        %v1272 = vsel %vm1100, %v1036, 0
        %1274 = vmatprep.subr.mxu0 0.0
        %1275 = vmatpush1.xpose.msra.mxu0 0.0
        %1276 = vmatprep.subr.mxu0 0.0
        %1277 = vmatpush1.xpose.msra.mxu0 0.0
        %1278 = vmatprep.subr.mxu0 0.0
        %1279 = vmatpush1.xpose.msra.mxu0 0.0
        %1280 = vmatprep.subr.mxu0 0.0
        %1281 = vmatpush1.xpose.msra.mxu0 0.0
        %1282 = vmatprep.subr.mxu0 0.0
        %1283 = vmatpush1.xpose.msra.mxu0 0.0
        %1284 = vmatprep.subr.mxu0 0.0
        %1285 = vmatpush1.xpose.msra.mxu0 0.0
        %1286 = vmatprep.subr.mxu0 0.0
        %1287 = vmatpush1.xpose.msra.mxu0 0.0
        %1288 = vmatprep.subr.mxu0 0.0
        %1289 = vmatpush1.xpose.msra.mxu0 0.0
        %1290 = vmatprep.subr.mxu0 0.0
        %1291 = vmatpush1.xpose.msra.mxu0 0.0
        %1292 = vmatprep.subr.mxu0 0.0
        %1293 = vmatpush1.xpose.msra.mxu0 0.0
        %1294 = vmatprep.subr.mxu0 0.0
        %1295 = vmatpush1.xpose.msra.mxu0 0.0
        %1296 = vmatprep.subr.mxu0 0.0
        %1297 = vmatpush1.xpose.msra.mxu0 0.0
        %1298 = vmatprep.subr.mxu0 0.0
        %1299 = vmatpush1.xpose.msra.mxu0 0.0
        %1300 = vmatprep.subr.mxu0 0.0
        %1301 = vmatpush1.xpose.msra.mxu0 0.0
        %1302 = vmatprep.subr.mxu0 0.0
        %1303 = vmatpush1.xpose.msra.mxu0 0.0
        %1304 = vmatprep.subr.mxu0 0.0
        %1305 = vmatpush1.xpose.msra.mxu0 %v1272
        %1306 = vmatprep.subr.mxu0 0.0
        %1307 = vmatpush2.xpose.msra.mxu0 0.0
        %1308 = vmatprep.subr.mxu0 0.0
        %1309 = vmatpush2.xpose.msra.mxu0 0.0
        %1310 = vmatprep.subr.mxu0 0.0
        %1311 = vmatpush2.xpose.msra.mxu0 0.0
        %1312 = vmatprep.subr.mxu0 0.0
        %1313 = vmatpush2.xpose.msra.mxu0 0.0
        %1314 = vmatprep.subr.mxu0 0.0
        %1315 = vmatpush2.xpose.msra.mxu0 0.0
        %1316 = vmatprep.subr.mxu0 0.0
        %1317 = vmatpush2.xpose.msra.mxu0 0.0
        %1318 = vmatprep.subr.mxu0 0.0
        %1319 = vmatpush2.xpose.msra.mxu0 0.0
        %1320 = vmatprep.subr.mxu0 0.0
        %1321 = vmatpush2.xpose.msra.mxu0 0.0
        %1322 = vmatprep.subr.mxu0 0.0
        %1323 = vmatpush2.xpose.msra.mxu0 0.0
        %1324 = vmatprep.subr.mxu0 0.0
        %1325 = vmatpush2.xpose.msra.mxu0 0.0
        %1326 = vmatprep.subr.mxu0 0.0
        %1327 = vmatpush2.xpose.msra.mxu0 0.0
        %1328 = vmatprep.subr.mxu0 0.0
        %1329 = vmatpush2.xpose.msra.mxu0 0.0
        %1330 = vmatprep.subr.mxu0 0.0
        %1331 = vmatpush2.xpose.msra.mxu0 0.0
        %1332 = vmatprep.subr.mxu0 0.0
        %1333 = vmatpush2.xpose.msra.mxu0 0.0
        %1334 = vmatprep.subr.mxu0 0.0
        %1335 = vmatpush2.xpose.msra.mxu0 0.0
        %1336 = vmatprep.subr.mxu0 0.0
        %1337 = vmatpush2.xpose.msra.mxu0 0.0
        %1338 = vmatprep.mubr.f32.mxu0 0.0
        %1339 = vmatmul.mubr.f32.gmra.mxu0 %v1270
        %v1340 = vpop.f32.mrf.mxu0
        %v1341 = vadd.f32 %v1114, %v1340
        %v1342 = vpop.f32.mrf.mxu0
        %1343 = vdwg.mxu0
        %v1345 = vsel %vm1100, %v1118, 0
        %v1347 = vsel %vm1100, %v1038, 0
        %1349 = vmatprep.subr.mxu0 0.0
        %1350 = vmatpush1.xpose.msra.mxu0 0.0
        %1351 = vmatprep.subr.mxu0 0.0
        %1352 = vmatpush1.xpose.msra.mxu0 0.0
        %1353 = vmatprep.subr.mxu0 0.0
        %1354 = vmatpush1.xpose.msra.mxu0 0.0
        %1355 = vmatprep.subr.mxu0 0.0
        %1356 = vmatpush1.xpose.msra.mxu0 0.0
        %1357 = vmatprep.subr.mxu0 0.0
        %1358 = vmatpush1.xpose.msra.mxu0 0.0
        %1359 = vmatprep.subr.mxu0 0.0
        %1360 = vmatpush1.xpose.msra.mxu0 0.0
        %1361 = vmatprep.subr.mxu0 0.0
        %1362 = vmatpush1.xpose.msra.mxu0 0.0
        %1363 = vmatprep.subr.mxu0 0.0
        %1364 = vmatpush1.xpose.msra.mxu0 0.0
        %1365 = vmatprep.subr.mxu0 0.0
        %1366 = vmatpush1.xpose.msra.mxu0 0.0
        %1367 = vmatprep.subr.mxu0 0.0
        %1368 = vmatpush1.xpose.msra.mxu0 0.0
        %1369 = vmatprep.subr.mxu0 0.0
        %1370 = vmatpush1.xpose.msra.mxu0 0.0
        %1371 = vmatprep.subr.mxu0 0.0
        %1372 = vmatpush1.xpose.msra.mxu0 0.0
        %1373 = vmatprep.subr.mxu0 0.0
        %1374 = vmatpush1.xpose.msra.mxu0 0.0
        %1375 = vmatprep.subr.mxu0 0.0
        %1376 = vmatpush1.xpose.msra.mxu0 0.0
        %1377 = vmatprep.subr.mxu0 0.0
        %1378 = vmatpush1.xpose.msra.mxu0 0.0
        %1379 = vmatprep.subr.mxu0 0.0
        %1380 = vmatpush1.xpose.msra.mxu0 %v1347
        %1381 = vmatprep.subr.mxu0 0.0
        %1382 = vmatpush2.xpose.msra.mxu0 0.0
        %1383 = vmatprep.subr.mxu0 0.0
        %1384 = vmatpush2.xpose.msra.mxu0 0.0
        %1385 = vmatprep.subr.mxu0 0.0
        %1386 = vmatpush2.xpose.msra.mxu0 0.0
        %1387 = vmatprep.subr.mxu0 0.0
        %1388 = vmatpush2.xpose.msra.mxu0 0.0
        %1389 = vmatprep.subr.mxu0 0.0
        %1390 = vmatpush2.xpose.msra.mxu0 0.0
        %1391 = vmatprep.subr.mxu0 0.0
        %1392 = vmatpush2.xpose.msra.mxu0 0.0
        %1393 = vmatprep.subr.mxu0 0.0
        %1394 = vmatpush2.xpose.msra.mxu0 0.0
        %1395 = vmatprep.subr.mxu0 0.0
        %1396 = vmatpush2.xpose.msra.mxu0 0.0
        %1397 = vmatprep.subr.mxu0 0.0
        %1398 = vmatpush2.xpose.msra.mxu0 0.0
        %1399 = vmatprep.subr.mxu0 0.0
        %1400 = vmatpush2.xpose.msra.mxu0 0.0
        %1401 = vmatprep.subr.mxu0 0.0
        %1402 = vmatpush2.xpose.msra.mxu0 0.0
        %1403 = vmatprep.subr.mxu0 0.0
        %1404 = vmatpush2.xpose.msra.mxu0 0.0
        %1405 = vmatprep.subr.mxu0 0.0
        %1406 = vmatpush2.xpose.msra.mxu0 0.0
        %1407 = vmatprep.subr.mxu0 0.0
        %1408 = vmatpush2.xpose.msra.mxu0 0.0
        %1409 = vmatprep.subr.mxu0 0.0
        %1410 = vmatpush2.xpose.msra.mxu0 0.0
        %1411 = vmatprep.subr.mxu0 0.0
        %1412 = vmatpush2.xpose.msra.mxu0 0.0
        %1413 = vmatprep.mubr.f32.mxu0 0.0
        %1414 = vmatmul.mubr.f32.gmra.mxu0 %v1345
        %v1415 = vpop.f32.mrf.mxu0
        %v1416 = vadd.f32 %v1114, %v1415
        %v1417 = vpop.f32.mrf.mxu0
        %1418 = vdwg.mxu0
        %v1419 = vld [vmem:[#allocation3] sm:$0xff]
        %v1420 = vld [vmem:[#allocation3 + $0x8] sm:$0xff]
        %v1421 = vld [vmem:[#allocation3 + $0x10] sm:$0xff]
        %v1422 = vld [vmem:[#allocation3 + $0x18] sm:$0xff]
        %v1423 = vsel %vm1100, %v1191, -inf
        %1424 = vmax.xlane.f32.xlu0 %v1423
        %v1425 = vpop.xlane.xlu0 %1424
        %v1426 = vsel %vm1100, %v1266, -inf
        %1427 = vmax.xlane.f32.xlu0 %v1426
        %v1428 = vpop.xlane.xlu0 %1427
        %v1429 = vsel %vm1100, %v1341, -inf
        %1430 = vmax.xlane.f32.xlu0 %v1429
        %v1431 = vpop.xlane.xlu0 %1430
        %v1432 = vsel %vm1100, %v1416, -inf
        %1433 = vmax.xlane.f32.xlu0 %v1432
        %v1434 = vpop.xlane.xlu0 %1433
        %v1435 = vmax.f32 %v1419, %v1425
        %v1436 = vmax.f32 %v1420, %v1428
        %v1437 = vmax.f32 %v1421, %v1431
        %v1438 = vmax.f32 %v1422, %v1434
        %v1439 = vsub.f32 %v1419, %v1435
        %v1440 = vsub.f32 %v1420, %v1436
        %v1441 = vsub.f32 %v1421, %v1437
        %v1442 = vsub.f32 %v1422, %v1438
        %v1443 = vmul.f32 %v1439, 1.442695
        %v1444 = vpow.pop %v1443
        %v1445 = vmul.f32 %v1440, 1.442695
        %v1446 = vpow.pop %v1445
        %v1447 = vmul.f32 %v1441, 1.442695
        %v1448 = vpow.pop %v1447
        %v1449 = vmul.f32 %v1442, 1.442695
        %v1450 = vpow.pop %v1449
        %1452 = vset.pattern.permute.xlu0 0
        %1453 = vperm.xlu0 %1452, %v1435
        %v1454 = vpop.permute.xlu0 %1453
        %1457 = vset.pattern.permute.xlu0 0
        %1458 = vperm.xlu0 %1457, %v1436
        %v1459 = vpop.permute.xlu0 %1458
        %1462 = vset.pattern.permute.xlu0 0
        %1463 = vperm.xlu0 %1462, %v1437
        %v1464 = vpop.permute.xlu0 %1463
        %1467 = vset.pattern.permute.xlu0 0
        %1468 = vperm.xlu0 %1467, %v1438
        %v1469 = vpop.permute.xlu0 %1468
        %v1471 = vsub.f32 %v1191, %v1454
        %v1472 = vsub.f32 %v1266, %v1459
        %v1473 = vsub.f32 %v1341, %v1464
        %v1474 = vsub.f32 %v1416, %v1469
        %v1475 = vmul.f32 %v1471, 1.442695
        %v1476 = vpow.pop %v1475
        %v1477 = vmul.f32 %v1472, 1.442695
        %v1478 = vpow.pop %v1477
        %v1479 = vmul.f32 %v1473, 1.442695
        %v1480 = vpow.pop %v1479
        %v1481 = vmul.f32 %v1474, 1.442695
        %v1482 = vpow.pop %v1481
        %v1483 = vld [vmem:[#allocation4] sm:$0xff]
        %v1484 = vld [vmem:[#allocation4 + $0x8] sm:$0xff]
        %v1485 = vld [vmem:[#allocation4 + $0x10] sm:$0xff]
        %v1486 = vld [vmem:[#allocation4 + $0x18] sm:$0xff]
        %v1487 = vmul.f32 %v1444, %v1483
        %v1488 = vmul.f32 %v1446, %v1484
        %v1489 = vmul.f32 %v1448, %v1485
        %v1490 = vmul.f32 %v1450, %v1486
        %v1491 = vsel %vm1100, %v1476, 0.0
        %1492 = vadd.xlane.f32.xlu0 %v1491
        %v1493 = vpop.xlane.xlu0 %1492
        %v1494 = vsel %vm1100, %v1478, 0.0
        %1495 = vadd.xlane.f32.xlu0 %v1494
        %v1496 = vpop.xlane.xlu0 %1495
        %v1497 = vsel %vm1100, %v1480, 0.0
        %1498 = vadd.xlane.f32.xlu0 %v1497
        %v1499 = vpop.xlane.xlu0 %1498
        %v1500 = vsel %vm1100, %v1482, 0.0
        %1501 = vadd.xlane.f32.xlu0 %v1500
        %v1502 = vpop.xlane.xlu0 %1501
        %v1503 = vadd.f32 %v1487, %v1493
        %v1504 = vadd.f32 %v1488, %v1496
        %v1505 = vadd.f32 %v1489, %v1499
        %v1506 = vadd.f32 %v1490, %v1502
        %vm1507 = vcmask 7168
        %1508 = vst.msk [vmem:[#allocation4] sm:$0xff] %vm1507, %v1503
        %1509 = vst.msk [vmem:[#allocation4 + $0x8] sm:$0xff] %vm1507, %v1504
        %1510 = vst.msk [vmem:[#allocation4 + $0x10] sm:$0xff] %vm1507, %v1505
        %1511 = vst.msk [vmem:[#allocation4 + $0x18] sm:$0xff] %vm1507, %v1506
        %v1512 = vld [vmem:[#allocation5] sm:$0xff]
        %v1513 = vld [vmem:[#allocation5 + $0x8] sm:$0xff]
        %v1514 = vld [vmem:[#allocation5 + $0x10] sm:$0xff]
        %v1515 = vld [vmem:[#allocation5 + $0x18] sm:$0xff]
        %1517 = vset.pattern.permute.xlu0 0
        %1518 = vperm.xlu0 %1517, %v1444
        %v1519 = vpop.permute.xlu0 %1518
        %1522 = vset.pattern.permute.xlu0 0
        %1523 = vperm.xlu0 %1522, %v1446
        %v1524 = vpop.permute.xlu0 %1523
        %1527 = vset.pattern.permute.xlu0 0
        %1528 = vperm.xlu0 %1527, %v1448
        %v1529 = vpop.permute.xlu0 %1528
        %1532 = vset.pattern.permute.xlu0 0
        %1533 = vperm.xlu0 %1532, %v1450
        %v1534 = vpop.permute.xlu0 %1533
        %v1536 = vmul.f32 %v1519, %v1512
        %v1537 = vmul.f32 %v1524, %v1513
        %v1538 = vmul.f32 %v1529, %v1514
        %v1539 = vmul.f32 %v1534, %v1515
        %v1541 = vsel %vm1100, %v1476, 0
        %1543 = vmatprep.subr.mxu0 0.0
        %1544 = vmatpush1.msra.mxu0 0.0
        %1545 = vmatprep.subr.mxu0 0.0
        %1546 = vmatpush1.msra.mxu0 0.0
        %1547 = vmatprep.subr.mxu0 0.0
        %1548 = vmatpush1.msra.mxu0 0.0
        %1549 = vmatprep.subr.mxu0 0.0
        %1550 = vmatpush1.msra.mxu0 0.0
        %1551 = vmatprep.subr.mxu0 0.0
        %1552 = vmatpush1.msra.mxu0 0.0
        %1553 = vmatprep.subr.mxu0 0.0
        %1554 = vmatpush1.msra.mxu0 0.0
        %1555 = vmatprep.subr.mxu0 0.0
        %1556 = vmatpush1.msra.mxu0 0.0
        %1557 = vmatprep.subr.mxu0 0.0
        %1558 = vmatpush1.msra.mxu0 0.0
        %1559 = vmatprep.subr.mxu0 0.0
        %1560 = vmatpush1.msra.mxu0 0.0
        %1561 = vmatprep.subr.mxu0 0.0
        %1562 = vmatpush1.msra.mxu0 0.0
        %1563 = vmatprep.subr.mxu0 0.0
        %1564 = vmatpush1.msra.mxu0 0.0
        %1565 = vmatprep.subr.mxu0 0.0
        %1566 = vmatpush1.msra.mxu0 0.0
        %1567 = vmatprep.subr.mxu0 0.0
        %1568 = vmatpush1.msra.mxu0 0.0
        %1569 = vmatprep.subr.mxu0 0.0
        %1570 = vmatpush1.msra.mxu0 0.0
        %1571 = vmatprep.subr.mxu0 0.0
        %1572 = vmatpush1.msra.mxu0 0.0
        %1573 = vmatprep.subr.mxu0 0.0
        %1574 = vmatpush1.msra.mxu0 %v1029
        %1575 = vmatprep.subr.mxu0 0.0
        %1576 = vmatpush2.msra.mxu0 0.0
        %1577 = vmatprep.subr.mxu0 0.0
        %1578 = vmatpush2.msra.mxu0 0.0
        %1579 = vmatprep.subr.mxu0 0.0
        %1580 = vmatpush2.msra.mxu0 0.0
        %1581 = vmatprep.subr.mxu0 0.0
        %1582 = vmatpush2.msra.mxu0 0.0
        %1583 = vmatprep.subr.mxu0 0.0
        %1584 = vmatpush2.msra.mxu0 0.0
        %1585 = vmatprep.subr.mxu0 0.0
        %1586 = vmatpush2.msra.mxu0 0.0
        %1587 = vmatprep.subr.mxu0 0.0
        %1588 = vmatpush2.msra.mxu0 0.0
        %1589 = vmatprep.subr.mxu0 0.0
        %1590 = vmatpush2.msra.mxu0 0.0
        %1591 = vmatprep.subr.mxu0 0.0
        %1592 = vmatpush2.msra.mxu0 0.0
        %1593 = vmatprep.subr.mxu0 0.0
        %1594 = vmatpush2.msra.mxu0 0.0
        %1595 = vmatprep.subr.mxu0 0.0
        %1596 = vmatpush2.msra.mxu0 0.0
        %1597 = vmatprep.subr.mxu0 0.0
        %1598 = vmatpush2.msra.mxu0 0.0
        %1599 = vmatprep.subr.mxu0 0.0
        %1600 = vmatpush2.msra.mxu0 0.0
        %1601 = vmatprep.subr.mxu0 0.0
        %1602 = vmatpush2.msra.mxu0 0.0
        %1603 = vmatprep.subr.mxu0 0.0
        %1604 = vmatpush2.msra.mxu0 0.0
        %1605 = vmatprep.subr.mxu0 0.0
        %1606 = vmatpush2.msra.mxu0 0.0
        %1607 = vmatprep.mubr.f32.mxu0 0.0
        %1608 = vmatmul.mubr.f32.gmra.mxu0 %v1541
        %v1609 = vpop.f32.mrf.mxu0
        %v1610 = vadd.f32 0.0, %v1609
        %v1611 = vpop.f32.mrf.mxu0
        %1612 = vdwg.mxu0
        %v1614 = vsel %vm1100, %v1478, 0
        %1616 = vmatprep.subr.mxu0 0.0
        %1617 = vmatpush1.msra.mxu0 0.0
        %1618 = vmatprep.subr.mxu0 0.0
        %1619 = vmatpush1.msra.mxu0 0.0
        %1620 = vmatprep.subr.mxu0 0.0
        %1621 = vmatpush1.msra.mxu0 0.0
        %1622 = vmatprep.subr.mxu0 0.0
        %1623 = vmatpush1.msra.mxu0 0.0
        %1624 = vmatprep.subr.mxu0 0.0
        %1625 = vmatpush1.msra.mxu0 0.0
        %1626 = vmatprep.subr.mxu0 0.0
        %1627 = vmatpush1.msra.mxu0 0.0
        %1628 = vmatprep.subr.mxu0 0.0
        %1629 = vmatpush1.msra.mxu0 0.0
        %1630 = vmatprep.subr.mxu0 0.0
        %1631 = vmatpush1.msra.mxu0 0.0
        %1632 = vmatprep.subr.mxu0 0.0
        %1633 = vmatpush1.msra.mxu0 0.0
        %1634 = vmatprep.subr.mxu0 0.0
        %1635 = vmatpush1.msra.mxu0 0.0
        %1636 = vmatprep.subr.mxu0 0.0
        %1637 = vmatpush1.msra.mxu0 0.0
        %1638 = vmatprep.subr.mxu0 0.0
        %1639 = vmatpush1.msra.mxu0 0.0
        %1640 = vmatprep.subr.mxu0 0.0
        %1641 = vmatpush1.msra.mxu0 0.0
        %1642 = vmatprep.subr.mxu0 0.0
        %1643 = vmatpush1.msra.mxu0 0.0
        %1644 = vmatprep.subr.mxu0 0.0
        %1645 = vmatpush1.msra.mxu0 0.0
        %1646 = vmatprep.subr.mxu0 0.0
        %1647 = vmatpush1.msra.mxu0 %v1041
        %1648 = vmatprep.subr.mxu0 0.0
        %1649 = vmatpush2.msra.mxu0 0.0
        %1650 = vmatprep.subr.mxu0 0.0
        %1651 = vmatpush2.msra.mxu0 0.0
        %1652 = vmatprep.subr.mxu0 0.0
        %1653 = vmatpush2.msra.mxu0 0.0
        %1654 = vmatprep.subr.mxu0 0.0
        %1655 = vmatpush2.msra.mxu0 0.0
        %1656 = vmatprep.subr.mxu0 0.0
        %1657 = vmatpush2.msra.mxu0 0.0
        %1658 = vmatprep.subr.mxu0 0.0
        %1659 = vmatpush2.msra.mxu0 0.0
        %1660 = vmatprep.subr.mxu0 0.0
        %1661 = vmatpush2.msra.mxu0 0.0
        %1662 = vmatprep.subr.mxu0 0.0
        %1663 = vmatpush2.msra.mxu0 0.0
        %1664 = vmatprep.subr.mxu0 0.0
        %1665 = vmatpush2.msra.mxu0 0.0
        %1666 = vmatprep.subr.mxu0 0.0
        %1667 = vmatpush2.msra.mxu0 0.0
        %1668 = vmatprep.subr.mxu0 0.0
        %1669 = vmatpush2.msra.mxu0 0.0
        %1670 = vmatprep.subr.mxu0 0.0
        %1671 = vmatpush2.msra.mxu0 0.0
        %1672 = vmatprep.subr.mxu0 0.0
        %1673 = vmatpush2.msra.mxu0 0.0
        %1674 = vmatprep.subr.mxu0 0.0
        %1675 = vmatpush2.msra.mxu0 0.0
        %1676 = vmatprep.subr.mxu0 0.0
        %1677 = vmatpush2.msra.mxu0 0.0
        %1678 = vmatprep.subr.mxu0 0.0
        %1679 = vmatpush2.msra.mxu0 0.0
        %1680 = vmatprep.mubr.f32.mxu0 0.0
        %1681 = vmatmul.mubr.f32.gmra.mxu0 %v1614
        %v1682 = vpop.f32.mrf.mxu0
        %v1683 = vadd.f32 0.0, %v1682
        %v1684 = vpop.f32.mrf.mxu0
        %1685 = vdwg.mxu0
        %v1687 = vsel %vm1100, %v1480, 0
        %1689 = vmatprep.subr.mxu0 0.0
        %1690 = vmatpush1.msra.mxu0 0.0
        %1691 = vmatprep.subr.mxu0 0.0
        %1692 = vmatpush1.msra.mxu0 0.0
        %1693 = vmatprep.subr.mxu0 0.0
        %1694 = vmatpush1.msra.mxu0 0.0
        %1695 = vmatprep.subr.mxu0 0.0
        %1696 = vmatpush1.msra.mxu0 0.0
        %1697 = vmatprep.subr.mxu0 0.0
        %1698 = vmatpush1.msra.mxu0 0.0
        %1699 = vmatprep.subr.mxu0 0.0
        %1700 = vmatpush1.msra.mxu0 0.0
        %1701 = vmatprep.subr.mxu0 0.0
        %1702 = vmatpush1.msra.mxu0 0.0
        %1703 = vmatprep.subr.mxu0 0.0
        %1704 = vmatpush1.msra.mxu0 0.0
        %1705 = vmatprep.subr.mxu0 0.0
        %1706 = vmatpush1.msra.mxu0 0.0
        %1707 = vmatprep.subr.mxu0 0.0
        %1708 = vmatpush1.msra.mxu0 0.0
        %1709 = vmatprep.subr.mxu0 0.0
        %1710 = vmatpush1.msra.mxu0 0.0
        %1711 = vmatprep.subr.mxu0 0.0
        %1712 = vmatpush1.msra.mxu0 0.0
        %1713 = vmatprep.subr.mxu0 0.0
        %1714 = vmatpush1.msra.mxu0 0.0
        %1715 = vmatprep.subr.mxu0 0.0
        %1716 = vmatpush1.msra.mxu0 0.0
        %1717 = vmatprep.subr.mxu0 0.0
        %1718 = vmatpush1.msra.mxu0 0.0
        %1719 = vmatprep.subr.mxu0 0.0
        %1720 = vmatpush1.msra.mxu0 %v1044
        %1721 = vmatprep.subr.mxu0 0.0
        %1722 = vmatpush2.msra.mxu0 0.0
        %1723 = vmatprep.subr.mxu0 0.0
        %1724 = vmatpush2.msra.mxu0 0.0
        %1725 = vmatprep.subr.mxu0 0.0
        %1726 = vmatpush2.msra.mxu0 0.0
        %1727 = vmatprep.subr.mxu0 0.0
        %1728 = vmatpush2.msra.mxu0 0.0
        %1729 = vmatprep.subr.mxu0 0.0
        %1730 = vmatpush2.msra.mxu0 0.0
        %1731 = vmatprep.subr.mxu0 0.0
        %1732 = vmatpush2.msra.mxu0 0.0
        %1733 = vmatprep.subr.mxu0 0.0
        %1734 = vmatpush2.msra.mxu0 0.0
        %1735 = vmatprep.subr.mxu0 0.0
        %1736 = vmatpush2.msra.mxu0 0.0
        %1737 = vmatprep.subr.mxu0 0.0
        %1738 = vmatpush2.msra.mxu0 0.0
        %1739 = vmatprep.subr.mxu0 0.0
        %1740 = vmatpush2.msra.mxu0 0.0
        %1741 = vmatprep.subr.mxu0 0.0
        %1742 = vmatpush2.msra.mxu0 0.0
        %1743 = vmatprep.subr.mxu0 0.0
        %1744 = vmatpush2.msra.mxu0 0.0
        %1745 = vmatprep.subr.mxu0 0.0
        %1746 = vmatpush2.msra.mxu0 0.0
        %1747 = vmatprep.subr.mxu0 0.0
        %1748 = vmatpush2.msra.mxu0 0.0
        %1749 = vmatprep.subr.mxu0 0.0
        %1750 = vmatpush2.msra.mxu0 0.0
        %1751 = vmatprep.subr.mxu0 0.0
        %1752 = vmatpush2.msra.mxu0 0.0
        %1753 = vmatprep.mubr.f32.mxu0 0.0
        %1754 = vmatmul.mubr.f32.gmra.mxu0 %v1687
        %v1755 = vpop.f32.mrf.mxu0
        %v1756 = vadd.f32 0.0, %v1755
        %v1757 = vpop.f32.mrf.mxu0
        %1758 = vdwg.mxu0
        %v1760 = vsel %vm1100, %v1482, 0
        %1762 = vmatprep.subr.mxu0 0.0
        %1763 = vmatpush1.msra.mxu0 0.0
        %1764 = vmatprep.subr.mxu0 0.0
        %1765 = vmatpush1.msra.mxu0 0.0
        %1766 = vmatprep.subr.mxu0 0.0
        %1767 = vmatpush1.msra.mxu0 0.0
        %1768 = vmatprep.subr.mxu0 0.0
        %1769 = vmatpush1.msra.mxu0 0.0
        %1770 = vmatprep.subr.mxu0 0.0
        %1771 = vmatpush1.msra.mxu0 0.0
        %1772 = vmatprep.subr.mxu0 0.0
        %1773 = vmatpush1.msra.mxu0 0.0
        %1774 = vmatprep.subr.mxu0 0.0
        %1775 = vmatpush1.msra.mxu0 0.0
        %1776 = vmatprep.subr.mxu0 0.0
        %1777 = vmatpush1.msra.mxu0 0.0
        %1778 = vmatprep.subr.mxu0 0.0
        %1779 = vmatpush1.msra.mxu0 0.0
        %1780 = vmatprep.subr.mxu0 0.0
        %1781 = vmatpush1.msra.mxu0 0.0
        %1782 = vmatprep.subr.mxu0 0.0
        %1783 = vmatpush1.msra.mxu0 0.0
        %1784 = vmatprep.subr.mxu0 0.0
        %1785 = vmatpush1.msra.mxu0 0.0
        %1786 = vmatprep.subr.mxu0 0.0
        %1787 = vmatpush1.msra.mxu0 0.0
        %1788 = vmatprep.subr.mxu0 0.0
        %1789 = vmatpush1.msra.mxu0 0.0
        %1790 = vmatprep.subr.mxu0 0.0
        %1791 = vmatpush1.msra.mxu0 0.0
        %1792 = vmatprep.subr.mxu0 0.0
        %1793 = vmatpush1.msra.mxu0 %v1047
        %1794 = vmatprep.subr.mxu0 0.0
        %1795 = vmatpush2.msra.mxu0 0.0
        %1796 = vmatprep.subr.mxu0 0.0
        %1797 = vmatpush2.msra.mxu0 0.0
        %1798 = vmatprep.subr.mxu0 0.0
        %1799 = vmatpush2.msra.mxu0 0.0
        %1800 = vmatprep.subr.mxu0 0.0
        %1801 = vmatpush2.msra.mxu0 0.0
        %1802 = vmatprep.subr.mxu0 0.0
        %1803 = vmatpush2.msra.mxu0 0.0
        %1804 = vmatprep.subr.mxu0 0.0
        %1805 = vmatpush2.msra.mxu0 0.0
        %1806 = vmatprep.subr.mxu0 0.0
        %1807 = vmatpush2.msra.mxu0 0.0
        %1808 = vmatprep.subr.mxu0 0.0
        %1809 = vmatpush2.msra.mxu0 0.0
        %1810 = vmatprep.subr.mxu0 0.0
        %1811 = vmatpush2.msra.mxu0 0.0
        %1812 = vmatprep.subr.mxu0 0.0
        %1813 = vmatpush2.msra.mxu0 0.0
        %1814 = vmatprep.subr.mxu0 0.0
        %1815 = vmatpush2.msra.mxu0 0.0
        %1816 = vmatprep.subr.mxu0 0.0
        %1817 = vmatpush2.msra.mxu0 0.0
        %1818 = vmatprep.subr.mxu0 0.0
        %1819 = vmatpush2.msra.mxu0 0.0
        %1820 = vmatprep.subr.mxu0 0.0
        %1821 = vmatpush2.msra.mxu0 0.0
        %1822 = vmatprep.subr.mxu0 0.0
        %1823 = vmatpush2.msra.mxu0 0.0
        %1824 = vmatprep.subr.mxu0 0.0
        %1825 = vmatpush2.msra.mxu0 0.0
        %1826 = vmatprep.mubr.f32.mxu0 0.0
        %1827 = vmatmul.mubr.f32.gmra.mxu0 %v1760
        %v1828 = vpop.f32.mrf.mxu0
        %v1829 = vadd.f32 0.0, %v1828
        %v1830 = vpop.f32.mrf.mxu0
        %1831 = vdwg.mxu0
        %v1832 = vadd.f32 %v1536, %v1610
        %v1833 = vadd.f32 %v1537, %v1683
        %v1834 = vadd.f32 %v1538, %v1756
        %v1835 = vadd.f32 %v1539, %v1829
        %1836 = vst.msk [vmem:[#allocation5] sm:$0xff] %vm1100, %v1832
        %1837 = vst.msk [vmem:[#allocation5 + $0x8] sm:$0xff] %vm1100, %v1833
        %1838 = vst.msk [vmem:[#allocation5 + $0x10] sm:$0xff] %vm1100, %v1834
        %1839 = vst.msk [vmem:[#allocation5 + $0x18] sm:$0xff] %vm1100, %v1835
        %1840 = vst.msk [vmem:[#allocation3] sm:$0xff] %vm1507, %v1435
        %1841 = vst.msk [vmem:[#allocation3 + $0x8] sm:$0xff] %vm1507, %v1436
        %1842 = vst.msk [vmem:[#allocation3 + $0x10] sm:$0xff] %vm1507, %v1437
        %1843 = vst.msk [vmem:[#allocation3 + $0x18] sm:$0xff] %vm1507, %v1438
        // Predicated region
        $region97: #{fwd.2} parent=87 // pred_check
          %p1844 = pneg %p740
        $region98: #{fwd.2} parent=87 // pred_check_branch
          %1846 = sbr.rel (%p1844) target = $region100
        $region99: #{fwd.2} parent=87 // pred_region
          %v1847 = vld [vmem:[#allocation5] sm:$0xff]
          %v1848 = vld [vmem:[#allocation5 + $0x8] sm:$0xff]
          %v1849 = vld [vmem:[#allocation5 + $0x10] sm:$0xff]
          %v1850 = vld [vmem:[#allocation5 + $0x18] sm:$0xff]
          %v1851 = vld [vmem:[#allocation4] sm:$0xff]
          %v1852 = vld [vmem:[#allocation4 + $0x8] sm:$0xff]
          %v1853 = vld [vmem:[#allocation4 + $0x10] sm:$0xff]
          %v1854 = vld [vmem:[#allocation4 + $0x18] sm:$0xff]
          %1856 = vset.pattern.permute.xlu0 0
          %1857 = vperm.xlu0 %1856, %v1851
          %v1858 = vpop.permute.xlu0 %1857
          %1861 = vset.pattern.permute.xlu0 0
          %1862 = vperm.xlu0 %1861, %v1852
          %v1863 = vpop.permute.xlu0 %1862
          %1866 = vset.pattern.permute.xlu0 0
          %1867 = vperm.xlu0 %1866, %v1853
          %v1868 = vpop.permute.xlu0 %1867
          %1871 = vset.pattern.permute.xlu0 0
          %1872 = vperm.xlu0 %1871, %v1854
          %v1873 = vpop.permute.xlu0 %1872
          %v1875 = vrcp.pop %v1858
          %v1876 = vmul.f32 %v1847, %v1875
          %v1877 = vrcp.pop %v1863
          %v1878 = vmul.f32 %v1848, %v1877
          %v1879 = vrcp.pop %v1868
          %v1880 = vmul.f32 %v1849, %v1879
          %v1881 = vrcp.pop %v1873
          %v1882 = vmul.f32 %v1850, %v1881
          %1884 = vrot.lane.b32.xlu0 %v1878, 8
          %v1885 = vpop.permute.xlu0 %1884
          %1888 = vrot.lane.b32.xlu0 %v1880, 16
          %v1889 = vpop.permute.xlu0 %1888
          %1892 = vrot.lane.b32.xlu0 %v1882, 24
          %v1893 = vpop.permute.xlu0 %1892
          %v1895 = vsel %vm1100, %v1876, %v1885
          %vm1896 = vcmask 130048
          %v1897 = vsel %vm1896, %v1895, %v1889
          %vm1898 = vcmask 195584
          %v1899 = vsel %vm1898, %v1897, %v1893
          %v1900 = vld [vmem:[%s697] sm:$0xff]
          %v1901 = vld [vmem:[%s14] sm:$0x1]
          %v1903 = vlaneseq
          %v1904 = vshrl.u32 %v1903, 7
          %v1905 = vsub.s32 0, %v1904
          %v1906 = vrot.slane %v1901, %v1905
          %v1908 = vadd.f32 %v1900, %v1906
          %v1909 = vld [vmem:[#allocation6] sm:$0xff]
          %v1910 = vld [vmem:[#allocation6 + $0x8] sm:$0xff]
          %v1911 = vld [vmem:[#allocation6 + $0x10] sm:$0xff]
          %v1912 = vld [vmem:[#allocation6 + $0x18] sm:$0xff]
          %v1914 = vsel %vm874, %v1899, 0
          %1916 = vmatprep.subr.mxu0 0.0
          %1917 = vmatpush1.msra.mxu0 0.0
          %1918 = vmatprep.subr.mxu0 0.0
          %1919 = vmatpush1.msra.mxu0 0.0
          %1920 = vmatprep.subr.mxu0 0.0
          %1921 = vmatpush1.msra.mxu0 0.0
          %1922 = vmatprep.subr.mxu0 0.0
          %1923 = vmatpush1.msra.mxu0 0.0
          %1924 = vmatprep.subr.mxu0 0.0
          %1925 = vmatpush1.msra.mxu0 0.0
          %1926 = vmatprep.subr.mxu0 0.0
          %1927 = vmatpush1.msra.mxu0 0.0
          %1928 = vmatprep.subr.mxu0 0.0
          %1929 = vmatpush1.msra.mxu0 0.0
          %1930 = vmatprep.subr.mxu0 0.0
          %1931 = vmatpush1.msra.mxu0 0.0
          %1932 = vmatprep.subr.mxu0 0.0
          %1933 = vmatpush1.msra.mxu0 0.0
          %1934 = vmatprep.subr.mxu0 0.0
          %1935 = vmatpush1.msra.mxu0 0.0
          %1936 = vmatprep.subr.mxu0 0.0
          %1937 = vmatpush1.msra.mxu0 0.0
          %1938 = vmatprep.subr.mxu0 0.0
          %1939 = vmatpush1.msra.mxu0 0.0
          %1940 = vmatprep.subr.mxu0 0.0
          %1941 = vmatpush1.msra.mxu0 %v1912
          %1942 = vmatprep.subr.mxu0 0.0
          %1943 = vmatpush1.msra.mxu0 %v1911
          %1944 = vmatprep.subr.mxu0 0.0
          %1945 = vmatpush1.msra.mxu0 %v1910
          %1946 = vmatprep.subr.mxu0 0.0
          %1947 = vmatpush1.msra.mxu0 %v1909
          %1948 = vmatprep.subr.mxu0 0.0
          %1949 = vmatpush2.msra.mxu0 0.0
          %1950 = vmatprep.subr.mxu0 0.0
          %1951 = vmatpush2.msra.mxu0 0.0
          %1952 = vmatprep.subr.mxu0 0.0
          %1953 = vmatpush2.msra.mxu0 0.0
          %1954 = vmatprep.subr.mxu0 0.0
          %1955 = vmatpush2.msra.mxu0 0.0
          %1956 = vmatprep.subr.mxu0 0.0
          %1957 = vmatpush2.msra.mxu0 0.0
          %1958 = vmatprep.subr.mxu0 0.0
          %1959 = vmatpush2.msra.mxu0 0.0
          %1960 = vmatprep.subr.mxu0 0.0
          %1961 = vmatpush2.msra.mxu0 0.0
          %1962 = vmatprep.subr.mxu0 0.0
          %1963 = vmatpush2.msra.mxu0 0.0
          %1964 = vmatprep.subr.mxu0 0.0
          %1965 = vmatpush2.msra.mxu0 0.0
          %1966 = vmatprep.subr.mxu0 0.0
          %1967 = vmatpush2.msra.mxu0 0.0
          %1968 = vmatprep.subr.mxu0 0.0
          %1969 = vmatpush2.msra.mxu0 0.0
          %1970 = vmatprep.subr.mxu0 0.0
          %1971 = vmatpush2.msra.mxu0 0.0
          %1972 = vmatprep.subr.mxu0 0.0
          %1973 = vmatpush2.msra.mxu0 0.0
          %1974 = vmatprep.subr.mxu0 0.0
          %1975 = vmatpush2.msra.mxu0 0.0
          %1976 = vmatprep.subr.mxu0 0.0
          %1977 = vmatpush2.msra.mxu0 0.0
          %1978 = vmatprep.subr.mxu0 0.0
          %1979 = vmatpush2.msra.mxu0 0.0
          %1980 = vmatprep.mubr.f32.mxu0 0.0
          %1981 = vmatmul.mubr.f32.gmra.mxu0 %v1914
          %v1982 = vpop.f32.mrf.mxu0
          %v1983 = vadd.f32 0.0, %v1982
          %v1984 = vpop.f32.mrf.mxu0
          %1985 = vdwg.mxu0
          %v1986 = vadd.f32 %v1908, %v1983
          %v1987 = vsel %vm874, %v1986, 0.0
          %1988 = vadd.xlane.f32.xlu0 %v1987
          %v1989 = vpop.xlane.xlu0 %1988
          %v1990 = vrcp.pop 32.0
          %v1991 = vmul.f32 %v1989, %v1990
          %v1992 = vsub.f32 %v1986, %v1991
          %v1993 = vmul.f32 %v1992, %v1992
          %v1994 = vsel %vm874, %v1993, 0.0
          %1995 = vadd.xlane.f32.xlu0 %v1994
          %v1996 = vpop.xlane.xlu0 %1995
          %v1997 = vmul.f32 %v1996, %v1990
          %v1998 = vadd.f32 %v1997, 1e-05
          %v1999 = vrsqrt.pop %v1998
          %v2000 = vmul.f32 %v1992, %v1999
          %v2001 = vld [vmem:[%s15] sm:$0x1]
          %v2003 = vlaneseq
          %v2004 = vshrl.u32 %v2003, 7
          %v2005 = vsub.s32 0, %v2004
          %v2006 = vrot.slane %v2001, %v2005
          %v2008 = vmul.f32 %v2000, %v2006
          %v2009 = vld [vmem:[%s16] sm:$0x1]
          %v2011 = vlaneseq
          %v2012 = vshrl.u32 %v2011, 7
          %v2013 = vsub.s32 0, %v2012
          %v2014 = vrot.slane %v2009, %v2013
          %v2016 = vadd.f32 %v2008, %v2014
          %2017 = vst.msk [vmem:[%s739] sm:$0xff] %vm874, %v2016
        $region100: #{fwd.2} parent=87 // pred_fallthru
          _
        %p2018 = scmp.lt.s32.totalorder %s34, 1
        %s2019 = scalar_select %p2018, %s34, 1
        %p2020 = scmp.lt.s32.totalorder %s35, 0
        %s2021 = scalar_select %p2020, %s35, 0
        %s2022 = sadd.s32 %s2021, %s2019
        %s2023 = smul.addr %s2022, 8
        %s2024 = scalar_lea.vmem %s17, %s2023
        // Predicated region
        $region101: #{fwd.2} parent=87 // pred_check
          %p2025 = pneg %p470
        $region102: #{fwd.2} parent=87 // pred_check_branch
          %2027 = sbr.rel (%p2025) target = $region104
        $region103: #{fwd.2} parent=87 // pred_region
          _
        $region104: #{fwd.2} parent=87 // pred_fallthru
          _
      $region88: #{fwd.2} parent=5 // pred_fallthru
        _
      %p2028 = scmp.le.s32.totalorder 2, %s24
      // Predicated region
      $region105: #{fwd.2} parent=5 // pred_check
        %p2029 = pneg %p2028
      $region106: #{fwd.2} parent=5 // pred_check_branch
        %2031 = sbr.rel (%p2029) target = $region108
      $region107: #{fwd.2} parent=5 // pred_region
        %s2032 = ssub.s32 %s24, 2
        // Predicated region
        $region109: #{fwd.2} parent=107 // pred_check
          %p2033 = pneg %p476
        $region110: #{fwd.2} parent=107 // pred_check_branch
          %2035 = sbr.rel (%p2033) target = $region112
        $region111: #{fwd.2} parent=107 // pred_region
          %p2036 = scmp.lt.s32.totalorder %s37, 1
          %s2037 = scalar_select %p2036, %s37, 1
          %p2038 = scmp.lt.s32.totalorder %s38, 0
          %s2039 = scalar_select %p2038, %s38, 0
          %s2040 = sadd.s32 %s2039, %s2037
          %s2041 = smul.addr %s2040, 8
          %s2042 = scalar_lea.vmem %s17, %s2041
        $region112: #{fwd.2} parent=107 // pred_fallthru
          _
      $region108: #{fwd.2} parent=5 // pred_fallthru
        _
    $region6: #{fwd.2} parent=1 // loop_footer
      %s28 = sadd.s32 1, %s24
    $region7: #{fwd.2} parent=1 // loop_footer_branch
      %23 = sbr.rel target = $region3
    $region8: #{fwd.2} parent=1 // loop_exit
      _
    %2043 = vsyncpa [#allocation7], 1
    %s2044 = scalar_lea.sflag [#allocation7], 1
    %2045 = vsyncpa %s2044, 1

</llo_original>
